<compile_context>
chip_gen: v7x
topology: tpu7x:2x2x1
jax: 0.10.0
libtpu: 0.0.40
codegen_flags: <defaults>
</compile_context>

<pallas_src>
import jax
import jax.numpy as jnp
from jax.experimental import pallas as pl
from jax.experimental.pallas import tpu as pltpu

_LANE = 128


def _conv2layer_kernel(x_ref, w1_ref, s1_ref, w2_ref, s2_ref, o_ref,
                       xp_ref, y1p_ref):
    """Fused (conv3x3 + BN + ReLU) x 2 over one H-tile of one batch element.

    x_ref  : (H, W, Cin)          unpadded input image (batch dim squeezed)
    w1_ref : (9*CP, CP)           layer-1 weights, BN scale folded, im2col layout
    s1_ref : (1, CP)              layer-1 BN shift
    w2_ref : (9*CP, CP)           layer-2 weights, BN scale folded
    s2_ref : (1, CP)              layer-2 BN shift
    o_ref  : (TH, W, CP)          output tile (channel-padded)
    xp_ref : (H+4, W+2, CP)       scratch: zero-padded input (persists over h)
    y1p_ref: (TH+2, W+2, CP)      scratch: zero-padded layer-1 tile (+1-row halo)
    """
    h = pl.program_id(1)
    nh = pl.num_programs(1)
    TH, W, CP = o_ref.shape
    H = xp_ref.shape[0] - 4
    Cin = x_ref.shape[-1]

    # ---- Stage the zero-padded (2 rows / 1 col / channels->CP) input once per n.
    @pl.when(h == 0)
    def _():
        xp_ref[...] = jnp.zeros(xp_ref.shape, jnp.float32)
        xp_ref[2:H + 2, 1:W + 1, :Cin] = x_ref[...].astype(jnp.float32)

    # ---- Layer 1: compute TH + 2 rows (1-row halo each side for layer 2).
    r0 = pl.multiple_of(h * TH, TH)
    xs = xp_ref[pl.ds(r0, TH + 4)]                              # (TH+4, W+2, CP)
    m1 = (TH + 2) * W
    patch1 = jnp.concatenate(
        [xs[dy:dy + TH + 2, dx:dx + W, :].reshape(m1, CP)
         for dy in range(3) for dx in range(3)], axis=1)        # (m1, 9*CP)
    y1 = jnp.dot(patch1, w1_ref[...], preferred_element_type=jnp.float32)
    y1 = jnp.maximum(y1 + s1_ref[...], 0.0)                     # folded BN + ReLU

    y1p_ref[...] = jnp.zeros(y1p_ref.shape, jnp.float32)
    y1p_ref[:, 1:W + 1, :] = y1.reshape(TH + 2, W, CP)

    # Halo rows that fall outside the image are layer-2 zero padding, not conv
    # outputs -> overwrite them with zeros at the image-boundary tiles.
    @pl.when(h == 0)
    def _():
        y1p_ref[0] = jnp.zeros((W + 2, CP), jnp.float32)

    @pl.when(h == nh - 1)
    def _():
        y1p_ref[TH + 1] = jnp.zeros((W + 2, CP), jnp.float32)

    # ---- Layer 2: the TH output rows of this tile.
    y1p = y1p_ref[...]
    m2 = TH * W
    patch2 = jnp.concatenate(
        [y1p[dy:dy + TH, dx:dx + W, :].reshape(m2, CP)
         for dy in range(3) for dx in range(3)], axis=1)        # (m2, 9*CP)
    y2 = jnp.dot(patch2, w2_ref[...], preferred_element_type=jnp.float32)
    y2 = jnp.maximum(y2 + s2_ref[...], 0.0)
    o_ref[...] = y2.reshape(TH, W, CP).astype(o_ref.dtype)


def _fold_and_pad(w_hwio, scale, shift, cp):
    """Fold BN scale into conv weights, zero-pad channels to cp, im2col-reshape."""
    kh, kw, cin, cout = w_hwio.shape
    wf = w_hwio.astype(jnp.float32) * scale.astype(jnp.float32)[None, None, None, :]
    wp = jnp.zeros((kh, kw, cp, cp), jnp.float32).at[:, :, :cin, :cout].set(wf)
    sp = jnp.zeros((1, cp), jnp.float32).at[0, :cout].set(shift.astype(jnp.float32))
    return wp.reshape(kh * kw * cp, cp), sp


@jax.jit
def conv2layer_forward(x_nchw, params):
    """Matches Conv2Layer.forward: NCHW in, NCHW out (inference-mode BN)."""
    N, Cin, H, W = x_nchw.shape
    Cout = params["w1"].shape[-1]
    CP = ((max(Cin, Cout) + _LANE - 1) // _LANE) * _LANE
    TH = 8 if (H % 8 == 0 and H > 8) else H
    NH = H // TH

    x = jnp.transpose(x_nchw, (0, 2, 3, 1))                     # NCHW -> NHWC
    w1m, s1 = _fold_and_pad(params["w1"], params["scale1"], params["shift1"], CP)
    w2m, s2 = _fold_and_pad(params["w2"], params["scale2"], params["shift2"], CP)

    out_padded = pl.pallas_call(
        _conv2layer_kernel,
        out_shape=jax.ShapeDtypeStruct((N, H, W, CP), jnp.float32),
        grid=(N, NH),
        in_specs=[
            pl.BlockSpec((pl.Squeezed(), H, W, Cin), lambda n, h: (n, 0, 0, 0)),
            pl.BlockSpec((9 * CP, CP), lambda n, h: (0, 0)),
            pl.BlockSpec((1, CP), lambda n, h: (0, 0)),
            pl.BlockSpec((9 * CP, CP), lambda n, h: (0, 0)),
            pl.BlockSpec((1, CP), lambda n, h: (0, 0)),
        ],
        out_specs=pl.BlockSpec((pl.Squeezed(), TH, W, CP),
                               lambda n, h: (n, h, 0, 0)),
        scratch_shapes=[
            pltpu.VMEM((H + 4, W + 2, CP), jnp.float32),        # padded input
            pltpu.VMEM((TH + 2, W + 2, CP), jnp.float32),       # padded layer-1 tile
        ],
        compiler_params=pltpu.CompilerParams(
            dimension_semantics=("parallel", "arbitrary"),
            vmem_limit_bytes=32 * 1024 * 1024),
    )(x, w1m, s1, w2m, s2)

    out = out_padded[..., :Cout]                                # drop lane padding
    return jnp.transpose(out, (0, 3, 1, 2))                     # NHWC -> NCHW


def init_conv2layer_params(key, in_channels, out_channels, eps=1e-5):
    """Deterministic synthetic parameters for the two conv/BN blocks."""
    k1, k2, k3, k4, k5, k6 = jax.random.split(key, 6)

    def bn_affine(kg, kb, c):
        gamma = 1.0 + 0.1 * jax.random.normal(kg, (c,), jnp.float32)
        beta = 0.1 * jax.random.normal(kb, (c,), jnp.float32)
        running_mean = jnp.zeros((c,), jnp.float32)
        running_var = jnp.ones((c,), jnp.float32)
        scale = gamma / jnp.sqrt(running_var + eps)
        shift = beta - running_mean * scale
        return scale, shift

    fan1 = in_channels * 9
    w1 = jax.random.normal(k1, (3, 3, in_channels, out_channels),
                           jnp.float32) * (2.0 / fan1) ** 0.5
    fan2 = in_channels * 9
    w2 = jax.random.normal(k2, (3, 3, in_channels, out_channels),
                           jnp.float32) * (2.0 / fan2) ** 0.5

    s1, b1 = bn_affine(k3, k4, out_channels)
    s2, b2 = bn_affine(k5, k6, out_channels)
    return dict(w1=w1, scale1=s1, shift1=b1, w2=w2, scale2=s2, shift2=b2)


def _reference(x_nchw, params):
    """Pure-JAX reference (lax conv) for correctness checking."""
    def one(xn, w, s, b):
        y = jax.lax.conv_general_dilated(
            xn, w, window_strides=(1, 1), padding="SAME",
            dimension_numbers=("NHWC", "HWIO", "NHWC"))
        return jnp.maximum(y * s + b, 0.0)

    x = jnp.transpose(x_nchw, (0, 2, 3, 1))
    y = one(x, params["w1"], params["scale1"], params["shift1"])
    y = one(y, params["w2"], params["scale2"], params["shift2"])
    return jnp.transpose(y, (0, 3, 1, 2))


if __name__ == "__main__":
    key = jax.random.PRNGKey(0)
    k_x, k_p = jax.random.split(key)

    N, C, H, W = 2, 4, 16, 16          # in_channels == out_channels == 4
    x = jax.random.normal(k_x, (N, C, H, W), jnp.float32)
    params = init_conv2layer_params(k_p, in_channels=C, out_channels=C)

    out = conv2layer_forward(x, params)
    out = jax.block_until_ready(out)

    ref = _reference(x, params)
    assert out.shape == (N, C, H, W)
    assert jnp.allclose(out, ref, atol=1e-4, rtol=1e-4), float(
        jnp.max(jnp.abs(out - ref)))

    print("KERNEL_OK")
</pallas_src>

<mosaic_0001>
module attributes {stable_mosaic.version = 11 : i64} {
  func.func @_conv2layer_kernel(%arg0: i32, %arg1: i32, %arg2: memref<1x16x16x4xf32, #tpu.memory_space<vmem>>, %arg3: memref<1152x128xf32, #tpu.memory_space<vmem>>, %arg4: memref<1x128xf32, #tpu.memory_space<vmem>>, %arg5: memref<1152x128xf32, #tpu.memory_space<vmem>>, %arg6: memref<1x128xf32, #tpu.memory_space<vmem>>, %arg7: memref<1x8x16x128xf32, #tpu.memory_space<vmem>>, %arg8: memref<20x18x128xf32, #tpu.memory_space<vmem>>, %arg9: memref<10x18x128xf32, #tpu.memory_space<vmem>>) attributes {dimension_semantics = [#tpu.dimension_semantics<parallel>, #tpu.dimension_semantics<arbitrary>], iteration_bounds = array<i64: 2, 2>, scalar_prefetch = 0 : i64, scratch_operands = 2 : i64, tpu.core_type = #tpu.core_type<tc>, window_params = [{transform_indices = @transform_0, window_bounds = array<i64: 1, 16, 16, 4>}, {pipeline_mode = #tpu.pipeline_mode<synchronous>, transform_indices = @transform_1, window_bounds = array<i64: 1152, 128>}, {pipeline_mode = #tpu.pipeline_mode<synchronous>, transform_indices = @transform_2, window_bounds = array<i64: 1, 128>}, {pipeline_mode = #tpu.pipeline_mode<synchronous>, transform_indices = @transform_3, window_bounds = array<i64: 1152, 128>}, {pipeline_mode = #tpu.pipeline_mode<synchronous>, transform_indices = @transform_4, window_bounds = array<i64: 1, 128>}, {transform_indices = @transform_5, window_bounds = array<i64: 1, 8, 16, 128>}]} {
    %c0_i32 = arith.constant 0 : i32
    %0 = arith.cmpi eq, %arg1, %c0_i32 : i32
    %1 = arith.extui %0 : i1 to i32
    %c0_i32_0 = arith.constant 0 : i32
    %2 = arith.cmpi ne, %1, %c0_i32_0 : i32
    scf.if %2 {
      %cst_29 = arith.constant 0.000000e+00 : f32
      %74 = vector.broadcast %cst_29 : f32 to vector<20x18x128xf32>
      %c0_30 = arith.constant 0 : index
      %c0_31 = arith.constant 0 : index
      %c0_32 = arith.constant 0 : index
      %75 = vector.load %arg8[%c0_30, %c0_31, %c0_32] : memref<20x18x128xf32, #tpu.memory_space<vmem>>, vector<20x18x128xf32>
      tpu.vector_store %arg8[%c0_30, %c0_31, %c0_32], %74 {strides = array<i32>} : memref<20x18x128xf32, #tpu.memory_space<vmem>>, vector<20x18x128xf32>,
      %c0_33 = arith.constant 0 : index
      %c0_34 = arith.constant 0 : index
      %c0_35 = arith.constant 0 : index
      %c0_36 = arith.constant 0 : index
      %76 = vector.load %arg2[%c0_33, %c0_34, %c0_35, %c0_36] : memref<1x16x16x4xf32, #tpu.memory_space<vmem>>, vector<1x16x16x4xf32>
      %77 = vector.shape_cast %76 : vector<1x16x16x4xf32> to vector<16x16x4xf32>
      %c2 = arith.constant 2 : index
      %c1_37 = arith.constant 1 : index
      %c0_38 = arith.constant 0 : index
      %78 = vector.load %arg8[%c2, %c1_37, %c0_38] : memref<20x18x128xf32, #tpu.memory_space<vmem>>, vector<16x16x4xf32>
      tpu.vector_store %arg8[%c2, %c1_37, %c0_38], %77 {strides = array<i32>} : memref<20x18x128xf32, #tpu.memory_space<vmem>>, vector<16x16x4xf32>,
    } else {
    }
    %c8_i32 = arith.constant 8 : i32
    %3 = arith.muli %arg1, %c8_i32 : i32
    %4 = tpu.assume_multiple %3, 8 : i32
    %5 = arith.index_cast %4 : i32 to index
    %c0 = arith.constant 0 : index
    %c0_1 = arith.constant 0 : index
    %6 = vector.load %arg8[%5, %c0, %c0_1] : memref<20x18x128xf32, #tpu.memory_space<vmem>>, vector<12x18x128xf32>
    %7 = vector.extract_strided_slice %6 {offsets = [0, 0, 0], sizes = [10, 16, 128], strides = [1, 1, 1]} : vector<12x18x128xf32> to vector<10x16x128xf32>
    %8 = vector.shape_cast %7 : vector<10x16x128xf32> to vector<160x128xf32>
    %9 = vector.extract_strided_slice %6 {offsets = [0, 1, 0], sizes = [10, 16, 128], strides = [1, 1, 1]} : vector<12x18x128xf32> to vector<10x16x128xf32>
    %10 = vector.shape_cast %9 : vector<10x16x128xf32> to vector<160x128xf32>
    %11 = vector.extract_strided_slice %6 {offsets = [0, 2, 0], sizes = [10, 16, 128], strides = [1, 1, 1]} : vector<12x18x128xf32> to vector<10x16x128xf32>
    %12 = vector.shape_cast %11 : vector<10x16x128xf32> to vector<160x128xf32>
    %13 = vector.extract_strided_slice %6 {offsets = [1, 0, 0], sizes = [10, 16, 128], strides = [1, 1, 1]} : vector<12x18x128xf32> to vector<10x16x128xf32>
    %14 = vector.shape_cast %13 : vector<10x16x128xf32> to vector<160x128xf32>
    %15 = vector.extract_strided_slice %6 {offsets = [1, 1, 0], sizes = [10, 16, 128], strides = [1, 1, 1]} : vector<12x18x128xf32> to vector<10x16x128xf32>
    %16 = vector.shape_cast %15 : vector<10x16x128xf32> to vector<160x128xf32>
    %17 = vector.extract_strided_slice %6 {offsets = [1, 2, 0], sizes = [10, 16, 128], strides = [1, 1, 1]} : vector<12x18x128xf32> to vector<10x16x128xf32>
    %18 = vector.shape_cast %17 : vector<10x16x128xf32> to vector<160x128xf32>
    %19 = vector.extract_strided_slice %6 {offsets = [2, 0, 0], sizes = [10, 16, 128], strides = [1, 1, 1]} : vector<12x18x128xf32> to vector<10x16x128xf32>
    %20 = vector.shape_cast %19 : vector<10x16x128xf32> to vector<160x128xf32>
    %21 = vector.extract_strided_slice %6 {offsets = [2, 1, 0], sizes = [10, 16, 128], strides = [1, 1, 1]} : vector<12x18x128xf32> to vector<10x16x128xf32>
    %22 = vector.shape_cast %21 : vector<10x16x128xf32> to vector<160x128xf32>
    %23 = vector.extract_strided_slice %6 {offsets = [2, 2, 0], sizes = [10, 16, 128], strides = [1, 1, 1]} : vector<12x18x128xf32> to vector<10x16x128xf32>
    %24 = vector.shape_cast %23 : vector<10x16x128xf32> to vector<160x128xf32>
    %25 = tpu.concatenate %8, %10, %12, %14, %16, %18, %20, %22, %24 in 1 : vector<160x128xf32>, vector<160x128xf32>, vector<160x128xf32>, vector<160x128xf32>, vector<160x128xf32>, vector<160x128xf32>, vector<160x128xf32>, vector<160x128xf32>, vector<160x128xf32> -> vector<160x1152xf32>
    %c0_2 = arith.constant 0 : index
    %c0_3 = arith.constant 0 : index
    %26 = vector.load %arg3[%c0_2, %c0_3] : memref<1152x128xf32, #tpu.memory_space<vmem>>, vector<1152x128xf32>
    %cst = arith.constant dense<0.000000e+00> : vector<160x128xf32>
    %27 = tpu.matmul %25, %26, %cst {dimension_numbers = #tpu.dot_dimension_numbers<[1], [0], [0], [1], [0, 0, 1, 1], [], []>} : vector<160x1152xf32>, vector<1152x128xf32>, vector<160x128xf32> -> vector<160x128xf32>
    %c0_4 = arith.constant 0 : index
    %c0_5 = arith.constant 0 : index
    %28 = vector.load %arg4[%c0_4, %c0_5] : memref<1x128xf32, #tpu.memory_space<vmem>>, vector<1x128xf32>
    %29 = vector.broadcast %28 : vector<1x128xf32> to vector<160x128xf32>
    %30 = arith.addf %27, %29 : vector<160x128xf32>
    %cst_6 = arith.constant 0.000000e+00 : f32
    %31 = vector.broadcast %cst_6 : f32 to vector<160x128xf32>
    %32 = arith.maximumf %30, %31 : vector<160x128xf32>
    %cst_7 = arith.constant 0.000000e+00 : f32
    %33 = vector.broadcast %cst_7 : f32 to vector<10x18x128xf32>
    %c0_8 = arith.constant 0 : index
    %c0_9 = arith.constant 0 : index
    %c0_10 = arith.constant 0 : index
    %34 = vector.load %arg9[%c0_8, %c0_9, %c0_10] : memref<10x18x128xf32, #tpu.memory_space<vmem>>, vector<10x18x128xf32>
    tpu.vector_store %arg9[%c0_8, %c0_9, %c0_10], %33 {strides = array<i32>} : memref<10x18x128xf32, #tpu.memory_space<vmem>>, vector<10x18x128xf32>,
    %35 = vector.shape_cast %32 : vector<160x128xf32> to vector<10x16x128xf32>
    %c0_11 = arith.constant 0 : index
    %c1 = arith.constant 1 : index
    %c0_12 = arith.constant 0 : index
    %36 = vector.load %arg9[%c0_11, %c1, %c0_12] : memref<10x18x128xf32, #tpu.memory_space<vmem>>, vector<10x16x128xf32>
    tpu.vector_store %arg9[%c0_11, %c1, %c0_12], %35 {strides = array<i32>} : memref<10x18x128xf32, #tpu.memory_space<vmem>>, vector<10x16x128xf32>,
    %c0_i32_13 = arith.constant 0 : i32
    %37 = arith.cmpi eq, %arg1, %c0_i32_13 : i32
    %38 = arith.extui %37 : i1 to i32
    %c0_i32_14 = arith.constant 0 : i32
    %39 = arith.cmpi ne, %38, %c0_i32_14 : i32
    scf.if %39 {
      %cst_29 = arith.constant 0.000000e+00 : f32
      %74 = vector.broadcast %cst_29 : f32 to vector<18x128xf32>
      %c0_30 = arith.constant 0 : index
      %c0_31 = arith.constant 0 : index
      %c0_32 = arith.constant 0 : index
      %75 = vector.load %arg9[%c0_30, %c0_31, %c0_32] : memref<10x18x128xf32, #tpu.memory_space<vmem>>, vector<1x18x128xf32>
      %76 = vector.shape_cast %75 : vector<1x18x128xf32> to vector<18x128xf32>
      %77 = vector.shape_cast %74 : vector<18x128xf32> to vector<1x18x128xf32>
      tpu.vector_store %arg9[%c0_30, %c0_31, %c0_32], %77 {strides = array<i32>} : memref<10x18x128xf32, #tpu.memory_space<vmem>>, vector<1x18x128xf32>,
    } else {
    }
    %c1_i32 = arith.constant 1 : i32
    %40 = arith.cmpi eq, %arg1, %c1_i32 : i32
    %41 = arith.extui %40 : i1 to i32
    %c0_i32_15 = arith.constant 0 : i32
    %42 = arith.cmpi ne, %41, %c0_i32_15 : i32
    scf.if %42 {
      %cst_29 = arith.constant 0.000000e+00 : f32
      %74 = vector.broadcast %cst_29 : f32 to vector<18x128xf32>
      %c9 = arith.constant 9 : index
      %c0_30 = arith.constant 0 : index
      %c0_31 = arith.constant 0 : index
      %75 = vector.load %arg9[%c9, %c0_30, %c0_31] : memref<10x18x128xf32, #tpu.memory_space<vmem>>, vector<1x18x128xf32>
      %76 = vector.shape_cast %75 : vector<1x18x128xf32> to vector<18x128xf32>
      %77 = vector.shape_cast %74 : vector<18x128xf32> to vector<1x18x128xf32>
      tpu.vector_store %arg9[%c9, %c0_30, %c0_31], %77 {strides = array<i32>} : memref<10x18x128xf32, #tpu.memory_space<vmem>>, vector<1x18x128xf32>,
    } else {
    }
    %c0_16 = arith.constant 0 : index
    %c0_17 = arith.constant 0 : index
    %c0_18 = arith.constant 0 : index
    %43 = vector.load %arg9[%c0_16, %c0_17, %c0_18] : memref<10x18x128xf32, #tpu.memory_space<vmem>>, vector<10x18x128xf32>
    %44 = vector.extract_strided_slice %43 {offsets = [0, 0, 0], sizes = [8, 16, 128], strides = [1, 1, 1]} : vector<10x18x128xf32> to vector<8x16x128xf32>
    %45 = vector.shape_cast %44 : vector<8x16x128xf32> to vector<128x128xf32>
    %46 = vector.extract_strided_slice %43 {offsets = [0, 1, 0], sizes = [8, 16, 128], strides = [1, 1, 1]} : vector<10x18x128xf32> to vector<8x16x128xf32>
    %47 = vector.shape_cast %46 : vector<8x16x128xf32> to vector<128x128xf32>
    %48 = vector.extract_strided_slice %43 {offsets = [0, 2, 0], sizes = [8, 16, 128], strides = [1, 1, 1]} : vector<10x18x128xf32> to vector<8x16x128xf32>
    %49 = vector.shape_cast %48 : vector<8x16x128xf32> to vector<128x128xf32>
    %50 = vector.extract_strided_slice %43 {offsets = [1, 0, 0], sizes = [8, 16, 128], strides = [1, 1, 1]} : vector<10x18x128xf32> to vector<8x16x128xf32>
    %51 = vector.shape_cast %50 : vector<8x16x128xf32> to vector<128x128xf32>
    %52 = vector.extract_strided_slice %43 {offsets = [1, 1, 0], sizes = [8, 16, 128], strides = [1, 1, 1]} : vector<10x18x128xf32> to vector<8x16x128xf32>
    %53 = vector.shape_cast %52 : vector<8x16x128xf32> to vector<128x128xf32>
    %54 = vector.extract_strided_slice %43 {offsets = [1, 2, 0], sizes = [8, 16, 128], strides = [1, 1, 1]} : vector<10x18x128xf32> to vector<8x16x128xf32>
    %55 = vector.shape_cast %54 : vector<8x16x128xf32> to vector<128x128xf32>
    %56 = vector.extract_strided_slice %43 {offsets = [2, 0, 0], sizes = [8, 16, 128], strides = [1, 1, 1]} : vector<10x18x128xf32> to vector<8x16x128xf32>
    %57 = vector.shape_cast %56 : vector<8x16x128xf32> to vector<128x128xf32>
    %58 = vector.extract_strided_slice %43 {offsets = [2, 1, 0], sizes = [8, 16, 128], strides = [1, 1, 1]} : vector<10x18x128xf32> to vector<8x16x128xf32>
    %59 = vector.shape_cast %58 : vector<8x16x128xf32> to vector<128x128xf32>
    %60 = vector.extract_strided_slice %43 {offsets = [2, 2, 0], sizes = [8, 16, 128], strides = [1, 1, 1]} : vector<10x18x128xf32> to vector<8x16x128xf32>
    %61 = vector.shape_cast %60 : vector<8x16x128xf32> to vector<128x128xf32>
    %62 = tpu.concatenate %45, %47, %49, %51, %53, %55, %57, %59, %61 in 1 : vector<128x128xf32>, vector<128x128xf32>, vector<128x128xf32>, vector<128x128xf32>, vector<128x128xf32>, vector<128x128xf32>, vector<128x128xf32>, vector<128x128xf32>, vector<128x128xf32> -> vector<128x1152xf32>
    %c0_19 = arith.constant 0 : index
    %c0_20 = arith.constant 0 : index
    %63 = vector.load %arg5[%c0_19, %c0_20] : memref<1152x128xf32, #tpu.memory_space<vmem>>, vector<1152x128xf32>
    %cst_21 = arith.constant dense<0.000000e+00> : vector<128x128xf32>
    %64 = tpu.matmul %62, %63, %cst_21 {dimension_numbers = #tpu.dot_dimension_numbers<[1], [0], [0], [1], [0, 0, 1, 1], [], []>} : vector<128x1152xf32>, vector<1152x128xf32>, vector<128x128xf32> -> vector<128x128xf32>
    %c0_22 = arith.constant 0 : index
    %c0_23 = arith.constant 0 : index
    %65 = vector.load %arg6[%c0_22, %c0_23] : memref<1x128xf32, #tpu.memory_space<vmem>>, vector<1x128xf32>
    %66 = vector.broadcast %65 : vector<1x128xf32> to vector<128x128xf32>
    %67 = arith.addf %64, %66 : vector<128x128xf32>
    %cst_24 = arith.constant 0.000000e+00 : f32
    %68 = vector.broadcast %cst_24 : f32 to vector<128x128xf32>
    %69 = arith.maximumf %67, %68 : vector<128x128xf32>
    %70 = vector.shape_cast %69 : vector<128x128xf32> to vector<8x16x128xf32>
    %c0_25 = arith.constant 0 : index
    %c0_26 = arith.constant 0 : index
    %c0_27 = arith.constant 0 : index
    %c0_28 = arith.constant 0 : index
    %71 = vector.load %arg7[%c0_25, %c0_26, %c0_27, %c0_28] : memref<1x8x16x128xf32, #tpu.memory_space<vmem>>, vector<1x8x16x128xf32>
    %72 = vector.shape_cast %71 : vector<1x8x16x128xf32> to vector<8x16x128xf32>
    %73 = vector.shape_cast %70 : vector<8x16x128xf32> to vector<1x8x16x128xf32>
    tpu.vector_store %arg7[%c0_25, %c0_26, %c0_27, %c0_28], %73 {strides = array<i32>} : memref<1x8x16x128xf32, #tpu.memory_space<vmem>>, vector<1x8x16x128xf32>,
    return
  }
  func.func @transform_0(%arg0: i32, %arg1: i32) -> (i32, i32, i32, i32) {
    %c0_i32 = arith.constant 0 : i32
    %c0_i32_0 = arith.constant 0 : i32
    %c0_i32_1 = arith.constant 0 : i32
    %c0_i32_2 = arith.constant 0 : i32
    return %arg0, %c0_i32, %c0_i32_0, %c0_i32_1 : i32, i32, i32, i32
  }
  func.func @transform_1(%arg0: i32, %arg1: i32) -> (i32, i32) {
    %c0_i32 = arith.constant 0 : i32
    %c0_i32_0 = arith.constant 0 : i32
    %c0_i32_1 = arith.constant 0 : i32
    return %c0_i32, %c0_i32_0 : i32, i32
  }
  func.func @transform_2(%arg0: i32, %arg1: i32) -> (i32, i32) {
    %c0_i32 = arith.constant 0 : i32
    %c0_i32_0 = arith.constant 0 : i32
    %c0_i32_1 = arith.constant 0 : i32
    return %c0_i32, %c0_i32_0 : i32, i32
  }
  func.func @transform_3(%arg0: i32, %arg1: i32) -> (i32, i32) {
    %c0_i32 = arith.constant 0 : i32
    %c0_i32_0 = arith.constant 0 : i32
    %c0_i32_1 = arith.constant 0 : i32
    return %c0_i32, %c0_i32_0 : i32, i32
  }
  func.func @transform_4(%arg0: i32, %arg1: i32) -> (i32, i32) {
    %c0_i32 = arith.constant 0 : i32
    %c0_i32_0 = arith.constant 0 : i32
    %c0_i32_1 = arith.constant 0 : i32
    return %c0_i32, %c0_i32_0 : i32, i32
  }
  func.func @transform_5(%arg0: i32, %arg1: i32) -> (i32, i32, i32, i32) {
    %c0_i32 = arith.constant 0 : i32
    %c0_i32_0 = arith.constant 0 : i32
    %c0_i32_1 = arith.constant 0 : i32
    return %arg0, %arg1, %c0_i32, %c0_i32_0 : i32, i32, i32, i32
  }
}

</mosaic_0001>

<llo_original>
// kernel: conv2layer_forward.1
$region0: #{conv2layer_forward.1}
  #allocation0 [shape = 'u32[]', space=smem, size = 0x4, offset = 0x4, fixed_abs, tag = 'smem constant byte address 0x4 - core index']
  #allocation1 [shape = 'u32[144,128]{1,0:T(1,128)}', space=vmem, size = 0x12000, scoped, tag = 'internal scratch']
  #allocation2 [shape = 'f32[20,18,128]{2,1,0:T(8,128)}', space=vmem, size = 0x3c000, scoped, tag = 'scratch operand']
  #allocation3 [shape = 'f32[10,18,128]{2,1,0:T(8,128)}', space=vmem, size = 0x1e000, scoped, tag = 'scratch operand']
  %s0 = inlined_call_operand.vmem [shape: f32[2,16,16,4], index: 0, kind: input, shape index: {}]
  %s1 = inlined_call_operand.vmem [shape: f32[1152,128], index: 1, kind: input, shape index: {}]
  %s2 = inlined_call_operand.vmem [shape: f32[1,128], index: 2, kind: input, shape index: {}]
  %s3 = inlined_call_operand.vmem [shape: f32[1152,128], index: 3, kind: input, shape index: {}]
  %s4 = inlined_call_operand.vmem [shape: f32[1,128], index: 4, kind: input, shape index: {}]
  %s5 = inlined_call_operand.vmem [shape: f32[2,16,16,128], index: 5, kind: output, shape index: {}]
  %s6 = sld [smem:[#allocation0]]
  $region65: #{conv2layer_forward.1} parent=0
    _
  %s8 = ssub.s32 1, %s6
  %s9 = scalar_select 0, %s8, %s6
  loop: start=0, step=1, limit=6
  $region2: #{conv2layer_forward.1} parent=0 // loop_pre_header
    _
  $region3: #{conv2layer_forward.1} parent=0 // loop_header
    %s11 = sphi 0, %s15
    %p12 = scmp.ge.s32.totalorder %s11, 6
    %s18 = sphi 0, %s30
    %s19 = sphi 0, %s26
    %s20 = sphi 0, %s18
    %s21 = sphi 0, %s19
    %s22 = sphi 0, %s20
    %s23 = sphi 0, %s21
    %s33 = sphi 0, %s35
    %s36 = sphi 0, %s33
    %s37 = sphi 0, %s36
    %s53 = sphi 0, %s37
    %s57 = sphi 0, %s57
    %s59 = sphi 0, %s57
    %s60 = sphi 0, %s59
    %s74 = sphi 0, %s60
    %s78 = sphi 0, %s78
    %s80 = sphi 0, %s78
    %s81 = sphi 0, %s80
    %s95 = sphi 0, %s81
    %s99 = sphi 0, %s99
    %s101 = sphi 0, %s99
    %s102 = sphi 0, %s101
    %s116 = sphi 0, %s102
    %s120 = sphi 0, %s120
    %s122 = sphi 0, %s120
    %s123 = sphi 0, %s122
    %s137 = sphi 0, %s123
    %s145 = sphi 0, %s147
    %s148 = sphi 0, %s145
    %s149 = sphi 0, %s148
    %s165 = sphi 0, %s149
  $region4: #{conv2layer_forward.1} parent=0 // loop_header_branch
    %14 = sbr.rel (%p12) target = $region8
  $region5: #{conv2layer_forward.1} parent=0 // loop_body
    %s16 = ssub.s32 %s11, 1
    %s17 = ssub.s32 %s11, 2
    %s24 = sadd.s32 1, %s19
    %p25 = scmp.ge.s32.totalorder %s24, 2
    %s26 = scalar_select %p25, 0, %s24
    %s27 = sadd.s32 1, %s18
    %s28 = scalar_select %p25, %s27, %s18
    %p29 = scmp.ge.s32.totalorder %s28, 2
    %s30 = scalar_select %p29, 0, %s28
    %s31 = ssub.s32 %s18, %s30
    %p32 = scmp.eq.s32.totalorder %s31, 0
    %s34 = sadd.s32 %s33, 1
    %s35 = scalar_select %p32, %s33, %s34
    %p38 = pneg %p32
    %p39 = scmp.eq.s32.totalorder %s11, 3
    %p40 = por %p38, %p39
    %p41 = scmp.ne.s32.totalorder %s33, %s36
    %p42 = scmp.eq.s32.totalorder %s11, 0
    %p43 = por %p41, %p42
    %p44 = scmp.ne.s32.totalorder %s33, %s36
    %p45 = scmp.eq.s32.totalorder %s16, 3
    %p46 = por %p44, %p45
    %p47 = scmp.ne.s32.totalorder %s36, %s37
    %p48 = scmp.eq.s32.totalorder %s16, 0
    %p49 = por %p47, %p48
    %p50 = scmp.ne.s32.totalorder %s36, %s37
    %p51 = scmp.eq.s32.totalorder %s17, 3
    %p52 = por %p50, %p51
    %p54 = scmp.ne.s32.totalorder %s37, %s53
    %p55 = scmp.eq.s32.totalorder %s17, 0
    %p56 = por %p54, %p55
    %s58 = sadd.s32 %s57, 1
    %p61 = scmp.eq.s32.totalorder %s11, 3
    %p62 = scmp.ne.s32.totalorder %s57, %s59
    %p63 = scmp.eq.s32.totalorder %s11, 0
    %p64 = por %p62, %p63
    %p65 = scmp.ne.s32.totalorder %s57, %s59
    %p66 = scmp.eq.s32.totalorder %s16, 3
    %p67 = por %p65, %p66
    %p68 = scmp.ne.s32.totalorder %s59, %s60
    %p69 = scmp.eq.s32.totalorder %s16, 0
    %p70 = por %p68, %p69
    %p71 = scmp.ne.s32.totalorder %s59, %s60
    %p72 = scmp.eq.s32.totalorder %s17, 3
    %p73 = por %p71, %p72
    %p75 = scmp.ne.s32.totalorder %s60, %s74
    %p76 = scmp.eq.s32.totalorder %s17, 0
    %p77 = por %p75, %p76
    %s79 = sadd.s32 %s78, 1
    %p82 = scmp.eq.s32.totalorder %s11, 3
    %p83 = scmp.ne.s32.totalorder %s78, %s80
    %p84 = scmp.eq.s32.totalorder %s11, 0
    %p85 = por %p83, %p84
    %p86 = scmp.ne.s32.totalorder %s78, %s80
    %p87 = scmp.eq.s32.totalorder %s16, 3
    %p88 = por %p86, %p87
    %p89 = scmp.ne.s32.totalorder %s80, %s81
    %p90 = scmp.eq.s32.totalorder %s16, 0
    %p91 = por %p89, %p90
    %p92 = scmp.ne.s32.totalorder %s80, %s81
    %p93 = scmp.eq.s32.totalorder %s17, 3
    %p94 = por %p92, %p93
    %p96 = scmp.ne.s32.totalorder %s81, %s95
    %p97 = scmp.eq.s32.totalorder %s17, 0
    %p98 = por %p96, %p97
    %s100 = sadd.s32 %s99, 1
    %p103 = scmp.eq.s32.totalorder %s11, 3
    %p104 = scmp.ne.s32.totalorder %s99, %s101
    %p105 = scmp.eq.s32.totalorder %s11, 0
    %p106 = por %p104, %p105
    %p107 = scmp.ne.s32.totalorder %s99, %s101
    %p108 = scmp.eq.s32.totalorder %s16, 3
    %p109 = por %p107, %p108
    %p110 = scmp.ne.s32.totalorder %s101, %s102
    %p111 = scmp.eq.s32.totalorder %s16, 0
    %p112 = por %p110, %p111
    %p113 = scmp.ne.s32.totalorder %s101, %s102
    %p114 = scmp.eq.s32.totalorder %s17, 3
    %p115 = por %p113, %p114
    %p117 = scmp.ne.s32.totalorder %s102, %s116
    %p118 = scmp.eq.s32.totalorder %s17, 0
    %p119 = por %p117, %p118
    %s121 = sadd.s32 %s120, 1
    %p124 = scmp.eq.s32.totalorder %s11, 3
    %p125 = scmp.ne.s32.totalorder %s120, %s122
    %p126 = scmp.eq.s32.totalorder %s11, 0
    %p127 = por %p125, %p126
    %p128 = scmp.ne.s32.totalorder %s120, %s122
    %p129 = scmp.eq.s32.totalorder %s16, 3
    %p130 = por %p128, %p129
    %p131 = scmp.ne.s32.totalorder %s122, %s123
    %p132 = scmp.eq.s32.totalorder %s16, 0
    %p133 = por %p131, %p132
    %p134 = scmp.ne.s32.totalorder %s122, %s123
    %p135 = scmp.eq.s32.totalorder %s17, 3
    %p136 = por %p134, %p135
    %p138 = scmp.ne.s32.totalorder %s123, %s137
    %p139 = scmp.eq.s32.totalorder %s17, 0
    %p140 = por %p138, %p139
    %s141 = ssub.s32 %s18, %s30
    %s142 = ssub.s32 %s19, %s26
    %s143 = sor.u32 %s141, %s142
    %p144 = scmp.eq.s32.totalorder %s143, 0
    %s146 = sadd.s32 %s145, 1
    %s147 = scalar_select %p144, %s145, %s146
    %p150 = pneg %p144
    %p151 = scmp.eq.s32.totalorder %s11, 3
    %p152 = por %p150, %p151
    %p153 = scmp.ne.s32.totalorder %s145, %s148
    %p154 = scmp.eq.s32.totalorder %s11, 0
    %p155 = por %p153, %p154
    %p156 = scmp.ne.s32.totalorder %s145, %s148
    %p157 = scmp.eq.s32.totalorder %s16, 3
    %p158 = por %p156, %p157
    %p159 = scmp.ne.s32.totalorder %s148, %s149
    %p160 = scmp.eq.s32.totalorder %s16, 0
    %p161 = por %p159, %p160
    %p162 = scmp.ne.s32.totalorder %s148, %s149
    %p163 = scmp.eq.s32.totalorder %s17, 3
    %p164 = por %p162, %p163
    %p166 = scmp.ne.s32.totalorder %s149, %s165
    %p167 = scmp.eq.s32.totalorder %s17, 0
    %p168 = por %p166, %p167
    %p169 = scmp.le.s32.totalorder 1, %s11
    %p170 = scmp.lt.s32.totalorder %s11, 5
    %p171 = pnand %p169, %p170
    %p172 = pneg %p171
    // Predicated region
    $region9: #{conv2layer_forward.1} parent=5 // pred_check
      _
    $region10: #{conv2layer_forward.1} parent=5 // pred_check_branch
      %174 = sbr.rel (%p171) target = $region12
    $region11: #{conv2layer_forward.1} parent=5 // pred_region
      %s175 = ssub.s32 %s11, 1
      // Predicated region
      $region13: #{conv2layer_forward.1} parent=11 // pred_check
        %p176 = pneg %p70
      $region14: #{conv2layer_forward.1} parent=11 // pred_check_branch
        %178 = sbr.rel (%p176) target = $region16
      $region15: #{conv2layer_forward.1} parent=11 // pred_region
        _
      $region16: #{conv2layer_forward.1} parent=11 // pred_fallthru
        _
      // Predicated region
      $region17: #{conv2layer_forward.1} parent=11 // pred_check
        %p179 = pneg %p91
      $region18: #{conv2layer_forward.1} parent=11 // pred_check_branch
        %181 = sbr.rel (%p179) target = $region20
      $region19: #{conv2layer_forward.1} parent=11 // pred_region
        _
      $region20: #{conv2layer_forward.1} parent=11 // pred_fallthru
        _
      // Predicated region
      $region21: #{conv2layer_forward.1} parent=11 // pred_check
        %p182 = pneg %p112
      $region22: #{conv2layer_forward.1} parent=11 // pred_check_branch
        %184 = sbr.rel (%p182) target = $region24
      $region23: #{conv2layer_forward.1} parent=11 // pred_region
        _
      $region24: #{conv2layer_forward.1} parent=11 // pred_fallthru
        _
      // Predicated region
      $region25: #{conv2layer_forward.1} parent=11 // pred_check
        %p185 = pneg %p133
      $region26: #{conv2layer_forward.1} parent=11 // pred_check_branch
        %187 = sbr.rel (%p185) target = $region28
      $region27: #{conv2layer_forward.1} parent=11 // pred_region
        _
      $region28: #{conv2layer_forward.1} parent=11 // pred_fallthru
        _
    $region12: #{conv2layer_forward.1} parent=5 // pred_fallthru
      _
    %p188 = scmp.lt.s32.totalorder %s11, 4
    // Predicated region
    $region29: #{conv2layer_forward.1} parent=5 // pred_check
      %p189 = pneg %p188
    $region30: #{conv2layer_forward.1} parent=5 // pred_check_branch
      %191 = sbr.rel (%p189) target = $region32
    $region31: #{conv2layer_forward.1} parent=5 // pred_region
      // Predicated region
      $region33: #{conv2layer_forward.1} parent=31 // pred_check
        %p192 = pneg %p43
      $region34: #{conv2layer_forward.1} parent=31 // pred_check_branch
        %194 = sbr.rel (%p192) target = $region36
      $region35: #{conv2layer_forward.1} parent=31 // pred_region
        %p195 = scmp.lt.s32.totalorder %s18, 1
        %s196 = scalar_select %p195, %s18, 1
        %s197 = smul.addr %s196, 32
        %s198 = smul.addr %s197, 8
        %s199 = scalar_lea.vmem %s0, %s198
      $region36: #{conv2layer_forward.1} parent=31 // pred_fallthru
        _
    $region32: #{conv2layer_forward.1} parent=5 // pred_fallthru
      _
    %p200 = scmp.le.s32.totalorder 1, %s11
    %p201 = scmp.lt.s32.totalorder %s11, 5
    %p202 = pnand %p200, %p201
    %p203 = pneg %p202
    // Predicated region
    $region37: #{conv2layer_forward.1} parent=5 // pred_check
      _
    $region38: #{conv2layer_forward.1} parent=5 // pred_check_branch
      %205 = sbr.rel (%p202) target = $region40
    $region39: #{conv2layer_forward.1} parent=5 // pred_region
      %s206 = ssub.s32 %s11, 1
      %p207 = scmp.lt.s32.totalorder %s20, 1
      %s208 = scalar_select %p207, %s20, 1
      %s209 = smul.addr %s208, 32
      %s210 = smul.addr %s209, 8
      %s211 = scalar_lea.vmem %s0, %s210
      %p212 = pneg %p49
      %p213 = pneg %p46
      %p214 = pneg %p70
      %p215 = pneg %p67
      %p216 = pneg %p91
      %p217 = pneg %p88
      %p218 = pneg %p112
      %p219 = pneg %p109
      %p220 = pneg %p133
      %p221 = pneg %p130
      %p222 = pneg %p161
      %p223 = pneg %p158
      %s224 = smul.u32 8, %s21
      %p225 = scmp.lt.s32.totalorder %s20, 1
      %s226 = scalar_select %p225, %s20, 1
      %p227 = scmp.lt.s32.totalorder %s224, 15
      %s228 = scalar_select %p227, %s224, 15
      %s229 = smul.addr %s228, 2
      %s230 = smul.addr %s226, 32
      %s231 = sadd.s32 %s229, %s230
      %s232 = smul.addr %s231, 8
      %s233 = scalar_lea.vmem %s5, %s232
      %p234 = scmp.lt.s32.totalorder %s20, 1
      %s235 = scalar_select %p234, %s20, 1
      %s236 = smul.addr %s235, 32
      %s237 = smul.addr %s236, 8
      %s238 = scalar_lea.vmem %s0, %s237
      %s239 = smul.u32 8, %s21
      %p240 = scmp.lt.s32.totalorder %s20, 1
      %s241 = scalar_select %p240, %s20, 1
      %p242 = scmp.lt.s32.totalorder %s239, 15
      %s243 = scalar_select %p242, %s239, 15
      %s244 = smul.addr %s243, 2
      %s245 = smul.addr %s241, 32
      %s246 = sadd.s32 %s244, %s245
      %s247 = smul.addr %s246, 8
      %s248 = scalar_lea.vmem %s5, %s247
      %s249 = smul.u32 8, %s21
      %p250 = scmp.eq.s32.totalorder %s21, 0
      // Predicated region
      $region41: #{conv2layer_forward.1} parent=39 // pred_check
        %p251 = pneg %p250
      $region42: #{conv2layer_forward.1} parent=39 // pred_check_branch
        %253 = sbr.rel (%p251) target = $region44
      $region43: #{conv2layer_forward.1} parent=39 // pred_region
        %254 = vst [vmem:[#allocation2] sm:$0xff] 0.0
        %255 = vst [vmem:[#allocation2 + $0x8] sm:$0xff] 0.0
        %256 = vst [vmem:[#allocation2 + $0x10] sm:$0x3] 0.0
        %257 = vst [vmem:[#allocation2 + $0x18] sm:$0xff] 0.0
        %258 = vst [vmem:[#allocation2 + $0x20] sm:$0xff] 0.0
        %259 = vst [vmem:[#allocation2 + $0x28] sm:$0x3] 0.0
        %260 = vst [vmem:[#allocation2 + $0x30] sm:$0xff] 0.0
        %261 = vst [vmem:[#allocation2 + $0x38] sm:$0xff] 0.0
        %262 = vst [vmem:[#allocation2 + $0x40] sm:$0x3] 0.0
        %263 = vst [vmem:[#allocation2 + $0x48] sm:$0xff] 0.0
        %264 = vst [vmem:[#allocation2 + $0x50] sm:$0xff] 0.0
        %265 = vst [vmem:[#allocation2 + $0x58] sm:$0x3] 0.0
        %266 = vst [vmem:[#allocation2 + $0x60] sm:$0xff] 0.0
        %267 = vst [vmem:[#allocation2 + $0x68] sm:$0xff] 0.0
        %268 = vst [vmem:[#allocation2 + $0x70] sm:$0x3] 0.0
        %269 = vst [vmem:[#allocation2 + $0x78] sm:$0xff] 0.0
        %270 = vst [vmem:[#allocation2 + $0x80] sm:$0xff] 0.0
        %271 = vst [vmem:[#allocation2 + $0x88] sm:$0x3] 0.0
        %272 = vst [vmem:[#allocation2 + $0x90] sm:$0xff] 0.0
        %273 = vst [vmem:[#allocation2 + $0x98] sm:$0xff] 0.0
        %274 = vst [vmem:[#allocation2 + $0xa0] sm:$0x3] 0.0
        %275 = vst [vmem:[#allocation2 + $0xa8] sm:$0xff] 0.0
        %276 = vst [vmem:[#allocation2 + $0xb0] sm:$0xff] 0.0
        %277 = vst [vmem:[#allocation2 + $0xb8] sm:$0x3] 0.0
        %278 = vst [vmem:[#allocation2 + $0xc0] sm:$0xff] 0.0
        %279 = vst [vmem:[#allocation2 + $0xc8] sm:$0xff] 0.0
        %280 = vst [vmem:[#allocation2 + $0xd0] sm:$0x3] 0.0
        %281 = vst [vmem:[#allocation2 + $0xd8] sm:$0xff] 0.0
        %282 = vst [vmem:[#allocation2 + $0xe0] sm:$0xff] 0.0
        %283 = vst [vmem:[#allocation2 + $0xe8] sm:$0x3] 0.0
        %284 = vst [vmem:[#allocation2 + $0xf0] sm:$0xff] 0.0
        %285 = vst [vmem:[#allocation2 + $0xf8] sm:$0xff] 0.0
        %286 = vst [vmem:[#allocation2 + $0x100] sm:$0x3] 0.0
        %287 = vst [vmem:[#allocation2 + $0x108] sm:$0xff] 0.0
        %288 = vst [vmem:[#allocation2 + $0x110] sm:$0xff] 0.0
        %289 = vst [vmem:[#allocation2 + $0x118] sm:$0x3] 0.0
        %290 = vst [vmem:[#allocation2 + $0x120] sm:$0xff] 0.0
        %291 = vst [vmem:[#allocation2 + $0x128] sm:$0xff] 0.0
        %292 = vst [vmem:[#allocation2 + $0x130] sm:$0x3] 0.0
        %293 = vst [vmem:[#allocation2 + $0x138] sm:$0xff] 0.0
        %294 = vst [vmem:[#allocation2 + $0x140] sm:$0xff] 0.0
        %295 = vst [vmem:[#allocation2 + $0x148] sm:$0x3] 0.0
        %296 = vst [vmem:[#allocation2 + $0x150] sm:$0xff] 0.0
        %297 = vst [vmem:[#allocation2 + $0x158] sm:$0xff] 0.0
        %298 = vst [vmem:[#allocation2 + $0x160] sm:$0x3] 0.0
        %299 = vst [vmem:[#allocation2 + $0x168] sm:$0xff] 0.0
        %300 = vst [vmem:[#allocation2 + $0x170] sm:$0xff] 0.0
        %301 = vst [vmem:[#allocation2 + $0x178] sm:$0x3] 0.0
        %302 = vst [vmem:[#allocation2 + $0x180] sm:$0xff] 0.0
        %303 = vst [vmem:[#allocation2 + $0x188] sm:$0xff] 0.0
        %304 = vst [vmem:[#allocation2 + $0x190] sm:$0x3] 0.0
        %305 = vst [vmem:[#allocation2 + $0x198] sm:$0xff] 0.0
        %306 = vst [vmem:[#allocation2 + $0x1a0] sm:$0xff] 0.0
        %307 = vst [vmem:[#allocation2 + $0x1a8] sm:$0x3] 0.0
        %308 = vst [vmem:[#allocation2 + $0x1b0] sm:$0xff] 0.0
        %309 = vst [vmem:[#allocation2 + $0x1b8] sm:$0xff] 0.0
        %310 = vst [vmem:[#allocation2 + $0x1c0] sm:$0x3] 0.0
        %311 = vst [vmem:[#allocation2 + $0x1c8] sm:$0xff] 0.0
        %312 = vst [vmem:[#allocation2 + $0x1d0] sm:$0xff] 0.0
        %313 = vst [vmem:[#allocation2 + $0x1d8] sm:$0x3] 0.0
        %v314 = vld [vmem:[%s238] sm:$0xff]
        %v315 = vld [vmem:[%s238 + $0x8] sm:$0xff]
        %v316 = vld [vmem:[%s238 + $0x10] sm:$0xff]
        %v317 = vld [vmem:[%s238 + $0x18] sm:$0xff]
        %v318 = vld [vmem:[%s238 + $0x20] sm:$0xff]
        %v319 = vld [vmem:[%s238 + $0x28] sm:$0xff]
        %v320 = vld [vmem:[%s238 + $0x30] sm:$0xff]
        %v321 = vld [vmem:[%s238 + $0x38] sm:$0xff]
        %v322 = vld [vmem:[%s238 + $0x40] sm:$0xff]
        %v323 = vld [vmem:[%s238 + $0x48] sm:$0xff]
        %v324 = vld [vmem:[%s238 + $0x50] sm:$0xff]
        %v325 = vld [vmem:[%s238 + $0x58] sm:$0xff]
        %v326 = vld [vmem:[%s238 + $0x60] sm:$0xff]
        %v327 = vld [vmem:[%s238 + $0x68] sm:$0xff]
        %v328 = vld [vmem:[%s238 + $0x70] sm:$0xff]
        %v329 = vld [vmem:[%s238 + $0x78] sm:$0xff]
        %v330 = vld [vmem:[%s238 + $0x80] sm:$0xff]
        %v331 = vld [vmem:[%s238 + $0x88] sm:$0xff]
        %v332 = vld [vmem:[%s238 + $0x90] sm:$0xff]
        %v333 = vld [vmem:[%s238 + $0x98] sm:$0xff]
        %v334 = vld [vmem:[%s238 + $0xa0] sm:$0xff]
        %v335 = vld [vmem:[%s238 + $0xa8] sm:$0xff]
        %v336 = vld [vmem:[%s238 + $0xb0] sm:$0xff]
        %v337 = vld [vmem:[%s238 + $0xb8] sm:$0xff]
        %v338 = vld [vmem:[%s238 + $0xc0] sm:$0xff]
        %v339 = vld [vmem:[%s238 + $0xc8] sm:$0xff]
        %v340 = vld [vmem:[%s238 + $0xd0] sm:$0xff]
        %v341 = vld [vmem:[%s238 + $0xd8] sm:$0xff]
        %v342 = vld [vmem:[%s238 + $0xe0] sm:$0xff]
        %v343 = vld [vmem:[%s238 + $0xe8] sm:$0xff]
        %v344 = vld [vmem:[%s238 + $0xf0] sm:$0xff]
        %v345 = vld [vmem:[%s238 + $0xf8] sm:$0xff]
        %s346 = scalar_lea.vmem [#allocation2], 48
        %vm347 = vcmask 31744
        %348 = vst.msk [vmem:[%s346 + $0x1] sm:$0xff] %vm347, %v314
        %349 = vst.msk [vmem:[%s346 + $0x9] sm:$0xff] %vm347, %v315
        %350 = vst.msk [vmem:[%s346 + $0x19] sm:$0xff] %vm347, %v316
        %351 = vst.msk [vmem:[%s346 + $0x21] sm:$0xff] %vm347, %v317
        %352 = vst.msk [vmem:[%s346 + $0x31] sm:$0xff] %vm347, %v318
        %353 = vst.msk [vmem:[%s346 + $0x39] sm:$0xff] %vm347, %v319
        %354 = vst.msk [vmem:[%s346 + $0x49] sm:$0xff] %vm347, %v320
        %355 = vst.msk [vmem:[%s346 + $0x51] sm:$0xff] %vm347, %v321
        %356 = vst.msk [vmem:[%s346 + $0x61] sm:$0xff] %vm347, %v322
        %357 = vst.msk [vmem:[%s346 + $0x69] sm:$0xff] %vm347, %v323
        %358 = vst.msk [vmem:[%s346 + $0x79] sm:$0xff] %vm347, %v324
        %359 = vst.msk [vmem:[%s346 + $0x81] sm:$0xff] %vm347, %v325
        %360 = vst.msk [vmem:[%s346 + $0x91] sm:$0xff] %vm347, %v326
        %361 = vst.msk [vmem:[%s346 + $0x99] sm:$0xff] %vm347, %v327
        %362 = vst.msk [vmem:[%s346 + $0xa9] sm:$0xff] %vm347, %v328
        %363 = vst.msk [vmem:[%s346 + $0xb1] sm:$0xff] %vm347, %v329
        %364 = vst.msk [vmem:[%s346 + $0xc1] sm:$0xff] %vm347, %v330
        %365 = vst.msk [vmem:[%s346 + $0xc9] sm:$0xff] %vm347, %v331
        %366 = vst.msk [vmem:[%s346 + $0xd9] sm:$0xff] %vm347, %v332
        %367 = vst.msk [vmem:[%s346 + $0xe1] sm:$0xff] %vm347, %v333
        %368 = vst.msk [vmem:[%s346 + $0xf1] sm:$0xff] %vm347, %v334
        %369 = vst.msk [vmem:[%s346 + $0xf9] sm:$0xff] %vm347, %v335
        %370 = vst.msk [vmem:[%s346 + $0x109] sm:$0xff] %vm347, %v336
        %371 = vst.msk [vmem:[%s346 + $0x111] sm:$0xff] %vm347, %v337
        %372 = vst.msk [vmem:[%s346 + $0x121] sm:$0xff] %vm347, %v338
        %373 = vst.msk [vmem:[%s346 + $0x129] sm:$0xff] %vm347, %v339
        %374 = vst.msk [vmem:[%s346 + $0x139] sm:$0xff] %vm347, %v340
        %375 = vst.msk [vmem:[%s346 + $0x141] sm:$0xff] %vm347, %v341
        %376 = vst.msk [vmem:[%s346 + $0x151] sm:$0xff] %vm347, %v342
        %377 = vst.msk [vmem:[%s346 + $0x159] sm:$0xff] %vm347, %v343
        %378 = vst.msk [vmem:[%s346 + $0x169] sm:$0xff] %vm347, %v344
        %379 = vst.msk [vmem:[%s346 + $0x171] sm:$0xff] %vm347, %v345
      $region44: #{conv2layer_forward.1} parent=39 // pred_fallthru
        _
      %s380 = smul.u32 %s21, 8
      %s381 = smul.u32 %s380, 24
      %s382 = scalar_lea.vmem [#allocation2], %s381
      %v383 = vld [vmem:[%s382] sm:$0xff]
      %v384 = vld [vmem:[%s382 + $0x8] sm:$0xff]
      %v385 = vld [vmem:[%s382 + $0x10] sm:$0x3]
      %v386 = vld [vmem:[%s382 + $0x18] sm:$0xff]
      %v387 = vld [vmem:[%s382 + $0x20] sm:$0xff]
      %v388 = vld [vmem:[%s382 + $0x28] sm:$0x3]
      %v389 = vld [vmem:[%s382 + $0x30] sm:$0xff]
      %v390 = vld [vmem:[%s382 + $0x38] sm:$0xff]
      %v391 = vld [vmem:[%s382 + $0x40] sm:$0x3]
      %v392 = vld [vmem:[%s382 + $0x48] sm:$0xff]
      %v393 = vld [vmem:[%s382 + $0x50] sm:$0xff]
      %v394 = vld [vmem:[%s382 + $0x58] sm:$0x3]
      %v395 = vld [vmem:[%s382 + $0x60] sm:$0xff]
      %v396 = vld [vmem:[%s382 + $0x68] sm:$0xff]
      %v397 = vld [vmem:[%s382 + $0x70] sm:$0x3]
      %v398 = vld [vmem:[%s382 + $0x78] sm:$0xff]
      %v399 = vld [vmem:[%s382 + $0x80] sm:$0xff]
      %v400 = vld [vmem:[%s382 + $0x88] sm:$0x3]
      %v401 = vld [vmem:[%s382 + $0x90] sm:$0xff]
      %v402 = vld [vmem:[%s382 + $0x98] sm:$0xff]
      %v403 = vld [vmem:[%s382 + $0xa0] sm:$0x3]
      %v404 = vld [vmem:[%s382 + $0xa8] sm:$0xff]
      %v405 = vld [vmem:[%s382 + $0xb0] sm:$0xff]
      %v406 = vld [vmem:[%s382 + $0xb8] sm:$0x3]
      %v407 = vld [vmem:[%s382 + $0xc0] sm:$0xff]
      %v408 = vld [vmem:[%s382 + $0xc8] sm:$0xff]
      %v409 = vld [vmem:[%s382 + $0xd0] sm:$0x3]
      %v410 = vld [vmem:[%s382 + $0xd8] sm:$0xff]
      %v411 = vld [vmem:[%s382 + $0xe0] sm:$0xff]
      %v412 = vld [vmem:[%s382 + $0xe8] sm:$0x3]
      %v413 = vld [vmem:[%s382 + $0xf0] sm:$0xff]
      %v414 = vld [vmem:[%s382 + $0xf8] sm:$0xff]
      %v415 = vld [vmem:[%s382 + $0x100] sm:$0x3]
      %v416 = vld [vmem:[%s382 + $0x108] sm:$0xff]
      %v417 = vld [vmem:[%s382 + $0x110] sm:$0xff]
      %v418 = vld [vmem:[%s382 + $0x118] sm:$0x3]
      %vm449 = vcmask 1046528
      %v450 = vrot.slane %v383, 1
      %v451 = vrot.slane %v384, 1
      %v452 = vsel %vm449, %v450, %v451
      %v453 = vrot.slane %v385, 1
      %v454 = vsel %vm449, %v451, %v453
      %v455 = vrot.slane %v386, 1
      %v456 = vrot.slane %v387, 1
      %v457 = vsel %vm449, %v455, %v456
      %v458 = vrot.slane %v388, 1
      %v459 = vsel %vm449, %v456, %v458
      %v460 = vrot.slane %v389, 1
      %v461 = vrot.slane %v390, 1
      %v462 = vsel %vm449, %v460, %v461
      %v463 = vrot.slane %v391, 1
      %v464 = vsel %vm449, %v461, %v463
      %v465 = vrot.slane %v392, 1
      %v466 = vrot.slane %v393, 1
      %v467 = vsel %vm449, %v465, %v466
      %v468 = vrot.slane %v394, 1
      %v469 = vsel %vm449, %v466, %v468
      %v470 = vrot.slane %v395, 1
      %v471 = vrot.slane %v396, 1
      %v472 = vsel %vm449, %v470, %v471
      %v473 = vrot.slane %v397, 1
      %v474 = vsel %vm449, %v471, %v473
      %v475 = vrot.slane %v398, 1
      %v476 = vrot.slane %v399, 1
      %v477 = vsel %vm449, %v475, %v476
      %v478 = vrot.slane %v400, 1
      %v479 = vsel %vm449, %v476, %v478
      %v480 = vrot.slane %v401, 1
      %v481 = vrot.slane %v402, 1
      %v482 = vsel %vm449, %v480, %v481
      %v483 = vrot.slane %v403, 1
      %v484 = vsel %vm449, %v481, %v483
      %v485 = vrot.slane %v404, 1
      %v486 = vrot.slane %v405, 1
      %v487 = vsel %vm449, %v485, %v486
      %v488 = vrot.slane %v406, 1
      %v489 = vsel %vm449, %v486, %v488
      %v490 = vrot.slane %v407, 1
      %v491 = vrot.slane %v408, 1
      %v492 = vsel %vm449, %v490, %v491
      %v493 = vrot.slane %v409, 1
      %v494 = vsel %vm449, %v491, %v493
      %v495 = vrot.slane %v410, 1
      %v496 = vrot.slane %v411, 1
      %v497 = vsel %vm449, %v495, %v496
      %v498 = vrot.slane %v412, 1
      %v499 = vsel %vm449, %v496, %v498
      %vm520 = vcmask 1045504
      %v521 = vrot.slane %v383, 2
      %v522 = vrot.slane %v384, 2
      %v523 = vsel %vm520, %v521, %v522
      %v524 = vrot.slane %v385, 2
      %v525 = vsel %vm520, %v522, %v524
      %v526 = vrot.slane %v386, 2
      %v527 = vrot.slane %v387, 2
      %v528 = vsel %vm520, %v526, %v527
      %v529 = vrot.slane %v388, 2
      %v530 = vsel %vm520, %v527, %v529
      %v531 = vrot.slane %v389, 2
      %v532 = vrot.slane %v390, 2
      %v533 = vsel %vm520, %v531, %v532
      %v534 = vrot.slane %v391, 2
      %v535 = vsel %vm520, %v532, %v534
      %v536 = vrot.slane %v392, 2
      %v537 = vrot.slane %v393, 2
      %v538 = vsel %vm520, %v536, %v537
      %v539 = vrot.slane %v394, 2
      %v540 = vsel %vm520, %v537, %v539
      %v541 = vrot.slane %v395, 2
      %v542 = vrot.slane %v396, 2
      %v543 = vsel %vm520, %v541, %v542
      %v544 = vrot.slane %v397, 2
      %v545 = vsel %vm520, %v542, %v544
      %v546 = vrot.slane %v398, 2
      %v547 = vrot.slane %v399, 2
      %v548 = vsel %vm520, %v546, %v547
      %v549 = vrot.slane %v400, 2
      %v550 = vsel %vm520, %v547, %v549
      %v551 = vrot.slane %v401, 2
      %v552 = vrot.slane %v402, 2
      %v553 = vsel %vm520, %v551, %v552
      %v554 = vrot.slane %v403, 2
      %v555 = vsel %vm520, %v552, %v554
      %v556 = vrot.slane %v404, 2
      %v557 = vrot.slane %v405, 2
      %v558 = vsel %vm520, %v556, %v557
      %v559 = vrot.slane %v406, 2
      %v560 = vsel %vm520, %v557, %v559
      %v561 = vrot.slane %v407, 2
      %v562 = vrot.slane %v408, 2
      %v563 = vsel %vm520, %v561, %v562
      %v564 = vrot.slane %v409, 2
      %v565 = vsel %vm520, %v562, %v564
      %v566 = vrot.slane %v410, 2
      %v567 = vrot.slane %v411, 2
      %v568 = vsel %vm520, %v566, %v567
      %v569 = vrot.slane %v412, 2
      %v570 = vsel %vm520, %v567, %v569
      %v594 = vrot.slane %v413, 1
      %v595 = vrot.slane %v414, 1
      %v596 = vsel %vm449, %v594, %v595
      %v597 = vrot.slane %v415, 1
      %v598 = vsel %vm449, %v595, %v597
      %v601 = vrot.slane %v413, 2
      %v602 = vrot.slane %v414, 2
      %v603 = vsel %vm520, %v601, %v602
      %v604 = vrot.slane %v415, 2
      %v605 = vsel %vm520, %v602, %v604
      %v611 = vrot.slane %v416, 1
      %v612 = vrot.slane %v417, 1
      %v613 = vsel %vm449, %v611, %v612
      %v614 = vrot.slane %v418, 1
      %v615 = vsel %vm449, %v612, %v614
      %v618 = vrot.slane %v416, 2
      %v619 = vrot.slane %v417, 2
      %v620 = vsel %vm520, %v618, %v619
      %v621 = vrot.slane %v418, 2
      %v622 = vsel %vm520, %v619, %v621
      %v625 = vld [vmem:[%s1] sm:$0xff]
      %v626 = vld [vmem:[%s1 + $0x8] sm:$0xff]
      %v627 = vld [vmem:[%s1 + $0x10] sm:$0xff]
      %v628 = vld [vmem:[%s1 + $0x18] sm:$0xff]
      %v629 = vld [vmem:[%s1 + $0x20] sm:$0xff]
      %v630 = vld [vmem:[%s1 + $0x28] sm:$0xff]
      %v631 = vld [vmem:[%s1 + $0x30] sm:$0xff]
      %v632 = vld [vmem:[%s1 + $0x38] sm:$0xff]
      %v633 = vld [vmem:[%s1 + $0x40] sm:$0xff]
      %v634 = vld [vmem:[%s1 + $0x48] sm:$0xff]
      %v635 = vld [vmem:[%s1 + $0x50] sm:$0xff]
      %v636 = vld [vmem:[%s1 + $0x58] sm:$0xff]
      %v637 = vld [vmem:[%s1 + $0x60] sm:$0xff]
      %v638 = vld [vmem:[%s1 + $0x68] sm:$0xff]
      %v639 = vld [vmem:[%s1 + $0x70] sm:$0xff]
      %v640 = vld [vmem:[%s1 + $0x78] sm:$0xff]
      %v641 = vld [vmem:[%s1 + $0x80] sm:$0xff]
      %v642 = vld [vmem:[%s1 + $0x88] sm:$0xff]
      %v643 = vld [vmem:[%s1 + $0x90] sm:$0xff]
      %v644 = vld [vmem:[%s1 + $0x98] sm:$0xff]
      %v645 = vld [vmem:[%s1 + $0xa0] sm:$0xff]
      %v646 = vld [vmem:[%s1 + $0xa8] sm:$0xff]
      %v647 = vld [vmem:[%s1 + $0xb0] sm:$0xff]
      %v648 = vld [vmem:[%s1 + $0xb8] sm:$0xff]
      %v649 = vld [vmem:[%s1 + $0xc0] sm:$0xff]
      %v650 = vld [vmem:[%s1 + $0xc8] sm:$0xff]
      %v651 = vld [vmem:[%s1 + $0xd0] sm:$0xff]
      %v652 = vld [vmem:[%s1 + $0xd8] sm:$0xff]
      %v653 = vld [vmem:[%s1 + $0xe0] sm:$0xff]
      %v654 = vld [vmem:[%s1 + $0xe8] sm:$0xff]
      %v655 = vld [vmem:[%s1 + $0xf0] sm:$0xff]
      %v656 = vld [vmem:[%s1 + $0xf8] sm:$0xff]
      %v657 = vld [vmem:[%s1 + $0x100] sm:$0xff]
      %v658 = vld [vmem:[%s1 + $0x108] sm:$0xff]
      %v659 = vld [vmem:[%s1 + $0x110] sm:$0xff]
      %v660 = vld [vmem:[%s1 + $0x118] sm:$0xff]
      %v661 = vld [vmem:[%s1 + $0x120] sm:$0xff]
      %v662 = vld [vmem:[%s1 + $0x128] sm:$0xff]
      %v663 = vld [vmem:[%s1 + $0x130] sm:$0xff]
      %v664 = vld [vmem:[%s1 + $0x138] sm:$0xff]
      %v665 = vld [vmem:[%s1 + $0x140] sm:$0xff]
      %v666 = vld [vmem:[%s1 + $0x148] sm:$0xff]
      %v667 = vld [vmem:[%s1 + $0x150] sm:$0xff]
      %v668 = vld [vmem:[%s1 + $0x158] sm:$0xff]
      %v669 = vld [vmem:[%s1 + $0x160] sm:$0xff]
      %v670 = vld [vmem:[%s1 + $0x168] sm:$0xff]
      %v671 = vld [vmem:[%s1 + $0x170] sm:$0xff]
      %v672 = vld [vmem:[%s1 + $0x178] sm:$0xff]
      %v673 = vld [vmem:[%s1 + $0x180] sm:$0xff]
      %v674 = vld [vmem:[%s1 + $0x188] sm:$0xff]
      %v675 = vld [vmem:[%s1 + $0x190] sm:$0xff]
      %v676 = vld [vmem:[%s1 + $0x198] sm:$0xff]
      %v677 = vld [vmem:[%s1 + $0x1a0] sm:$0xff]
      %v678 = vld [vmem:[%s1 + $0x1a8] sm:$0xff]
      %v679 = vld [vmem:[%s1 + $0x1b0] sm:$0xff]
      %v680 = vld [vmem:[%s1 + $0x1b8] sm:$0xff]
      %v681 = vld [vmem:[%s1 + $0x1c0] sm:$0xff]
      %v682 = vld [vmem:[%s1 + $0x1c8] sm:$0xff]
      %v683 = vld [vmem:[%s1 + $0x1d0] sm:$0xff]
      %v684 = vld [vmem:[%s1 + $0x1d8] sm:$0xff]
      %v685 = vld [vmem:[%s1 + $0x1e0] sm:$0xff]
      %v686 = vld [vmem:[%s1 + $0x1e8] sm:$0xff]
      %v687 = vld [vmem:[%s1 + $0x1f0] sm:$0xff]
      %v688 = vld [vmem:[%s1 + $0x1f8] sm:$0xff]
      %v689 = vld [vmem:[%s1 + $0x200] sm:$0xff]
      %v690 = vld [vmem:[%s1 + $0x208] sm:$0xff]
      %v691 = vld [vmem:[%s1 + $0x210] sm:$0xff]
      %v692 = vld [vmem:[%s1 + $0x218] sm:$0xff]
      %v693 = vld [vmem:[%s1 + $0x220] sm:$0xff]
      %v694 = vld [vmem:[%s1 + $0x228] sm:$0xff]
      %v695 = vld [vmem:[%s1 + $0x230] sm:$0xff]
      %v696 = vld [vmem:[%s1 + $0x238] sm:$0xff]
      %v697 = vld [vmem:[%s1 + $0x240] sm:$0xff]
      %v698 = vld [vmem:[%s1 + $0x248] sm:$0xff]
      %v699 = vld [vmem:[%s1 + $0x250] sm:$0xff]
      %v700 = vld [vmem:[%s1 + $0x258] sm:$0xff]
      %v701 = vld [vmem:[%s1 + $0x260] sm:$0xff]
      %v702 = vld [vmem:[%s1 + $0x268] sm:$0xff]
      %v703 = vld [vmem:[%s1 + $0x270] sm:$0xff]
      %v704 = vld [vmem:[%s1 + $0x278] sm:$0xff]
      %v705 = vld [vmem:[%s1 + $0x280] sm:$0xff]
      %v706 = vld [vmem:[%s1 + $0x288] sm:$0xff]
      %v707 = vld [vmem:[%s1 + $0x290] sm:$0xff]
      %v708 = vld [vmem:[%s1 + $0x298] sm:$0xff]
      %v709 = vld [vmem:[%s1 + $0x2a0] sm:$0xff]
      %v710 = vld [vmem:[%s1 + $0x2a8] sm:$0xff]
      %v711 = vld [vmem:[%s1 + $0x2b0] sm:$0xff]
      %v712 = vld [vmem:[%s1 + $0x2b8] sm:$0xff]
      %v713 = vld [vmem:[%s1 + $0x2c0] sm:$0xff]
      %v714 = vld [vmem:[%s1 + $0x2c8] sm:$0xff]
      %v715 = vld [vmem:[%s1 + $0x2d0] sm:$0xff]
      %v716 = vld [vmem:[%s1 + $0x2d8] sm:$0xff]
      %v717 = vld [vmem:[%s1 + $0x2e0] sm:$0xff]
      %v718 = vld [vmem:[%s1 + $0x2e8] sm:$0xff]
      %v719 = vld [vmem:[%s1 + $0x2f0] sm:$0xff]
      %v720 = vld [vmem:[%s1 + $0x2f8] sm:$0xff]
      %v721 = vld [vmem:[%s1 + $0x300] sm:$0xff]
      %v722 = vld [vmem:[%s1 + $0x308] sm:$0xff]
      %v723 = vld [vmem:[%s1 + $0x310] sm:$0xff]
      %v724 = vld [vmem:[%s1 + $0x318] sm:$0xff]
      %v725 = vld [vmem:[%s1 + $0x320] sm:$0xff]
      %v726 = vld [vmem:[%s1 + $0x328] sm:$0xff]
      %v727 = vld [vmem:[%s1 + $0x330] sm:$0xff]
      %v728 = vld [vmem:[%s1 + $0x338] sm:$0xff]
      %v729 = vld [vmem:[%s1 + $0x340] sm:$0xff]
      %v730 = vld [vmem:[%s1 + $0x348] sm:$0xff]
      %v731 = vld [vmem:[%s1 + $0x350] sm:$0xff]
      %v732 = vld [vmem:[%s1 + $0x358] sm:$0xff]
      %v733 = vld [vmem:[%s1 + $0x360] sm:$0xff]
      %v734 = vld [vmem:[%s1 + $0x368] sm:$0xff]
      %v735 = vld [vmem:[%s1 + $0x370] sm:$0xff]
      %v736 = vld [vmem:[%s1 + $0x378] sm:$0xff]
      %v737 = vld [vmem:[%s1 + $0x380] sm:$0xff]
      %v738 = vld [vmem:[%s1 + $0x388] sm:$0xff]
      %v739 = vld [vmem:[%s1 + $0x390] sm:$0xff]
      %v740 = vld [vmem:[%s1 + $0x398] sm:$0xff]
      %v741 = vld [vmem:[%s1 + $0x3a0] sm:$0xff]
      %v742 = vld [vmem:[%s1 + $0x3a8] sm:$0xff]
      %v743 = vld [vmem:[%s1 + $0x3b0] sm:$0xff]
      %v744 = vld [vmem:[%s1 + $0x3b8] sm:$0xff]
      %v745 = vld [vmem:[%s1 + $0x3c0] sm:$0xff]
      %v746 = vld [vmem:[%s1 + $0x3c8] sm:$0xff]
      %v747 = vld [vmem:[%s1 + $0x3d0] sm:$0xff]
      %v748 = vld [vmem:[%s1 + $0x3d8] sm:$0xff]
      %v749 = vld [vmem:[%s1 + $0x3e0] sm:$0xff]
      %v750 = vld [vmem:[%s1 + $0x3e8] sm:$0xff]
      %v751 = vld [vmem:[%s1 + $0x3f0] sm:$0xff]
      %v752 = vld [vmem:[%s1 + $0x3f8] sm:$0xff]
      %v753 = vld [vmem:[%s1 + $0x400] sm:$0xff]
      %v754 = vld [vmem:[%s1 + $0x408] sm:$0xff]
      %v755 = vld [vmem:[%s1 + $0x410] sm:$0xff]
      %v756 = vld [vmem:[%s1 + $0x418] sm:$0xff]
      %v757 = vld [vmem:[%s1 + $0x420] sm:$0xff]
      %v758 = vld [vmem:[%s1 + $0x428] sm:$0xff]
      %v759 = vld [vmem:[%s1 + $0x430] sm:$0xff]
      %v760 = vld [vmem:[%s1 + $0x438] sm:$0xff]
      %v761 = vld [vmem:[%s1 + $0x440] sm:$0xff]
      %v762 = vld [vmem:[%s1 + $0x448] sm:$0xff]
      %v763 = vld [vmem:[%s1 + $0x450] sm:$0xff]
      %v764 = vld [vmem:[%s1 + $0x458] sm:$0xff]
      %v765 = vld [vmem:[%s1 + $0x460] sm:$0xff]
      %v766 = vld [vmem:[%s1 + $0x468] sm:$0xff]
      %v767 = vld [vmem:[%s1 + $0x470] sm:$0xff]
      %v768 = vld [vmem:[%s1 + $0x478] sm:$0xff]
      %v769 = vld [vmem:[%s2] sm:$0x1]
      %v771 = vlaneseq
      %v772 = vshrl.u32 %v771, 7
      %v773 = vsub.s32 0, %v772
      %v774 = vrot.slane %v769, %v773
      %776 = vmatprep.subr.mxu0 0.0
      %777 = vmatpush1.msra.mxu0 %v625
      %778 = vmatprep.subr.mxu0 0.0
      %779 = vmatpush1.msra.mxu0 %v626
      %780 = vmatprep.subr.mxu0 0.0
      %781 = vmatpush1.msra.mxu0 %v627
      %782 = vmatprep.subr.mxu0 0.0
      %783 = vmatpush1.msra.mxu0 %v628
      %784 = vmatprep.subr.mxu0 0.0
      %785 = vmatpush1.msra.mxu0 %v629
      %786 = vmatprep.subr.mxu0 0.0
      %787 = vmatpush1.msra.mxu0 %v630
      %788 = vmatprep.subr.mxu0 0.0
      %789 = vmatpush1.msra.mxu0 %v631
      %790 = vmatprep.subr.mxu0 0.0
      %791 = vmatpush1.msra.mxu0 %v632
      %792 = vmatprep.subr.mxu0 0.0
      %793 = vmatpush1.msra.mxu0 %v633
      %794 = vmatprep.subr.mxu0 0.0
      %795 = vmatpush1.msra.mxu0 %v634
      %796 = vmatprep.subr.mxu0 0.0
      %797 = vmatpush1.msra.mxu0 %v635
      %798 = vmatprep.subr.mxu0 0.0
      %799 = vmatpush1.msra.mxu0 %v636
      %800 = vmatprep.subr.mxu0 0.0
      %801 = vmatpush1.msra.mxu0 %v637
      %802 = vmatprep.subr.mxu0 0.0
      %803 = vmatpush1.msra.mxu0 %v638
      %804 = vmatprep.subr.mxu0 0.0
      %805 = vmatpush1.msra.mxu0 %v639
      %806 = vmatprep.subr.mxu0 0.0
      %807 = vmatpush1.msra.mxu0 %v640
      %808 = vmatprep.subr.mxu0 0.0
      %809 = vmatpush1.msra.mxu0 %v641
      %810 = vmatprep.subr.mxu0 0.0
      %811 = vmatpush1.msra.mxu0 %v642
      %812 = vmatprep.subr.mxu0 0.0
      %813 = vmatpush1.msra.mxu0 %v643
      %814 = vmatprep.subr.mxu0 0.0
      %815 = vmatpush1.msra.mxu0 %v644
      %816 = vmatprep.subr.mxu0 0.0
      %817 = vmatpush1.msra.mxu0 %v645
      %818 = vmatprep.subr.mxu0 0.0
      %819 = vmatpush1.msra.mxu0 %v646
      %820 = vmatprep.subr.mxu0 0.0
      %821 = vmatpush1.msra.mxu0 %v647
      %822 = vmatprep.subr.mxu0 0.0
      %823 = vmatpush1.msra.mxu0 %v648
      %824 = vmatprep.subr.mxu0 0.0
      %825 = vmatpush1.msra.mxu0 %v649
      %826 = vmatprep.subr.mxu0 0.0
      %827 = vmatpush1.msra.mxu0 %v650
      %828 = vmatprep.subr.mxu0 0.0
      %829 = vmatpush1.msra.mxu0 %v651
      %830 = vmatprep.subr.mxu0 0.0
      %831 = vmatpush1.msra.mxu0 %v652
      %832 = vmatprep.subr.mxu0 0.0
      %833 = vmatpush1.msra.mxu0 %v653
      %834 = vmatprep.subr.mxu0 0.0
      %835 = vmatpush1.msra.mxu0 %v654
      %836 = vmatprep.subr.mxu0 0.0
      %837 = vmatpush1.msra.mxu0 %v655
      %838 = vmatprep.subr.mxu0 0.0
      %839 = vmatpush1.msra.mxu0 %v656
      %840 = vmatprep.mubr.f32.mxu0 %v452
      %841 = vmatmul.mubr.f32.gmra.mrb[0].mxu0 %v383
      %v842 = vpop.f32.mrb[0].mxu0
      %v843 = vadd.f32 %v774, %v842
      %v844 = vpop.f32.mrb[0].mxu0
      %845 = vmatprep.mubr.f32.mxu0 %v454
      %846 = vmatmul.mubr.f32.gmra.mrb[0].mxu0 %v384
      %v847 = vpop.f32.mrb[0].mxu0
      %v848 = vadd.f32 %v774, %v847
      %v849 = vpop.f32.mrb[0].mxu0
      %850 = vmatprep.mubr.f32.mxu0 %v457
      %851 = vmatmul.mubr.f32.gmra.mrb[0].mxu0 %v386
      %v852 = vpop.f32.mrb[0].mxu0
      %v853 = vadd.f32 %v774, %v852
      %v854 = vpop.f32.mrb[0].mxu0
      %855 = vmatprep.mubr.f32.mxu0 %v459
      %856 = vmatmul.mubr.f32.gmra.mrb[0].mxu0 %v387
      %v857 = vpop.f32.mrb[0].mxu0
      %v858 = vadd.f32 %v774, %v857
      %v859 = vpop.f32.mrb[0].mxu0
      %860 = vmatprep.mubr.f32.mxu0 %v462
      %861 = vmatmul.mubr.f32.gmra.mrb[0].mxu0 %v389
      %v862 = vpop.f32.mrb[0].mxu0
      %v863 = vadd.f32 %v774, %v862
      %v864 = vpop.f32.mrb[0].mxu0
      %865 = vmatprep.mubr.f32.mxu0 %v464
      %866 = vmatmul.mubr.f32.gmra.mrb[0].mxu0 %v390
      %v867 = vpop.f32.mrb[0].mxu0
      %v868 = vadd.f32 %v774, %v867
      %v869 = vpop.f32.mrb[0].mxu0
      %870 = vmatprep.mubr.f32.mxu0 %v467
      %871 = vmatmul.mubr.f32.gmra.mrb[0].mxu0 %v392
      %v872 = vpop.f32.mrb[0].mxu0
      %v873 = vadd.f32 %v774, %v872
      %v874 = vpop.f32.mrb[0].mxu0
      %875 = vmatprep.mubr.f32.mxu0 %v469
      %876 = vmatmul.mubr.f32.gmra.mrb[0].mxu0 %v393
      %v877 = vpop.f32.mrb[0].mxu0
      %v878 = vadd.f32 %v774, %v877
      %v879 = vpop.f32.mrb[0].mxu0
      %880 = vmatprep.mubr.f32.mxu0 %v472
      %881 = vmatmul.mubr.f32.gmra.mrb[0].mxu0 %v395
      %v882 = vpop.f32.mrb[0].mxu0
      %v883 = vadd.f32 %v774, %v882
      %v884 = vpop.f32.mrb[0].mxu0
      %885 = vmatprep.mubr.f32.mxu0 %v474
      %886 = vmatmul.mubr.f32.gmra.mrb[0].mxu0 %v396
      %v887 = vpop.f32.mrb[0].mxu0
      %v888 = vadd.f32 %v774, %v887
      %v889 = vpop.f32.mrb[0].mxu0
      %890 = vmatprep.mubr.f32.mxu0 %v477
      %891 = vmatmul.mubr.f32.gmra.mrb[0].mxu0 %v398
      %v892 = vpop.f32.mrb[0].mxu0
      %v893 = vadd.f32 %v774, %v892
      %v894 = vpop.f32.mrb[0].mxu0
      %895 = vmatprep.mubr.f32.mxu0 %v479
      %896 = vmatmul.mubr.f32.gmra.mrb[0].mxu0 %v399
      %v897 = vpop.f32.mrb[0].mxu0
      %v898 = vadd.f32 %v774, %v897
      %v899 = vpop.f32.mrb[0].mxu0
      %900 = vmatprep.mubr.f32.mxu0 %v482
      %901 = vmatmul.mubr.f32.gmra.mrb[0].mxu0 %v401
      %v902 = vpop.f32.mrb[0].mxu0
      %v903 = vadd.f32 %v774, %v902
      %v904 = vpop.f32.mrb[0].mxu0
      %905 = vmatprep.mubr.f32.mxu0 %v484
      %906 = vmatmul.mubr.f32.gmra.mrb[0].mxu0 %v402
      %v907 = vpop.f32.mrb[0].mxu0
      %v908 = vadd.f32 %v774, %v907
      %v909 = vpop.f32.mrb[0].mxu0
      %910 = vmatprep.mubr.f32.mxu0 %v487
      %911 = vmatmul.mubr.f32.gmra.mrb[0].mxu0 %v404
      %v912 = vpop.f32.mrb[0].mxu0
      %v913 = vadd.f32 %v774, %v912
      %v914 = vpop.f32.mrb[0].mxu0
      %915 = vmatprep.mubr.f32.mxu0 %v489
      %916 = vmatmul.mubr.f32.gmra.mrb[0].mxu0 %v405
      %v917 = vpop.f32.mrb[0].mxu0
      %v918 = vadd.f32 %v774, %v917
      %v919 = vpop.f32.mrb[0].mxu0
      %920 = vmatprep.mubr.f32.mxu0 %v492
      %921 = vmatmul.mubr.f32.gmra.mrb[0].mxu0 %v407
      %v922 = vpop.f32.mrb[0].mxu0
      %v923 = vadd.f32 %v774, %v922
      %v924 = vpop.f32.mrb[0].mxu0
      %925 = vmatprep.mubr.f32.mxu0 %v494
      %926 = vmatmul.mubr.f32.gmra.mrb[0].mxu0 %v408
      %v927 = vpop.f32.mrb[0].mxu0
      %v928 = vadd.f32 %v774, %v927
      %v929 = vpop.f32.mrb[0].mxu0
      %930 = vmatprep.mubr.f32.mxu0 %v497
      %931 = vmatmul.mubr.f32.gmra.mrb[0].mxu0 %v410
      %v932 = vpop.f32.mrb[0].mxu0
      %v933 = vadd.f32 %v774, %v932
      %v934 = vpop.f32.mrb[0].mxu0
      %935 = vmatprep.mubr.f32.mxu0 %v499
      %936 = vmatmul.mubr.f32.gmra.mrb[0].mxu0 %v411
      %v937 = vpop.f32.mrb[0].mxu0
      %v938 = vadd.f32 %v774, %v937
      %v939 = vpop.f32.mrb[0].mxu0
      %940 = vdwg.mxu0
      %941 = vmatprep.subr.mxu0 0.0
      %942 = vmatpush1.msra.mxu0 %v657
      %943 = vmatprep.subr.mxu0 0.0
      %944 = vmatpush1.msra.mxu0 %v658
      %945 = vmatprep.subr.mxu0 0.0
      %946 = vmatpush1.msra.mxu0 %v659
      %947 = vmatprep.subr.mxu0 0.0
      %948 = vmatpush1.msra.mxu0 %v660
      %949 = vmatprep.subr.mxu0 0.0
      %950 = vmatpush1.msra.mxu0 %v661
      %951 = vmatprep.subr.mxu0 0.0
      %952 = vmatpush1.msra.mxu0 %v662
      %953 = vmatprep.subr.mxu0 0.0
      %954 = vmatpush1.msra.mxu0 %v663
      %955 = vmatprep.subr.mxu0 0.0
      %956 = vmatpush1.msra.mxu0 %v664
      %957 = vmatprep.subr.mxu0 0.0
      %958 = vmatpush1.msra.mxu0 %v665
      %959 = vmatprep.subr.mxu0 0.0
      %960 = vmatpush1.msra.mxu0 %v666
      %961 = vmatprep.subr.mxu0 0.0
      %962 = vmatpush1.msra.mxu0 %v667
      %963 = vmatprep.subr.mxu0 0.0
      %964 = vmatpush1.msra.mxu0 %v668
      %965 = vmatprep.subr.mxu0 0.0
      %966 = vmatpush1.msra.mxu0 %v669
      %967 = vmatprep.subr.mxu0 0.0
      %968 = vmatpush1.msra.mxu0 %v670
      %969 = vmatprep.subr.mxu0 0.0
      %970 = vmatpush1.msra.mxu0 %v671
      %971 = vmatprep.subr.mxu0 0.0
      %972 = vmatpush1.msra.mxu0 %v672
      %973 = vmatprep.subr.mxu0 0.0
      %974 = vmatpush1.msra.mxu0 %v673
      %975 = vmatprep.subr.mxu0 0.0
      %976 = vmatpush1.msra.mxu0 %v674
      %977 = vmatprep.subr.mxu0 0.0
      %978 = vmatpush1.msra.mxu0 %v675
      %979 = vmatprep.subr.mxu0 0.0
      %980 = vmatpush1.msra.mxu0 %v676
      %981 = vmatprep.subr.mxu0 0.0
      %982 = vmatpush1.msra.mxu0 %v677
      %983 = vmatprep.subr.mxu0 0.0
      %984 = vmatpush1.msra.mxu0 %v678
      %985 = vmatprep.subr.mxu0 0.0
      %986 = vmatpush1.msra.mxu0 %v679
      %987 = vmatprep.subr.mxu0 0.0
      %988 = vmatpush1.msra.mxu0 %v680
      %989 = vmatprep.subr.mxu0 0.0
      %990 = vmatpush1.msra.mxu0 %v681
      %991 = vmatprep.subr.mxu0 0.0
      %992 = vmatpush1.msra.mxu0 %v682
      %993 = vmatprep.subr.mxu0 0.0
      %994 = vmatpush1.msra.mxu0 %v683
      %995 = vmatprep.subr.mxu0 0.0
      %996 = vmatpush1.msra.mxu0 %v684
      %997 = vmatprep.subr.mxu0 0.0
      %998 = vmatpush1.msra.mxu0 %v685
      %999 = vmatprep.subr.mxu0 0.0
      %1000 = vmatpush1.msra.mxu0 %v686
      %1001 = vmatprep.subr.mxu0 0.0
      %1002 = vmatpush1.msra.mxu0 %v687
      %1003 = vmatprep.subr.mxu0 0.0
      %1004 = vmatpush1.msra.mxu0 %v688
      %1005 = vmatprep.mubr.f32.mxu0 %v386
      %1006 = vmatmul.mubr.f32.gmra.mrb[0].mxu0 %v523
      %v1007 = vpop.f32.mrb[0].mxu0
      %v1008 = vadd.f32 %v843, %v1007
      %v1009 = vpop.f32.mrb[0].mxu0
      %1010 = vmatprep.mubr.f32.mxu0 %v387
      %1011 = vmatmul.mubr.f32.gmra.mrb[0].mxu0 %v525
      %v1012 = vpop.f32.mrb[0].mxu0
      %v1013 = vadd.f32 %v848, %v1012
      %v1014 = vpop.f32.mrb[0].mxu0
      %1015 = vmatprep.mubr.f32.mxu0 %v389
      %1016 = vmatmul.mubr.f32.gmra.mrb[0].mxu0 %v528
      %v1017 = vpop.f32.mrb[0].mxu0
      %v1018 = vadd.f32 %v853, %v1017
      %v1019 = vpop.f32.mrb[0].mxu0
      %1020 = vmatprep.mubr.f32.mxu0 %v390
      %1021 = vmatmul.mubr.f32.gmra.mrb[0].mxu0 %v530
      %v1022 = vpop.f32.mrb[0].mxu0
      %v1023 = vadd.f32 %v858, %v1022
      %v1024 = vpop.f32.mrb[0].mxu0
      %1025 = vmatprep.mubr.f32.mxu0 %v392
      %1026 = vmatmul.mubr.f32.gmra.mrb[0].mxu0 %v533
      %v1027 = vpop.f32.mrb[0].mxu0
      %v1028 = vadd.f32 %v863, %v1027
      %v1029 = vpop.f32.mrb[0].mxu0
      %1030 = vmatprep.mubr.f32.mxu0 %v393
      %1031 = vmatmul.mubr.f32.gmra.mrb[0].mxu0 %v535
      %v1032 = vpop.f32.mrb[0].mxu0
      %v1033 = vadd.f32 %v868, %v1032
      %v1034 = vpop.f32.mrb[0].mxu0
      %1035 = vmatprep.mubr.f32.mxu0 %v395
      %1036 = vmatmul.mubr.f32.gmra.mrb[0].mxu0 %v538
      %v1037 = vpop.f32.mrb[0].mxu0
      %v1038 = vadd.f32 %v873, %v1037
      %v1039 = vpop.f32.mrb[0].mxu0
      %1040 = vmatprep.mubr.f32.mxu0 %v396
      %1041 = vmatmul.mubr.f32.gmra.mrb[0].mxu0 %v540
      %v1042 = vpop.f32.mrb[0].mxu0
      %v1043 = vadd.f32 %v878, %v1042
      %v1044 = vpop.f32.mrb[0].mxu0
      %1045 = vmatprep.mubr.f32.mxu0 %v398
      %1046 = vmatmul.mubr.f32.gmra.mrb[0].mxu0 %v543
      %v1047 = vpop.f32.mrb[0].mxu0
      %v1048 = vadd.f32 %v883, %v1047
      %v1049 = vpop.f32.mrb[0].mxu0
      %1050 = vmatprep.mubr.f32.mxu0 %v399
      %1051 = vmatmul.mubr.f32.gmra.mrb[0].mxu0 %v545
      %v1052 = vpop.f32.mrb[0].mxu0
      %v1053 = vadd.f32 %v888, %v1052
      %v1054 = vpop.f32.mrb[0].mxu0
      %1055 = vmatprep.mubr.f32.mxu0 %v401
      %1056 = vmatmul.mubr.f32.gmra.mrb[0].mxu0 %v548
      %v1057 = vpop.f32.mrb[0].mxu0
      %v1058 = vadd.f32 %v893, %v1057
      %v1059 = vpop.f32.mrb[0].mxu0
      %1060 = vmatprep.mubr.f32.mxu0 %v402
      %1061 = vmatmul.mubr.f32.gmra.mrb[0].mxu0 %v550
      %v1062 = vpop.f32.mrb[0].mxu0
      %v1063 = vadd.f32 %v898, %v1062
      %v1064 = vpop.f32.mrb[0].mxu0
      %1065 = vmatprep.mubr.f32.mxu0 %v404
      %1066 = vmatmul.mubr.f32.gmra.mrb[0].mxu0 %v553
      %v1067 = vpop.f32.mrb[0].mxu0
      %v1068 = vadd.f32 %v903, %v1067
      %v1069 = vpop.f32.mrb[0].mxu0
      %1070 = vmatprep.mubr.f32.mxu0 %v405
      %1071 = vmatmul.mubr.f32.gmra.mrb[0].mxu0 %v555
      %v1072 = vpop.f32.mrb[0].mxu0
      %v1073 = vadd.f32 %v908, %v1072
      %v1074 = vpop.f32.mrb[0].mxu0
      %1075 = vmatprep.mubr.f32.mxu0 %v407
      %1076 = vmatmul.mubr.f32.gmra.mrb[0].mxu0 %v558
      %v1077 = vpop.f32.mrb[0].mxu0
      %v1078 = vadd.f32 %v913, %v1077
      %v1079 = vpop.f32.mrb[0].mxu0
      %1080 = vmatprep.mubr.f32.mxu0 %v408
      %1081 = vmatmul.mubr.f32.gmra.mrb[0].mxu0 %v560
      %v1082 = vpop.f32.mrb[0].mxu0
      %v1083 = vadd.f32 %v918, %v1082
      %v1084 = vpop.f32.mrb[0].mxu0
      %1085 = vmatprep.mubr.f32.mxu0 %v410
      %1086 = vmatmul.mubr.f32.gmra.mrb[0].mxu0 %v563
      %v1087 = vpop.f32.mrb[0].mxu0
      %v1088 = vadd.f32 %v923, %v1087
      %v1089 = vpop.f32.mrb[0].mxu0
      %1090 = vmatprep.mubr.f32.mxu0 %v411
      %1091 = vmatmul.mubr.f32.gmra.mrb[0].mxu0 %v565
      %v1092 = vpop.f32.mrb[0].mxu0
      %v1093 = vadd.f32 %v928, %v1092
      %v1094 = vpop.f32.mrb[0].mxu0
      %1095 = vmatprep.mubr.f32.mxu0 %v413
      %1096 = vmatmul.mubr.f32.gmra.mrb[0].mxu0 %v568
      %v1097 = vpop.f32.mrb[0].mxu0
      %v1098 = vadd.f32 %v933, %v1097
      %v1099 = vpop.f32.mrb[0].mxu0
      %1100 = vmatprep.mubr.f32.mxu0 %v414
      %1101 = vmatmul.mubr.f32.gmra.mrb[0].mxu0 %v570
      %v1102 = vpop.f32.mrb[0].mxu0
      %v1103 = vadd.f32 %v938, %v1102
      %v1104 = vpop.f32.mrb[0].mxu0
      %1105 = vdwg.mxu0
      %1106 = vmatprep.subr.mxu0 0.0
      %1107 = vmatpush1.msra.mxu0 %v689
      %1108 = vmatprep.subr.mxu0 0.0
      %1109 = vmatpush1.msra.mxu0 %v690
      %1110 = vmatprep.subr.mxu0 0.0
      %1111 = vmatpush1.msra.mxu0 %v691
      %1112 = vmatprep.subr.mxu0 0.0
      %1113 = vmatpush1.msra.mxu0 %v692
      %1114 = vmatprep.subr.mxu0 0.0
      %1115 = vmatpush1.msra.mxu0 %v693
      %1116 = vmatprep.subr.mxu0 0.0
      %1117 = vmatpush1.msra.mxu0 %v694
      %1118 = vmatprep.subr.mxu0 0.0
      %1119 = vmatpush1.msra.mxu0 %v695
      %1120 = vmatprep.subr.mxu0 0.0
      %1121 = vmatpush1.msra.mxu0 %v696
      %1122 = vmatprep.subr.mxu0 0.0
      %1123 = vmatpush1.msra.mxu0 %v697
      %1124 = vmatprep.subr.mxu0 0.0
      %1125 = vmatpush1.msra.mxu0 %v698
      %1126 = vmatprep.subr.mxu0 0.0
      %1127 = vmatpush1.msra.mxu0 %v699
      %1128 = vmatprep.subr.mxu0 0.0
      %1129 = vmatpush1.msra.mxu0 %v700
      %1130 = vmatprep.subr.mxu0 0.0
      %1131 = vmatpush1.msra.mxu0 %v701
      %1132 = vmatprep.subr.mxu0 0.0
      %1133 = vmatpush1.msra.mxu0 %v702
      %1134 = vmatprep.subr.mxu0 0.0
      %1135 = vmatpush1.msra.mxu0 %v703
      %1136 = vmatprep.subr.mxu0 0.0
      %1137 = vmatpush1.msra.mxu0 %v704
      %1138 = vmatprep.subr.mxu0 0.0
      %1139 = vmatpush1.msra.mxu0 %v705
      %1140 = vmatprep.subr.mxu0 0.0
      %1141 = vmatpush1.msra.mxu0 %v706
      %1142 = vmatprep.subr.mxu0 0.0
      %1143 = vmatpush1.msra.mxu0 %v707
      %1144 = vmatprep.subr.mxu0 0.0
      %1145 = vmatpush1.msra.mxu0 %v708
      %1146 = vmatprep.subr.mxu0 0.0
      %1147 = vmatpush1.msra.mxu0 %v709
      %1148 = vmatprep.subr.mxu0 0.0
      %1149 = vmatpush1.msra.mxu0 %v710
      %1150 = vmatprep.subr.mxu0 0.0
      %1151 = vmatpush1.msra.mxu0 %v711
      %1152 = vmatprep.subr.mxu0 0.0
      %1153 = vmatpush1.msra.mxu0 %v712
      %1154 = vmatprep.subr.mxu0 0.0
      %1155 = vmatpush1.msra.mxu0 %v713
      %1156 = vmatprep.subr.mxu0 0.0
      %1157 = vmatpush1.msra.mxu0 %v714
      %1158 = vmatprep.subr.mxu0 0.0
      %1159 = vmatpush1.msra.mxu0 %v715
      %1160 = vmatprep.subr.mxu0 0.0
      %1161 = vmatpush1.msra.mxu0 %v716
      %1162 = vmatprep.subr.mxu0 0.0
      %1163 = vmatpush1.msra.mxu0 %v717
      %1164 = vmatprep.subr.mxu0 0.0
      %1165 = vmatpush1.msra.mxu0 %v718
      %1166 = vmatprep.subr.mxu0 0.0
      %1167 = vmatpush1.msra.mxu0 %v719
      %1168 = vmatprep.subr.mxu0 0.0
      %1169 = vmatpush1.msra.mxu0 %v720
      %1170 = vmatprep.mubr.f32.mxu0 %v528
      %1171 = vmatmul.mubr.f32.gmra.mrb[0].mxu0 %v457
      %v1172 = vpop.f32.mrb[0].mxu0
      %v1173 = vadd.f32 %v1008, %v1172
      %v1174 = vpop.f32.mrb[0].mxu0
      %1175 = vmatprep.mubr.f32.mxu0 %v530
      %1176 = vmatmul.mubr.f32.gmra.mrb[0].mxu0 %v459
      %v1177 = vpop.f32.mrb[0].mxu0
      %v1178 = vadd.f32 %v1013, %v1177
      %v1179 = vpop.f32.mrb[0].mxu0
      %1180 = vmatprep.mubr.f32.mxu0 %v533
      %1181 = vmatmul.mubr.f32.gmra.mrb[0].mxu0 %v462
      %v1182 = vpop.f32.mrb[0].mxu0
      %v1183 = vadd.f32 %v1018, %v1182
      %v1184 = vpop.f32.mrb[0].mxu0
      %1185 = vmatprep.mubr.f32.mxu0 %v535
      %1186 = vmatmul.mubr.f32.gmra.mrb[0].mxu0 %v464
      %v1187 = vpop.f32.mrb[0].mxu0
      %v1188 = vadd.f32 %v1023, %v1187
      %v1189 = vpop.f32.mrb[0].mxu0
      %1190 = vmatprep.mubr.f32.mxu0 %v538
      %1191 = vmatmul.mubr.f32.gmra.mrb[0].mxu0 %v467
      %v1192 = vpop.f32.mrb[0].mxu0
      %v1193 = vadd.f32 %v1028, %v1192
      %v1194 = vpop.f32.mrb[0].mxu0
      %1195 = vmatprep.mubr.f32.mxu0 %v540
      %1196 = vmatmul.mubr.f32.gmra.mrb[0].mxu0 %v469
      %v1197 = vpop.f32.mrb[0].mxu0
      %v1198 = vadd.f32 %v1033, %v1197
      %v1199 = vpop.f32.mrb[0].mxu0
      %1200 = vmatprep.mubr.f32.mxu0 %v543
      %1201 = vmatmul.mubr.f32.gmra.mrb[0].mxu0 %v472
      %v1202 = vpop.f32.mrb[0].mxu0
      %v1203 = vadd.f32 %v1038, %v1202
      %v1204 = vpop.f32.mrb[0].mxu0
      %1205 = vmatprep.mubr.f32.mxu0 %v545
      %1206 = vmatmul.mubr.f32.gmra.mrb[0].mxu0 %v474
      %v1207 = vpop.f32.mrb[0].mxu0
      %v1208 = vadd.f32 %v1043, %v1207
      %v1209 = vpop.f32.mrb[0].mxu0
      %1210 = vmatprep.mubr.f32.mxu0 %v548
      %1211 = vmatmul.mubr.f32.gmra.mrb[0].mxu0 %v477
      %v1212 = vpop.f32.mrb[0].mxu0
      %v1213 = vadd.f32 %v1048, %v1212
      %v1214 = vpop.f32.mrb[0].mxu0
      %1215 = vmatprep.mubr.f32.mxu0 %v550
      %1216 = vmatmul.mubr.f32.gmra.mrb[0].mxu0 %v479
      %v1217 = vpop.f32.mrb[0].mxu0
      %v1218 = vadd.f32 %v1053, %v1217
      %v1219 = vpop.f32.mrb[0].mxu0
      %1220 = vmatprep.mubr.f32.mxu0 %v553
      %1221 = vmatmul.mubr.f32.gmra.mrb[0].mxu0 %v482
      %v1222 = vpop.f32.mrb[0].mxu0
      %v1223 = vadd.f32 %v1058, %v1222
      %v1224 = vpop.f32.mrb[0].mxu0
      %1225 = vmatprep.mubr.f32.mxu0 %v555
      %1226 = vmatmul.mubr.f32.gmra.mrb[0].mxu0 %v484
      %v1227 = vpop.f32.mrb[0].mxu0
      %v1228 = vadd.f32 %v1063, %v1227
      %v1229 = vpop.f32.mrb[0].mxu0
      %1230 = vmatprep.mubr.f32.mxu0 %v558
      %1231 = vmatmul.mubr.f32.gmra.mrb[0].mxu0 %v487
      %v1232 = vpop.f32.mrb[0].mxu0
      %v1233 = vadd.f32 %v1068, %v1232
      %v1234 = vpop.f32.mrb[0].mxu0
      %1235 = vmatprep.mubr.f32.mxu0 %v560
      %1236 = vmatmul.mubr.f32.gmra.mrb[0].mxu0 %v489
      %v1237 = vpop.f32.mrb[0].mxu0
      %v1238 = vadd.f32 %v1073, %v1237
      %v1239 = vpop.f32.mrb[0].mxu0
      %1240 = vmatprep.mubr.f32.mxu0 %v563
      %1241 = vmatmul.mubr.f32.gmra.mrb[0].mxu0 %v492
      %v1242 = vpop.f32.mrb[0].mxu0
      %v1243 = vadd.f32 %v1078, %v1242
      %v1244 = vpop.f32.mrb[0].mxu0
      %1245 = vmatprep.mubr.f32.mxu0 %v565
      %1246 = vmatmul.mubr.f32.gmra.mrb[0].mxu0 %v494
      %v1247 = vpop.f32.mrb[0].mxu0
      %v1248 = vadd.f32 %v1083, %v1247
      %v1249 = vpop.f32.mrb[0].mxu0
      %1250 = vmatprep.mubr.f32.mxu0 %v568
      %1251 = vmatmul.mubr.f32.gmra.mrb[0].mxu0 %v497
      %v1252 = vpop.f32.mrb[0].mxu0
      %v1253 = vadd.f32 %v1088, %v1252
      %v1254 = vpop.f32.mrb[0].mxu0
      %1255 = vmatprep.mubr.f32.mxu0 %v570
      %1256 = vmatmul.mubr.f32.gmra.mrb[0].mxu0 %v499
      %v1257 = vpop.f32.mrb[0].mxu0
      %v1258 = vadd.f32 %v1093, %v1257
      %v1259 = vpop.f32.mrb[0].mxu0
      %1260 = vmatprep.mubr.f32.mxu0 %v603
      %1261 = vmatmul.mubr.f32.gmra.mrb[0].mxu0 %v596
      %v1262 = vpop.f32.mrb[0].mxu0
      %v1263 = vadd.f32 %v1098, %v1262
      %v1264 = vpop.f32.mrb[0].mxu0
      %1265 = vmatprep.mubr.f32.mxu0 %v605
      %1266 = vmatmul.mubr.f32.gmra.mrb[0].mxu0 %v598
      %v1267 = vpop.f32.mrb[0].mxu0
      %v1268 = vadd.f32 %v1103, %v1267
      %v1269 = vpop.f32.mrb[0].mxu0
      %1270 = vdwg.mxu0
      %1271 = vmatprep.subr.mxu0 0.0
      %1272 = vmatpush1.msra.mxu0 %v721
      %1273 = vmatprep.subr.mxu0 0.0
      %1274 = vmatpush1.msra.mxu0 %v722
      %1275 = vmatprep.subr.mxu0 0.0
      %1276 = vmatpush1.msra.mxu0 %v723
      %1277 = vmatprep.subr.mxu0 0.0
      %1278 = vmatpush1.msra.mxu0 %v724
      %1279 = vmatprep.subr.mxu0 0.0
      %1280 = vmatpush1.msra.mxu0 %v725
      %1281 = vmatprep.subr.mxu0 0.0
      %1282 = vmatpush1.msra.mxu0 %v726
      %1283 = vmatprep.subr.mxu0 0.0
      %1284 = vmatpush1.msra.mxu0 %v727
      %1285 = vmatprep.subr.mxu0 0.0
      %1286 = vmatpush1.msra.mxu0 %v728
      %1287 = vmatprep.subr.mxu0 0.0
      %1288 = vmatpush1.msra.mxu0 %v729
      %1289 = vmatprep.subr.mxu0 0.0
      %1290 = vmatpush1.msra.mxu0 %v730
      %1291 = vmatprep.subr.mxu0 0.0
      %1292 = vmatpush1.msra.mxu0 %v731
      %1293 = vmatprep.subr.mxu0 0.0
      %1294 = vmatpush1.msra.mxu0 %v732
      %1295 = vmatprep.subr.mxu0 0.0
      %1296 = vmatpush1.msra.mxu0 %v733
      %1297 = vmatprep.subr.mxu0 0.0
      %1298 = vmatpush1.msra.mxu0 %v734
      %1299 = vmatprep.subr.mxu0 0.0
      %1300 = vmatpush1.msra.mxu0 %v735
      %1301 = vmatprep.subr.mxu0 0.0
      %1302 = vmatpush1.msra.mxu0 %v736
      %1303 = vmatprep.subr.mxu0 0.0
      %1304 = vmatpush1.msra.mxu0 %v737
      %1305 = vmatprep.subr.mxu0 0.0
      %1306 = vmatpush1.msra.mxu0 %v738
      %1307 = vmatprep.subr.mxu0 0.0
      %1308 = vmatpush1.msra.mxu0 %v739
      %1309 = vmatprep.subr.mxu0 0.0
      %1310 = vmatpush1.msra.mxu0 %v740
      %1311 = vmatprep.subr.mxu0 0.0
      %1312 = vmatpush1.msra.mxu0 %v741
      %1313 = vmatprep.subr.mxu0 0.0
      %1314 = vmatpush1.msra.mxu0 %v742
      %1315 = vmatprep.subr.mxu0 0.0
      %1316 = vmatpush1.msra.mxu0 %v743
      %1317 = vmatprep.subr.mxu0 0.0
      %1318 = vmatpush1.msra.mxu0 %v744
      %1319 = vmatprep.subr.mxu0 0.0
      %1320 = vmatpush1.msra.mxu0 %v745
      %1321 = vmatprep.subr.mxu0 0.0
      %1322 = vmatpush1.msra.mxu0 %v746
      %1323 = vmatprep.subr.mxu0 0.0
      %1324 = vmatpush1.msra.mxu0 %v747
      %1325 = vmatprep.subr.mxu0 0.0
      %1326 = vmatpush1.msra.mxu0 %v748
      %1327 = vmatprep.subr.mxu0 0.0
      %1328 = vmatpush1.msra.mxu0 %v749
      %1329 = vmatprep.subr.mxu0 0.0
      %1330 = vmatpush1.msra.mxu0 %v750
      %1331 = vmatprep.subr.mxu0 0.0
      %1332 = vmatpush1.msra.mxu0 %v751
      %1333 = vmatprep.subr.mxu0 0.0
      %1334 = vmatpush1.msra.mxu0 %v752
      %1335 = vmatprep.mubr.f32.mxu0 %v462
      %1336 = vmatmul.mubr.f32.gmra.mrb[0].mxu0 %v389
      %v1337 = vpop.f32.mrb[0].mxu0
      %v1338 = vadd.f32 %v1173, %v1337
      %v1339 = vpop.f32.mrb[0].mxu0
      %1340 = vmatprep.mubr.f32.mxu0 %v464
      %1341 = vmatmul.mubr.f32.gmra.mrb[0].mxu0 %v390
      %v1342 = vpop.f32.mrb[0].mxu0
      %v1343 = vadd.f32 %v1178, %v1342
      %v1344 = vpop.f32.mrb[0].mxu0
      %1345 = vmatprep.mubr.f32.mxu0 %v467
      %1346 = vmatmul.mubr.f32.gmra.mrb[0].mxu0 %v392
      %v1347 = vpop.f32.mrb[0].mxu0
      %v1348 = vadd.f32 %v1183, %v1347
      %v1349 = vpop.f32.mrb[0].mxu0
      %1350 = vmatprep.mubr.f32.mxu0 %v469
      %1351 = vmatmul.mubr.f32.gmra.mrb[0].mxu0 %v393
      %v1352 = vpop.f32.mrb[0].mxu0
      %v1353 = vadd.f32 %v1188, %v1352
      %v1354 = vpop.f32.mrb[0].mxu0
      %1355 = vmatprep.mubr.f32.mxu0 %v472
      %1356 = vmatmul.mubr.f32.gmra.mrb[0].mxu0 %v395
      %v1357 = vpop.f32.mrb[0].mxu0
      %v1358 = vadd.f32 %v1193, %v1357
      %v1359 = vpop.f32.mrb[0].mxu0
      %1360 = vmatprep.mubr.f32.mxu0 %v474
      %1361 = vmatmul.mubr.f32.gmra.mrb[0].mxu0 %v396
      %v1362 = vpop.f32.mrb[0].mxu0
      %v1363 = vadd.f32 %v1198, %v1362
      %v1364 = vpop.f32.mrb[0].mxu0
      %1365 = vmatprep.mubr.f32.mxu0 %v477
      %1366 = vmatmul.mubr.f32.gmra.mrb[0].mxu0 %v398
      %v1367 = vpop.f32.mrb[0].mxu0
      %v1368 = vadd.f32 %v1203, %v1367
      %v1369 = vpop.f32.mrb[0].mxu0
      %1370 = vmatprep.mubr.f32.mxu0 %v479
      %1371 = vmatmul.mubr.f32.gmra.mrb[0].mxu0 %v399
      %v1372 = vpop.f32.mrb[0].mxu0
      %v1373 = vadd.f32 %v1208, %v1372
      %v1374 = vpop.f32.mrb[0].mxu0
      %1375 = vmatprep.mubr.f32.mxu0 %v482
      %1376 = vmatmul.mubr.f32.gmra.mrb[0].mxu0 %v401
      %v1377 = vpop.f32.mrb[0].mxu0
      %v1378 = vadd.f32 %v1213, %v1377
      %v1379 = vpop.f32.mrb[0].mxu0
      %1380 = vmatprep.mubr.f32.mxu0 %v484
      %1381 = vmatmul.mubr.f32.gmra.mrb[0].mxu0 %v402
      %v1382 = vpop.f32.mrb[0].mxu0
      %v1383 = vadd.f32 %v1218, %v1382
      %v1384 = vpop.f32.mrb[0].mxu0
      %1385 = vmatprep.mubr.f32.mxu0 %v487
      %1386 = vmatmul.mubr.f32.gmra.mrb[0].mxu0 %v404
      %v1387 = vpop.f32.mrb[0].mxu0
      %v1388 = vadd.f32 %v1223, %v1387
      %v1389 = vpop.f32.mrb[0].mxu0
      %1390 = vmatprep.mubr.f32.mxu0 %v489
      %1391 = vmatmul.mubr.f32.gmra.mrb[0].mxu0 %v405
      %v1392 = vpop.f32.mrb[0].mxu0
      %v1393 = vadd.f32 %v1228, %v1392
      %v1394 = vpop.f32.mrb[0].mxu0
      %1395 = vmatprep.mubr.f32.mxu0 %v492
      %1396 = vmatmul.mubr.f32.gmra.mrb[0].mxu0 %v407
      %v1397 = vpop.f32.mrb[0].mxu0
      %v1398 = vadd.f32 %v1233, %v1397
      %v1399 = vpop.f32.mrb[0].mxu0
      %1400 = vmatprep.mubr.f32.mxu0 %v494
      %1401 = vmatmul.mubr.f32.gmra.mrb[0].mxu0 %v408
      %v1402 = vpop.f32.mrb[0].mxu0
      %v1403 = vadd.f32 %v1238, %v1402
      %v1404 = vpop.f32.mrb[0].mxu0
      %1405 = vmatprep.mubr.f32.mxu0 %v497
      %1406 = vmatmul.mubr.f32.gmra.mrb[0].mxu0 %v410
      %v1407 = vpop.f32.mrb[0].mxu0
      %v1408 = vadd.f32 %v1243, %v1407
      %v1409 = vpop.f32.mrb[0].mxu0
      %1410 = vmatprep.mubr.f32.mxu0 %v499
      %1411 = vmatmul.mubr.f32.gmra.mrb[0].mxu0 %v411
      %v1412 = vpop.f32.mrb[0].mxu0
      %v1413 = vadd.f32 %v1248, %v1412
      %v1414 = vpop.f32.mrb[0].mxu0
      %1415 = vmatprep.mubr.f32.mxu0 %v596
      %1416 = vmatmul.mubr.f32.gmra.mrb[0].mxu0 %v413
      %v1417 = vpop.f32.mrb[0].mxu0
      %v1418 = vadd.f32 %v1253, %v1417
      %v1419 = vpop.f32.mrb[0].mxu0
      %1420 = vmatprep.mubr.f32.mxu0 %v598
      %1421 = vmatmul.mubr.f32.gmra.mrb[0].mxu0 %v414
      %v1422 = vpop.f32.mrb[0].mxu0
      %v1423 = vadd.f32 %v1258, %v1422
      %v1424 = vpop.f32.mrb[0].mxu0
      %1425 = vmatprep.mubr.f32.mxu0 %v613
      %1426 = vmatmul.mubr.f32.gmra.mrb[0].mxu0 %v416
      %v1427 = vpop.f32.mrb[0].mxu0
      %v1428 = vadd.f32 %v1263, %v1427
      %v1429 = vpop.f32.mrb[0].mxu0
      %1430 = vmatprep.mubr.f32.mxu0 %v615
      %1431 = vmatmul.mubr.f32.gmra.mrb[0].mxu0 %v417
      %v1432 = vpop.f32.mrb[0].mxu0
      %v1433 = vadd.f32 %v1268, %v1432
      %v1434 = vpop.f32.mrb[0].mxu0
      %1435 = vdwg.mxu0
      %1436 = vmatprep.subr.mxu0 0.0
      %1437 = vmatpush1.msra.mxu0 %v753
      %1438 = vmatprep.subr.mxu0 0.0
      %1439 = vmatpush1.msra.mxu0 %v754
      %1440 = vmatprep.subr.mxu0 0.0
      %1441 = vmatpush1.msra.mxu0 %v755
      %1442 = vmatprep.subr.mxu0 0.0
      %1443 = vmatpush1.msra.mxu0 %v756
      %1444 = vmatprep.subr.mxu0 0.0
      %1445 = vmatpush1.msra.mxu0 %v757
      %1446 = vmatprep.subr.mxu0 0.0
      %1447 = vmatpush1.msra.mxu0 %v758
      %1448 = vmatprep.subr.mxu0 0.0
      %1449 = vmatpush1.msra.mxu0 %v759
      %1450 = vmatprep.subr.mxu0 0.0
      %1451 = vmatpush1.msra.mxu0 %v760
      %1452 = vmatprep.subr.mxu0 0.0
      %1453 = vmatpush1.msra.mxu0 %v761
      %1454 = vmatprep.subr.mxu0 0.0
      %1455 = vmatpush1.msra.mxu0 %v762
      %1456 = vmatprep.subr.mxu0 0.0
      %1457 = vmatpush1.msra.mxu0 %v763
      %1458 = vmatprep.subr.mxu0 0.0
      %1459 = vmatpush1.msra.mxu0 %v764
      %1460 = vmatprep.subr.mxu0 0.0
      %1461 = vmatpush1.msra.mxu0 %v765
      %1462 = vmatprep.subr.mxu0 0.0
      %1463 = vmatpush1.msra.mxu0 %v766
      %1464 = vmatprep.subr.mxu0 0.0
      %1465 = vmatpush1.msra.mxu0 %v767
      %1466 = vmatprep.subr.mxu0 0.0
      %1467 = vmatpush1.msra.mxu0 %v768
      %1468 = vmatprep.subr.mxu0 0.0
      %1469 = vmatpush1.msra.mxu0 0.0
      %1470 = vmatprep.subr.mxu0 0.0
      %1471 = vmatpush1.msra.mxu0 0.0
      %1472 = vmatprep.subr.mxu0 0.0
      %1473 = vmatpush1.msra.mxu0 0.0
      %1474 = vmatprep.subr.mxu0 0.0
      %1475 = vmatpush1.msra.mxu0 0.0
      %1476 = vmatprep.subr.mxu0 0.0
      %1477 = vmatpush1.msra.mxu0 0.0
      %1478 = vmatprep.subr.mxu0 0.0
      %1479 = vmatpush1.msra.mxu0 0.0
      %1480 = vmatprep.subr.mxu0 0.0
      %1481 = vmatpush1.msra.mxu0 0.0
      %1482 = vmatprep.subr.mxu0 0.0
      %1483 = vmatpush1.msra.mxu0 0.0
      %1484 = vmatprep.subr.mxu0 0.0
      %1485 = vmatpush1.msra.mxu0 0.0
      %1486 = vmatprep.subr.mxu0 0.0
      %1487 = vmatpush1.msra.mxu0 0.0
      %1488 = vmatprep.subr.mxu0 0.0
      %1489 = vmatpush1.msra.mxu0 0.0
      %1490 = vmatprep.subr.mxu0 0.0
      %1491 = vmatpush1.msra.mxu0 0.0
      %1492 = vmatprep.subr.mxu0 0.0
      %1493 = vmatpush1.msra.mxu0 0.0
      %1494 = vmatprep.subr.mxu0 0.0
      %1495 = vmatpush1.msra.mxu0 0.0
      %1496 = vmatprep.subr.mxu0 0.0
      %1497 = vmatpush1.msra.mxu0 0.0
      %1498 = vmatprep.subr.mxu0 0.0
      %1499 = vmatpush1.msra.mxu0 0.0
      %1500 = vmatprep.mubr.f32.mxu0 0.0
      %1501 = vmatmul.mubr.f32.gmra.mrb[0].mxu0 %v533
      %v1502 = vpop.f32.mrb[0].mxu0
      %v1503 = vadd.f32 %v1338, %v1502
      %v1504 = vpop.f32.mrb[0].mxu0
      %1505 = vmatprep.mubr.f32.mxu0 0.0
      %1506 = vmatmul.mubr.f32.gmra.mrb[0].mxu0 %v535
      %v1507 = vpop.f32.mrb[0].mxu0
      %v1508 = vadd.f32 %v1343, %v1507
      %v1509 = vpop.f32.mrb[0].mxu0
      %1510 = vmatprep.mubr.f32.mxu0 0.0
      %1511 = vmatmul.mubr.f32.gmra.mrb[0].mxu0 %v538
      %v1512 = vpop.f32.mrb[0].mxu0
      %v1513 = vadd.f32 %v1348, %v1512
      %v1514 = vpop.f32.mrb[0].mxu0
      %1515 = vmatprep.mubr.f32.mxu0 0.0
      %1516 = vmatmul.mubr.f32.gmra.mrb[0].mxu0 %v540
      %v1517 = vpop.f32.mrb[0].mxu0
      %v1518 = vadd.f32 %v1353, %v1517
      %v1519 = vpop.f32.mrb[0].mxu0
      %1520 = vmatprep.mubr.f32.mxu0 0.0
      %1521 = vmatmul.mubr.f32.gmra.mrb[0].mxu0 %v543
      %v1522 = vpop.f32.mrb[0].mxu0
      %v1523 = vadd.f32 %v1358, %v1522
      %v1524 = vpop.f32.mrb[0].mxu0
      %1525 = vmatprep.mubr.f32.mxu0 0.0
      %1526 = vmatmul.mubr.f32.gmra.mrb[0].mxu0 %v545
      %v1527 = vpop.f32.mrb[0].mxu0
      %v1528 = vadd.f32 %v1363, %v1527
      %v1529 = vpop.f32.mrb[0].mxu0
      %1530 = vmatprep.mubr.f32.mxu0 0.0
      %1531 = vmatmul.mubr.f32.gmra.mrb[0].mxu0 %v548
      %v1532 = vpop.f32.mrb[0].mxu0
      %v1533 = vadd.f32 %v1368, %v1532
      %v1534 = vpop.f32.mrb[0].mxu0
      %1535 = vmatprep.mubr.f32.mxu0 0.0
      %1536 = vmatmul.mubr.f32.gmra.mrb[0].mxu0 %v550
      %v1537 = vpop.f32.mrb[0].mxu0
      %v1538 = vadd.f32 %v1373, %v1537
      %v1539 = vpop.f32.mrb[0].mxu0
      %1540 = vmatprep.mubr.f32.mxu0 0.0
      %1541 = vmatmul.mubr.f32.gmra.mrb[0].mxu0 %v553
      %v1542 = vpop.f32.mrb[0].mxu0
      %v1543 = vadd.f32 %v1378, %v1542
      %v1544 = vpop.f32.mrb[0].mxu0
      %1545 = vmatprep.mubr.f32.mxu0 0.0
      %1546 = vmatmul.mubr.f32.gmra.mrb[0].mxu0 %v555
      %v1547 = vpop.f32.mrb[0].mxu0
      %v1548 = vadd.f32 %v1383, %v1547
      %v1549 = vpop.f32.mrb[0].mxu0
      %1550 = vmatprep.mubr.f32.mxu0 0.0
      %1551 = vmatmul.mubr.f32.gmra.mrb[0].mxu0 %v558
      %v1552 = vpop.f32.mrb[0].mxu0
      %v1553 = vadd.f32 %v1388, %v1552
      %v1554 = vpop.f32.mrb[0].mxu0
      %1555 = vmatprep.mubr.f32.mxu0 0.0
      %1556 = vmatmul.mubr.f32.gmra.mrb[0].mxu0 %v560
      %v1557 = vpop.f32.mrb[0].mxu0
      %v1558 = vadd.f32 %v1393, %v1557
      %v1559 = vpop.f32.mrb[0].mxu0
      %1560 = vmatprep.mubr.f32.mxu0 0.0
      %1561 = vmatmul.mubr.f32.gmra.mrb[0].mxu0 %v563
      %v1562 = vpop.f32.mrb[0].mxu0
      %v1563 = vadd.f32 %v1398, %v1562
      %v1564 = vpop.f32.mrb[0].mxu0
      %1565 = vmatprep.mubr.f32.mxu0 0.0
      %1566 = vmatmul.mubr.f32.gmra.mrb[0].mxu0 %v565
      %v1567 = vpop.f32.mrb[0].mxu0
      %v1568 = vadd.f32 %v1403, %v1567
      %v1569 = vpop.f32.mrb[0].mxu0
      %1570 = vmatprep.mubr.f32.mxu0 0.0
      %1571 = vmatmul.mubr.f32.gmra.mrb[0].mxu0 %v568
      %v1572 = vpop.f32.mrb[0].mxu0
      %v1573 = vadd.f32 %v1408, %v1572
      %v1574 = vpop.f32.mrb[0].mxu0
      %1575 = vmatprep.mubr.f32.mxu0 0.0
      %1576 = vmatmul.mubr.f32.gmra.mrb[0].mxu0 %v570
      %v1577 = vpop.f32.mrb[0].mxu0
      %v1578 = vadd.f32 %v1413, %v1577
      %v1579 = vpop.f32.mrb[0].mxu0
      %1580 = vmatprep.mubr.f32.mxu0 0.0
      %1581 = vmatmul.mubr.f32.gmra.mrb[0].mxu0 %v603
      %v1582 = vpop.f32.mrb[0].mxu0
      %v1583 = vadd.f32 %v1418, %v1582
      %v1584 = vpop.f32.mrb[0].mxu0
      %1585 = vmatprep.mubr.f32.mxu0 0.0
      %1586 = vmatmul.mubr.f32.gmra.mrb[0].mxu0 %v605
      %v1587 = vpop.f32.mrb[0].mxu0
      %v1588 = vadd.f32 %v1423, %v1587
      %v1589 = vpop.f32.mrb[0].mxu0
      %1590 = vmatprep.mubr.f32.mxu0 0.0
      %1591 = vmatmul.mubr.f32.gmra.mrb[0].mxu0 %v620
      %v1592 = vpop.f32.mrb[0].mxu0
      %v1593 = vadd.f32 %v1428, %v1592
      %v1594 = vpop.f32.mrb[0].mxu0
      %1595 = vmatprep.mubr.f32.mxu0 0.0
      %1596 = vmatmul.mubr.f32.gmra.mrb[0].mxu0 %v622
      %v1597 = vpop.f32.mrb[0].mxu0
      %v1598 = vadd.f32 %v1433, %v1597
      %v1599 = vpop.f32.mrb[0].mxu0
      %1600 = vdwg.mxu0
      %v1601 = vmax.f32 %v1503, 0.0
      %v1602 = vmax.f32 %v1508, 0.0
      %v1603 = vmax.f32 %v1513, 0.0
      %v1604 = vmax.f32 %v1518, 0.0
      %v1605 = vmax.f32 %v1523, 0.0
      %v1606 = vmax.f32 %v1528, 0.0
      %v1607 = vmax.f32 %v1533, 0.0
      %v1608 = vmax.f32 %v1538, 0.0
      %v1609 = vmax.f32 %v1543, 0.0
      %v1610 = vmax.f32 %v1548, 0.0
      %v1611 = vmax.f32 %v1553, 0.0
      %v1612 = vmax.f32 %v1558, 0.0
      %v1613 = vmax.f32 %v1563, 0.0
      %v1614 = vmax.f32 %v1568, 0.0
      %v1615 = vmax.f32 %v1573, 0.0
      %v1616 = vmax.f32 %v1578, 0.0
      %v1617 = vmax.f32 %v1583, 0.0
      %v1618 = vmax.f32 %v1588, 0.0
      %v1619 = vmax.f32 %v1593, 0.0
      %v1620 = vmax.f32 %v1598, 0.0
      %1621 = vst [vmem:[#allocation3] sm:$0xff] 0.0
      %1622 = vst [vmem:[#allocation3 + $0x8] sm:$0xff] 0.0
      %1623 = vst [vmem:[#allocation3 + $0x10] sm:$0x3] 0.0
      %1624 = vst [vmem:[#allocation3 + $0x18] sm:$0xff] 0.0
      %1625 = vst [vmem:[#allocation3 + $0x20] sm:$0xff] 0.0
      %1626 = vst [vmem:[#allocation3 + $0x28] sm:$0x3] 0.0
      %1627 = vst [vmem:[#allocation3 + $0x30] sm:$0xff] 0.0
      %1628 = vst [vmem:[#allocation3 + $0x38] sm:$0xff] 0.0
      %1629 = vst [vmem:[#allocation3 + $0x40] sm:$0x3] 0.0
      %1630 = vst [vmem:[#allocation3 + $0x48] sm:$0xff] 0.0
      %1631 = vst [vmem:[#allocation3 + $0x50] sm:$0xff] 0.0
      %1632 = vst [vmem:[#allocation3 + $0x58] sm:$0x3] 0.0
      %1633 = vst [vmem:[#allocation3 + $0x60] sm:$0xff] 0.0
      %1634 = vst [vmem:[#allocation3 + $0x68] sm:$0xff] 0.0
      %1635 = vst [vmem:[#allocation3 + $0x70] sm:$0x3] 0.0
      %1636 = vst [vmem:[#allocation3 + $0x78] sm:$0xff] 0.0
      %1637 = vst [vmem:[#allocation3 + $0x80] sm:$0xff] 0.0
      %1638 = vst [vmem:[#allocation3 + $0x88] sm:$0x3] 0.0
      %1639 = vst [vmem:[#allocation3 + $0x90] sm:$0xff] 0.0
      %1640 = vst [vmem:[#allocation3 + $0x98] sm:$0xff] 0.0
      %1641 = vst [vmem:[#allocation3 + $0xa0] sm:$0x3] 0.0
      %1642 = vst [vmem:[#allocation3 + $0xa8] sm:$0xff] 0.0
      %1643 = vst [vmem:[#allocation3 + $0xb0] sm:$0xff] 0.0
      %1644 = vst [vmem:[#allocation3 + $0xb8] sm:$0x3] 0.0
      %1645 = vst [vmem:[#allocation3 + $0xc0] sm:$0xff] 0.0
      %1646 = vst [vmem:[#allocation3 + $0xc8] sm:$0xff] 0.0
      %1647 = vst [vmem:[#allocation3 + $0xd0] sm:$0x3] 0.0
      %1648 = vst [vmem:[#allocation3 + $0xd8] sm:$0xff] 0.0
      %1649 = vst [vmem:[#allocation3 + $0xe0] sm:$0xff] 0.0
      %1650 = vst [vmem:[#allocation3 + $0xe8] sm:$0x3] 0.0
      %1651 = vst [vmem:[#allocation3 + $0x1] sm:$0xff] %v1601
      %1652 = vst [vmem:[#allocation3 + $0x9] sm:$0xff] %v1602
      %1653 = vst [vmem:[#allocation3 + $0x19] sm:$0xff] %v1603
      %1654 = vst [vmem:[#allocation3 + $0x21] sm:$0xff] %v1604
      %1655 = vst [vmem:[#allocation3 + $0x31] sm:$0xff] %v1605
      %1656 = vst [vmem:[#allocation3 + $0x39] sm:$0xff] %v1606
      %1657 = vst [vmem:[#allocation3 + $0x49] sm:$0xff] %v1607
      %1658 = vst [vmem:[#allocation3 + $0x51] sm:$0xff] %v1608
      %1659 = vst [vmem:[#allocation3 + $0x61] sm:$0xff] %v1609
      %1660 = vst [vmem:[#allocation3 + $0x69] sm:$0xff] %v1610
      %1661 = vst [vmem:[#allocation3 + $0x79] sm:$0xff] %v1611
      %1662 = vst [vmem:[#allocation3 + $0x81] sm:$0xff] %v1612
      %1663 = vst [vmem:[#allocation3 + $0x91] sm:$0xff] %v1613
      %1664 = vst [vmem:[#allocation3 + $0x99] sm:$0xff] %v1614
      %1665 = vst [vmem:[#allocation3 + $0xa9] sm:$0xff] %v1615
      %1666 = vst [vmem:[#allocation3 + $0xb1] sm:$0xff] %v1616
      %1667 = vst [vmem:[#allocation3 + $0xc1] sm:$0xff] %v1617
      %1668 = vst [vmem:[#allocation3 + $0xc9] sm:$0xff] %v1618
      %1669 = vst [vmem:[#allocation3 + $0xd9] sm:$0xff] %v1619
      %1670 = vst [vmem:[#allocation3 + $0xe1] sm:$0xff] %v1620
      // Predicated region
      $region45: #{conv2layer_forward.1} parent=39 // pred_check
        %p1671 = pneg %p250
      $region46: #{conv2layer_forward.1} parent=39 // pred_check_branch
        %1673 = sbr.rel (%p1671) target = $region48
      $region47: #{conv2layer_forward.1} parent=39 // pred_region
        %1674 = vst [vmem:[#allocation3] sm:$0xff] 0.0
        %1675 = vst [vmem:[#allocation3 + $0x8] sm:$0xff] 0.0
        %1676 = vst [vmem:[#allocation3 + $0x10] sm:$0x3] 0.0
      $region48: #{conv2layer_forward.1} parent=39 // pred_fallthru
        _
      %p1677 = scmp.eq.s32.totalorder %s21, 1
      // Predicated region
      $region49: #{conv2layer_forward.1} parent=39 // pred_check
        %p1678 = pneg %p1677
      $region50: #{conv2layer_forward.1} parent=39 // pred_check_branch
        %1680 = sbr.rel (%p1678) target = $region52
      $region51: #{conv2layer_forward.1} parent=39 // pred_region
        %s1681 = scalar_lea.vmem [#allocation3], 216
        %1682 = vst [vmem:[%s1681] sm:$0xff] 0.0
        %1683 = vst [vmem:[%s1681 + $0x8] sm:$0xff] 0.0
        %1684 = vst [vmem:[%s1681 + $0x10] sm:$0x3] 0.0
      $region52: #{conv2layer_forward.1} parent=39 // pred_fallthru
        _
      %v1685 = vld [vmem:[#allocation3] sm:$0xff]
      %v1686 = vld [vmem:[#allocation3 + $0x8] sm:$0xff]
      %v1687 = vld [vmem:[#allocation3 + $0x10] sm:$0x3]
      %v1688 = vld [vmem:[#allocation3 + $0x18] sm:$0xff]
      %v1689 = vld [vmem:[#allocation3 + $0x20] sm:$0xff]
      %v1690 = vld [vmem:[#allocation3 + $0x28] sm:$0x3]
      %v1691 = vld [vmem:[#allocation3 + $0x30] sm:$0xff]
      %v1692 = vld [vmem:[#allocation3 + $0x38] sm:$0xff]
      %v1693 = vld [vmem:[#allocation3 + $0x40] sm:$0x3]
      %v1694 = vld [vmem:[#allocation3 + $0x48] sm:$0xff]
      %v1695 = vld [vmem:[#allocation3 + $0x50] sm:$0xff]
      %v1696 = vld [vmem:[#allocation3 + $0x58] sm:$0x3]
      %v1697 = vld [vmem:[#allocation3 + $0x60] sm:$0xff]
      %v1698 = vld [vmem:[#allocation3 + $0x68] sm:$0xff]
      %v1699 = vld [vmem:[#allocation3 + $0x70] sm:$0x3]
      %v1700 = vld [vmem:[#allocation3 + $0x78] sm:$0xff]
      %v1701 = vld [vmem:[#allocation3 + $0x80] sm:$0xff]
      %v1702 = vld [vmem:[#allocation3 + $0x88] sm:$0x3]
      %v1703 = vld [vmem:[#allocation3 + $0x90] sm:$0xff]
      %v1704 = vld [vmem:[#allocation3 + $0x98] sm:$0xff]
      %v1705 = vld [vmem:[#allocation3 + $0xa0] sm:$0x3]
      %v1706 = vld [vmem:[#allocation3 + $0xa8] sm:$0xff]
      %v1707 = vld [vmem:[#allocation3 + $0xb0] sm:$0xff]
      %v1708 = vld [vmem:[#allocation3 + $0xb8] sm:$0x3]
      %v1709 = vld [vmem:[#allocation3 + $0xc0] sm:$0xff]
      %v1710 = vld [vmem:[#allocation3 + $0xc8] sm:$0xff]
      %v1711 = vld [vmem:[#allocation3 + $0xd0] sm:$0x3]
      %v1712 = vld [vmem:[#allocation3 + $0xd8] sm:$0xff]
      %v1713 = vld [vmem:[#allocation3 + $0xe0] sm:$0xff]
      %v1714 = vld [vmem:[#allocation3 + $0xe8] sm:$0x3]
      %v1739 = vrot.slane %v1685, 1
      %v1740 = vrot.slane %v1686, 1
      %v1741 = vsel %vm449, %v1739, %v1740
      %v1742 = vrot.slane %v1687, 1
      %v1743 = vsel %vm449, %v1740, %v1742
      %v1744 = vrot.slane %v1688, 1
      %v1745 = vrot.slane %v1689, 1
      %v1746 = vsel %vm449, %v1744, %v1745
      %v1747 = vrot.slane %v1690, 1
      %v1748 = vsel %vm449, %v1745, %v1747
      %v1749 = vrot.slane %v1691, 1
      %v1750 = vrot.slane %v1692, 1
      %v1751 = vsel %vm449, %v1749, %v1750
      %v1752 = vrot.slane %v1693, 1
      %v1753 = vsel %vm449, %v1750, %v1752
      %v1754 = vrot.slane %v1694, 1
      %v1755 = vrot.slane %v1695, 1
      %v1756 = vsel %vm449, %v1754, %v1755
      %v1757 = vrot.slane %v1696, 1
      %v1758 = vsel %vm449, %v1755, %v1757
      %v1759 = vrot.slane %v1697, 1
      %v1760 = vrot.slane %v1698, 1
      %v1761 = vsel %vm449, %v1759, %v1760
      %v1762 = vrot.slane %v1699, 1
      %v1763 = vsel %vm449, %v1760, %v1762
      %v1764 = vrot.slane %v1700, 1
      %v1765 = vrot.slane %v1701, 1
      %v1766 = vsel %vm449, %v1764, %v1765
      %v1767 = vrot.slane %v1702, 1
      %v1768 = vsel %vm449, %v1765, %v1767
      %v1769 = vrot.slane %v1703, 1
      %v1770 = vrot.slane %v1704, 1
      %v1771 = vsel %vm449, %v1769, %v1770
      %v1772 = vrot.slane %v1705, 1
      %v1773 = vsel %vm449, %v1770, %v1772
      %v1774 = vrot.slane %v1706, 1
      %v1775 = vrot.slane %v1707, 1
      %v1776 = vsel %vm449, %v1774, %v1775
      %v1777 = vrot.slane %v1708, 1
      %v1778 = vsel %vm449, %v1775, %v1777
      %v1795 = vrot.slane %v1685, 2
      %v1796 = vrot.slane %v1686, 2
      %v1797 = vsel %vm520, %v1795, %v1796
      %v1798 = vrot.slane %v1687, 2
      %v1799 = vsel %vm520, %v1796, %v1798
      %v1800 = vrot.slane %v1688, 2
      %v1801 = vrot.slane %v1689, 2
      %v1802 = vsel %vm520, %v1800, %v1801
      %v1803 = vrot.slane %v1690, 2
      %v1804 = vsel %vm520, %v1801, %v1803
      %v1805 = vrot.slane %v1691, 2
      %v1806 = vrot.slane %v1692, 2
      %v1807 = vsel %vm520, %v1805, %v1806
      %v1808 = vrot.slane %v1693, 2
      %v1809 = vsel %vm520, %v1806, %v1808
      %v1810 = vrot.slane %v1694, 2
      %v1811 = vrot.slane %v1695, 2
      %v1812 = vsel %vm520, %v1810, %v1811
      %v1813 = vrot.slane %v1696, 2
      %v1814 = vsel %vm520, %v1811, %v1813
      %v1815 = vrot.slane %v1697, 2
      %v1816 = vrot.slane %v1698, 2
      %v1817 = vsel %vm520, %v1815, %v1816
      %v1818 = vrot.slane %v1699, 2
      %v1819 = vsel %vm520, %v1816, %v1818
      %v1820 = vrot.slane %v1700, 2
      %v1821 = vrot.slane %v1701, 2
      %v1822 = vsel %vm520, %v1820, %v1821
      %v1823 = vrot.slane %v1702, 2
      %v1824 = vsel %vm520, %v1821, %v1823
      %v1825 = vrot.slane %v1703, 2
      %v1826 = vrot.slane %v1704, 2
      %v1827 = vsel %vm520, %v1825, %v1826
      %v1828 = vrot.slane %v1705, 2
      %v1829 = vsel %vm520, %v1826, %v1828
      %v1830 = vrot.slane %v1706, 2
      %v1831 = vrot.slane %v1707, 2
      %v1832 = vsel %vm520, %v1830, %v1831
      %v1833 = vrot.slane %v1708, 2
      %v1834 = vsel %vm520, %v1831, %v1833
      %v1854 = vrot.slane %v1709, 1
      %v1855 = vrot.slane %v1710, 1
      %v1856 = vsel %vm449, %v1854, %v1855
      %v1857 = vrot.slane %v1711, 1
      %v1858 = vsel %vm449, %v1855, %v1857
      %v1861 = vrot.slane %v1709, 2
      %v1862 = vrot.slane %v1710, 2
      %v1863 = vsel %vm520, %v1861, %v1862
      %v1864 = vrot.slane %v1711, 2
      %v1865 = vsel %vm520, %v1862, %v1864
      %v1871 = vrot.slane %v1712, 1
      %v1872 = vrot.slane %v1713, 1
      %v1873 = vsel %vm449, %v1871, %v1872
      %v1874 = vrot.slane %v1714, 1
      %v1875 = vsel %vm449, %v1872, %v1874
      %v1878 = vrot.slane %v1712, 2
      %v1879 = vrot.slane %v1713, 2
      %v1880 = vsel %vm520, %v1878, %v1879
      %v1881 = vrot.slane %v1714, 2
      %v1882 = vsel %vm520, %v1879, %v1881
      %v1885 = vld [vmem:[%s3] sm:$0xff]
      %v1886 = vld [vmem:[%s3 + $0x8] sm:$0xff]
      %v1887 = vld [vmem:[%s3 + $0x10] sm:$0xff]
      %v1888 = vld [vmem:[%s3 + $0x18] sm:$0xff]
      %v1889 = vld [vmem:[%s3 + $0x20] sm:$0xff]
      %v1890 = vld [vmem:[%s3 + $0x28] sm:$0xff]
      %v1891 = vld [vmem:[%s3 + $0x30] sm:$0xff]
      %v1892 = vld [vmem:[%s3 + $0x38] sm:$0xff]
      %v1893 = vld [vmem:[%s3 + $0x40] sm:$0xff]
      %v1894 = vld [vmem:[%s3 + $0x48] sm:$0xff]
      %v1895 = vld [vmem:[%s3 + $0x50] sm:$0xff]
      %v1896 = vld [vmem:[%s3 + $0x58] sm:$0xff]
      %v1897 = vld [vmem:[%s3 + $0x60] sm:$0xff]
      %v1898 = vld [vmem:[%s3 + $0x68] sm:$0xff]
      %v1899 = vld [vmem:[%s3 + $0x70] sm:$0xff]
      %v1900 = vld [vmem:[%s3 + $0x78] sm:$0xff]
      %v1901 = vld [vmem:[%s3 + $0x80] sm:$0xff]
      %v1902 = vld [vmem:[%s3 + $0x88] sm:$0xff]
      %v1903 = vld [vmem:[%s3 + $0x90] sm:$0xff]
      %v1904 = vld [vmem:[%s3 + $0x98] sm:$0xff]
      %v1905 = vld [vmem:[%s3 + $0xa0] sm:$0xff]
      %v1906 = vld [vmem:[%s3 + $0xa8] sm:$0xff]
      %v1907 = vld [vmem:[%s3 + $0xb0] sm:$0xff]
      %v1908 = vld [vmem:[%s3 + $0xb8] sm:$0xff]
      %v1909 = vld [vmem:[%s3 + $0xc0] sm:$0xff]
      %v1910 = vld [vmem:[%s3 + $0xc8] sm:$0xff]
      %v1911 = vld [vmem:[%s3 + $0xd0] sm:$0xff]
      %v1912 = vld [vmem:[%s3 + $0xd8] sm:$0xff]
      %v1913 = vld [vmem:[%s3 + $0xe0] sm:$0xff]
      %v1914 = vld [vmem:[%s3 + $0xe8] sm:$0xff]
      %v1915 = vld [vmem:[%s3 + $0xf0] sm:$0xff]
      %v1916 = vld [vmem:[%s3 + $0xf8] sm:$0xff]
      %v1917 = vld [vmem:[%s3 + $0x100] sm:$0xff]
      %v1918 = vld [vmem:[%s3 + $0x108] sm:$0xff]
      %v1919 = vld [vmem:[%s3 + $0x110] sm:$0xff]
      %v1920 = vld [vmem:[%s3 + $0x118] sm:$0xff]
      %v1921 = vld [vmem:[%s3 + $0x120] sm:$0xff]
      %v1922 = vld [vmem:[%s3 + $0x128] sm:$0xff]
      %v1923 = vld [vmem:[%s3 + $0x130] sm:$0xff]
      %v1924 = vld [vmem:[%s3 + $0x138] sm:$0xff]
      %v1925 = vld [vmem:[%s3 + $0x140] sm:$0xff]
      %v1926 = vld [vmem:[%s3 + $0x148] sm:$0xff]
      %v1927 = vld [vmem:[%s3 + $0x150] sm:$0xff]
      %v1928 = vld [vmem:[%s3 + $0x158] sm:$0xff]
      %v1929 = vld [vmem:[%s3 + $0x160] sm:$0xff]
      %v1930 = vld [vmem:[%s3 + $0x168] sm:$0xff]
      %v1931 = vld [vmem:[%s3 + $0x170] sm:$0xff]
      %v1932 = vld [vmem:[%s3 + $0x178] sm:$0xff]
      %v1933 = vld [vmem:[%s3 + $0x180] sm:$0xff]
      %v1934 = vld [vmem:[%s3 + $0x188] sm:$0xff]
      %v1935 = vld [vmem:[%s3 + $0x190] sm:$0xff]
      %v1936 = vld [vmem:[%s3 + $0x198] sm:$0xff]
      %v1937 = vld [vmem:[%s3 + $0x1a0] sm:$0xff]
      %v1938 = vld [vmem:[%s3 + $0x1a8] sm:$0xff]
      %v1939 = vld [vmem:[%s3 + $0x1b0] sm:$0xff]
      %v1940 = vld [vmem:[%s3 + $0x1b8] sm:$0xff]
      %v1941 = vld [vmem:[%s3 + $0x1c0] sm:$0xff]
      %v1942 = vld [vmem:[%s3 + $0x1c8] sm:$0xff]
      %v1943 = vld [vmem:[%s3 + $0x1d0] sm:$0xff]
      %v1944 = vld [vmem:[%s3 + $0x1d8] sm:$0xff]
      %v1945 = vld [vmem:[%s3 + $0x1e0] sm:$0xff]
      %v1946 = vld [vmem:[%s3 + $0x1e8] sm:$0xff]
      %v1947 = vld [vmem:[%s3 + $0x1f0] sm:$0xff]
      %v1948 = vld [vmem:[%s3 + $0x1f8] sm:$0xff]
      %v1949 = vld [vmem:[%s3 + $0x200] sm:$0xff]
      %v1950 = vld [vmem:[%s3 + $0x208] sm:$0xff]
      %v1951 = vld [vmem:[%s3 + $0x210] sm:$0xff]
      %v1952 = vld [vmem:[%s3 + $0x218] sm:$0xff]
      %v1953 = vld [vmem:[%s3 + $0x220] sm:$0xff]
      %v1954 = vld [vmem:[%s3 + $0x228] sm:$0xff]
      %v1955 = vld [vmem:[%s3 + $0x230] sm:$0xff]
      %v1956 = vld [vmem:[%s3 + $0x238] sm:$0xff]
      %v1957 = vld [vmem:[%s3 + $0x240] sm:$0xff]
      %v1958 = vld [vmem:[%s3 + $0x248] sm:$0xff]
      %v1959 = vld [vmem:[%s3 + $0x250] sm:$0xff]
      %v1960 = vld [vmem:[%s3 + $0x258] sm:$0xff]
      %v1961 = vld [vmem:[%s3 + $0x260] sm:$0xff]
      %v1962 = vld [vmem:[%s3 + $0x268] sm:$0xff]
      %v1963 = vld [vmem:[%s3 + $0x270] sm:$0xff]
      %v1964 = vld [vmem:[%s3 + $0x278] sm:$0xff]
      %v1965 = vld [vmem:[%s3 + $0x280] sm:$0xff]
      %v1966 = vld [vmem:[%s3 + $0x288] sm:$0xff]
      %v1967 = vld [vmem:[%s3 + $0x290] sm:$0xff]
      %v1968 = vld [vmem:[%s3 + $0x298] sm:$0xff]
      %v1969 = vld [vmem:[%s3 + $0x2a0] sm:$0xff]
      %v1970 = vld [vmem:[%s3 + $0x2a8] sm:$0xff]
      %v1971 = vld [vmem:[%s3 + $0x2b0] sm:$0xff]
      %v1972 = vld [vmem:[%s3 + $0x2b8] sm:$0xff]
      %v1973 = vld [vmem:[%s3 + $0x2c0] sm:$0xff]
      %v1974 = vld [vmem:[%s3 + $0x2c8] sm:$0xff]
      %v1975 = vld [vmem:[%s3 + $0x2d0] sm:$0xff]
      %v1976 = vld [vmem:[%s3 + $0x2d8] sm:$0xff]
      %v1977 = vld [vmem:[%s3 + $0x2e0] sm:$0xff]
      %v1978 = vld [vmem:[%s3 + $0x2e8] sm:$0xff]
      %v1979 = vld [vmem:[%s3 + $0x2f0] sm:$0xff]
      %v1980 = vld [vmem:[%s3 + $0x2f8] sm:$0xff]
      %v1981 = vld [vmem:[%s3 + $0x300] sm:$0xff]
      %v1982 = vld [vmem:[%s3 + $0x308] sm:$0xff]
      %v1983 = vld [vmem:[%s3 + $0x310] sm:$0xff]
      %v1984 = vld [vmem:[%s3 + $0x318] sm:$0xff]
      %v1985 = vld [vmem:[%s3 + $0x320] sm:$0xff]
      %v1986 = vld [vmem:[%s3 + $0x328] sm:$0xff]
      %v1987 = vld [vmem:[%s3 + $0x330] sm:$0xff]
      %v1988 = vld [vmem:[%s3 + $0x338] sm:$0xff]
      %v1989 = vld [vmem:[%s3 + $0x340] sm:$0xff]
      %v1990 = vld [vmem:[%s3 + $0x348] sm:$0xff]
      %v1991 = vld [vmem:[%s3 + $0x350] sm:$0xff]
      %v1992 = vld [vmem:[%s3 + $0x358] sm:$0xff]
      %v1993 = vld [vmem:[%s3 + $0x360] sm:$0xff]
      %v1994 = vld [vmem:[%s3 + $0x368] sm:$0xff]
      %v1995 = vld [vmem:[%s3 + $0x370] sm:$0xff]
      %v1996 = vld [vmem:[%s3 + $0x378] sm:$0xff]
      %v1997 = vld [vmem:[%s3 + $0x380] sm:$0xff]
      %v1998 = vld [vmem:[%s3 + $0x388] sm:$0xff]
      %v1999 = vld [vmem:[%s3 + $0x390] sm:$0xff]
      %v2000 = vld [vmem:[%s3 + $0x398] sm:$0xff]
      %v2001 = vld [vmem:[%s3 + $0x3a0] sm:$0xff]
      %v2002 = vld [vmem:[%s3 + $0x3a8] sm:$0xff]
      %v2003 = vld [vmem:[%s3 + $0x3b0] sm:$0xff]
      %v2004 = vld [vmem:[%s3 + $0x3b8] sm:$0xff]
      %v2005 = vld [vmem:[%s3 + $0x3c0] sm:$0xff]
      %v2006 = vld [vmem:[%s3 + $0x3c8] sm:$0xff]
      %v2007 = vld [vmem:[%s3 + $0x3d0] sm:$0xff]
      %v2008 = vld [vmem:[%s3 + $0x3d8] sm:$0xff]
      %v2009 = vld [vmem:[%s3 + $0x3e0] sm:$0xff]
      %v2010 = vld [vmem:[%s3 + $0x3e8] sm:$0xff]
      %v2011 = vld [vmem:[%s3 + $0x3f0] sm:$0xff]
      %v2012 = vld [vmem:[%s3 + $0x3f8] sm:$0xff]
      %v2013 = vld [vmem:[%s3 + $0x400] sm:$0xff]
      %v2014 = vld [vmem:[%s3 + $0x408] sm:$0xff]
      %v2015 = vld [vmem:[%s3 + $0x410] sm:$0xff]
      %v2016 = vld [vmem:[%s3 + $0x418] sm:$0xff]
      %v2017 = vld [vmem:[%s3 + $0x420] sm:$0xff]
      %v2018 = vld [vmem:[%s3 + $0x428] sm:$0xff]
      %v2019 = vld [vmem:[%s3 + $0x430] sm:$0xff]
      %v2020 = vld [vmem:[%s3 + $0x438] sm:$0xff]
      %v2021 = vld [vmem:[%s3 + $0x440] sm:$0xff]
      %v2022 = vld [vmem:[%s3 + $0x448] sm:$0xff]
      %v2023 = vld [vmem:[%s3 + $0x450] sm:$0xff]
      %v2024 = vld [vmem:[%s3 + $0x458] sm:$0xff]
      %v2025 = vld [vmem:[%s3 + $0x460] sm:$0xff]
      %v2026 = vld [vmem:[%s3 + $0x468] sm:$0xff]
      %v2027 = vld [vmem:[%s3 + $0x470] sm:$0xff]
      %v2028 = vld [vmem:[%s3 + $0x478] sm:$0xff]
      %v2029 = vld [vmem:[%s4] sm:$0x1]
      %v2031 = vlaneseq
      %v2032 = vshrl.u32 %v2031, 7
      %v2033 = vsub.s32 0, %v2032
      %v2034 = vrot.slane %v2029, %v2033
      %2036 = vmatprep.subr.mxu0 0.0
      %2037 = vmatpush1.msra.mxu0 %v1885
      %2038 = vmatprep.subr.mxu0 0.0
      %2039 = vmatpush1.msra.mxu0 %v1886
      %2040 = vmatprep.subr.mxu0 0.0
      %2041 = vmatpush1.msra.mxu0 %v1887
      %2042 = vmatprep.subr.mxu0 0.0
      %2043 = vmatpush1.msra.mxu0 %v1888
      %2044 = vmatprep.subr.mxu0 0.0
      %2045 = vmatpush1.msra.mxu0 %v1889
      %2046 = vmatprep.subr.mxu0 0.0
      %2047 = vmatpush1.msra.mxu0 %v1890
      %2048 = vmatprep.subr.mxu0 0.0
      %2049 = vmatpush1.msra.mxu0 %v1891
      %2050 = vmatprep.subr.mxu0 0.0
      %2051 = vmatpush1.msra.mxu0 %v1892
      %2052 = vmatprep.subr.mxu0 0.0
      %2053 = vmatpush1.msra.mxu0 %v1893
      %2054 = vmatprep.subr.mxu0 0.0
      %2055 = vmatpush1.msra.mxu0 %v1894
      %2056 = vmatprep.subr.mxu0 0.0
      %2057 = vmatpush1.msra.mxu0 %v1895
      %2058 = vmatprep.subr.mxu0 0.0
      %2059 = vmatpush1.msra.mxu0 %v1896
      %2060 = vmatprep.subr.mxu0 0.0
      %2061 = vmatpush1.msra.mxu0 %v1897
      %2062 = vmatprep.subr.mxu0 0.0
      %2063 = vmatpush1.msra.mxu0 %v1898
      %2064 = vmatprep.subr.mxu0 0.0
      %2065 = vmatpush1.msra.mxu0 %v1899
      %2066 = vmatprep.subr.mxu0 0.0
      %2067 = vmatpush1.msra.mxu0 %v1900
      %2068 = vmatprep.subr.mxu0 0.0
      %2069 = vmatpush1.msra.mxu0 %v1901
      %2070 = vmatprep.subr.mxu0 0.0
      %2071 = vmatpush1.msra.mxu0 %v1902
      %2072 = vmatprep.subr.mxu0 0.0
      %2073 = vmatpush1.msra.mxu0 %v1903
      %2074 = vmatprep.subr.mxu0 0.0
      %2075 = vmatpush1.msra.mxu0 %v1904
      %2076 = vmatprep.subr.mxu0 0.0
      %2077 = vmatpush1.msra.mxu0 %v1905
      %2078 = vmatprep.subr.mxu0 0.0
      %2079 = vmatpush1.msra.mxu0 %v1906
      %2080 = vmatprep.subr.mxu0 0.0
      %2081 = vmatpush1.msra.mxu0 %v1907
      %2082 = vmatprep.subr.mxu0 0.0
      %2083 = vmatpush1.msra.mxu0 %v1908
      %2084 = vmatprep.subr.mxu0 0.0
      %2085 = vmatpush1.msra.mxu0 %v1909
      %2086 = vmatprep.subr.mxu0 0.0
      %2087 = vmatpush1.msra.mxu0 %v1910
      %2088 = vmatprep.subr.mxu0 0.0
      %2089 = vmatpush1.msra.mxu0 %v1911
      %2090 = vmatprep.subr.mxu0 0.0
      %2091 = vmatpush1.msra.mxu0 %v1912
      %2092 = vmatprep.subr.mxu0 0.0
      %2093 = vmatpush1.msra.mxu0 %v1913
      %2094 = vmatprep.subr.mxu0 0.0
      %2095 = vmatpush1.msra.mxu0 %v1914
      %2096 = vmatprep.subr.mxu0 0.0
      %2097 = vmatpush1.msra.mxu0 %v1915
      %2098 = vmatprep.subr.mxu0 0.0
      %2099 = vmatpush1.msra.mxu0 %v1916
      %2100 = vmatprep.mubr.f32.mxu0 %v1741
      %2101 = vmatmul.mubr.f32.gmra.mrb[0].mxu0 %v1685
      %v2102 = vpop.f32.mrb[0].mxu0
      %v2103 = vadd.f32 %v2034, %v2102
      %v2104 = vpop.f32.mrb[0].mxu0
      %2105 = vmatprep.mubr.f32.mxu0 %v1743
      %2106 = vmatmul.mubr.f32.gmra.mrb[0].mxu0 %v1686
      %v2107 = vpop.f32.mrb[0].mxu0
      %v2108 = vadd.f32 %v2034, %v2107
      %v2109 = vpop.f32.mrb[0].mxu0
      %2110 = vmatprep.mubr.f32.mxu0 %v1746
      %2111 = vmatmul.mubr.f32.gmra.mrb[0].mxu0 %v1688
      %v2112 = vpop.f32.mrb[0].mxu0
      %v2113 = vadd.f32 %v2034, %v2112
      %v2114 = vpop.f32.mrb[0].mxu0
      %2115 = vmatprep.mubr.f32.mxu0 %v1748
      %2116 = vmatmul.mubr.f32.gmra.mrb[0].mxu0 %v1689
      %v2117 = vpop.f32.mrb[0].mxu0
      %v2118 = vadd.f32 %v2034, %v2117
      %v2119 = vpop.f32.mrb[0].mxu0
      %2120 = vmatprep.mubr.f32.mxu0 %v1751
      %2121 = vmatmul.mubr.f32.gmra.mrb[0].mxu0 %v1691
      %v2122 = vpop.f32.mrb[0].mxu0
      %v2123 = vadd.f32 %v2034, %v2122
      %v2124 = vpop.f32.mrb[0].mxu0
      %2125 = vmatprep.mubr.f32.mxu0 %v1753
      %2126 = vmatmul.mubr.f32.gmra.mrb[0].mxu0 %v1692
      %v2127 = vpop.f32.mrb[0].mxu0
      %v2128 = vadd.f32 %v2034, %v2127
      %v2129 = vpop.f32.mrb[0].mxu0
      %2130 = vmatprep.mubr.f32.mxu0 %v1756
      %2131 = vmatmul.mubr.f32.gmra.mrb[0].mxu0 %v1694
      %v2132 = vpop.f32.mrb[0].mxu0
      %v2133 = vadd.f32 %v2034, %v2132
      %v2134 = vpop.f32.mrb[0].mxu0
      %2135 = vmatprep.mubr.f32.mxu0 %v1758
      %2136 = vmatmul.mubr.f32.gmra.mrb[0].mxu0 %v1695
      %v2137 = vpop.f32.mrb[0].mxu0
      %v2138 = vadd.f32 %v2034, %v2137
      %v2139 = vpop.f32.mrb[0].mxu0
      %2140 = vmatprep.mubr.f32.mxu0 %v1761
      %2141 = vmatmul.mubr.f32.gmra.mrb[0].mxu0 %v1697
      %v2142 = vpop.f32.mrb[0].mxu0
      %v2143 = vadd.f32 %v2034, %v2142
      %v2144 = vpop.f32.mrb[0].mxu0
      %2145 = vmatprep.mubr.f32.mxu0 %v1763
      %2146 = vmatmul.mubr.f32.gmra.mrb[0].mxu0 %v1698
      %v2147 = vpop.f32.mrb[0].mxu0
      %v2148 = vadd.f32 %v2034, %v2147
      %v2149 = vpop.f32.mrb[0].mxu0
      %2150 = vmatprep.mubr.f32.mxu0 %v1766
      %2151 = vmatmul.mubr.f32.gmra.mrb[0].mxu0 %v1700
      %v2152 = vpop.f32.mrb[0].mxu0
      %v2153 = vadd.f32 %v2034, %v2152
      %v2154 = vpop.f32.mrb[0].mxu0
      %2155 = vmatprep.mubr.f32.mxu0 %v1768
      %2156 = vmatmul.mubr.f32.gmra.mrb[0].mxu0 %v1701
      %v2157 = vpop.f32.mrb[0].mxu0
      %v2158 = vadd.f32 %v2034, %v2157
      %v2159 = vpop.f32.mrb[0].mxu0
      %2160 = vmatprep.mubr.f32.mxu0 %v1771
      %2161 = vmatmul.mubr.f32.gmra.mrb[0].mxu0 %v1703
      %v2162 = vpop.f32.mrb[0].mxu0
      %v2163 = vadd.f32 %v2034, %v2162
      %v2164 = vpop.f32.mrb[0].mxu0
      %2165 = vmatprep.mubr.f32.mxu0 %v1773
      %2166 = vmatmul.mubr.f32.gmra.mrb[0].mxu0 %v1704
      %v2167 = vpop.f32.mrb[0].mxu0
      %v2168 = vadd.f32 %v2034, %v2167
      %v2169 = vpop.f32.mrb[0].mxu0
      %2170 = vmatprep.mubr.f32.mxu0 %v1776
      %2171 = vmatmul.mubr.f32.gmra.mrb[0].mxu0 %v1706
      %v2172 = vpop.f32.mrb[0].mxu0
      %v2173 = vadd.f32 %v2034, %v2172
      %v2174 = vpop.f32.mrb[0].mxu0
      %2175 = vmatprep.mubr.f32.mxu0 %v1778
      %2176 = vmatmul.mubr.f32.gmra.mrb[0].mxu0 %v1707
      %v2177 = vpop.f32.mrb[0].mxu0
      %v2178 = vadd.f32 %v2034, %v2177
      %v2179 = vpop.f32.mrb[0].mxu0
      %2180 = vdwg.mxu0
      %2181 = vmatprep.subr.mxu0 0.0
      %2182 = vmatpush1.msra.mxu0 %v1917
      %2183 = vmatprep.subr.mxu0 0.0
      %2184 = vmatpush1.msra.mxu0 %v1918
      %2185 = vmatprep.subr.mxu0 0.0
      %2186 = vmatpush1.msra.mxu0 %v1919
      %2187 = vmatprep.subr.mxu0 0.0
      %2188 = vmatpush1.msra.mxu0 %v1920
      %2189 = vmatprep.subr.mxu0 0.0
      %2190 = vmatpush1.msra.mxu0 %v1921
      %2191 = vmatprep.subr.mxu0 0.0
      %2192 = vmatpush1.msra.mxu0 %v1922
      %2193 = vmatprep.subr.mxu0 0.0
      %2194 = vmatpush1.msra.mxu0 %v1923
      %2195 = vmatprep.subr.mxu0 0.0
      %2196 = vmatpush1.msra.mxu0 %v1924
      %2197 = vmatprep.subr.mxu0 0.0
      %2198 = vmatpush1.msra.mxu0 %v1925
      %2199 = vmatprep.subr.mxu0 0.0
      %2200 = vmatpush1.msra.mxu0 %v1926
      %2201 = vmatprep.subr.mxu0 0.0
      %2202 = vmatpush1.msra.mxu0 %v1927
      %2203 = vmatprep.subr.mxu0 0.0
      %2204 = vmatpush1.msra.mxu0 %v1928
      %2205 = vmatprep.subr.mxu0 0.0
      %2206 = vmatpush1.msra.mxu0 %v1929
      %2207 = vmatprep.subr.mxu0 0.0
      %2208 = vmatpush1.msra.mxu0 %v1930
      %2209 = vmatprep.subr.mxu0 0.0
      %2210 = vmatpush1.msra.mxu0 %v1931
      %2211 = vmatprep.subr.mxu0 0.0
      %2212 = vmatpush1.msra.mxu0 %v1932
      %2213 = vmatprep.subr.mxu0 0.0
      %2214 = vmatpush1.msra.mxu0 %v1933
      %2215 = vmatprep.subr.mxu0 0.0
      %2216 = vmatpush1.msra.mxu0 %v1934
      %2217 = vmatprep.subr.mxu0 0.0
      %2218 = vmatpush1.msra.mxu0 %v1935
      %2219 = vmatprep.subr.mxu0 0.0
      %2220 = vmatpush1.msra.mxu0 %v1936
      %2221 = vmatprep.subr.mxu0 0.0
      %2222 = vmatpush1.msra.mxu0 %v1937
      %2223 = vmatprep.subr.mxu0 0.0
      %2224 = vmatpush1.msra.mxu0 %v1938
      %2225 = vmatprep.subr.mxu0 0.0
      %2226 = vmatpush1.msra.mxu0 %v1939
      %2227 = vmatprep.subr.mxu0 0.0
      %2228 = vmatpush1.msra.mxu0 %v1940
      %2229 = vmatprep.subr.mxu0 0.0
      %2230 = vmatpush1.msra.mxu0 %v1941
      %2231 = vmatprep.subr.mxu0 0.0
      %2232 = vmatpush1.msra.mxu0 %v1942
      %2233 = vmatprep.subr.mxu0 0.0
      %2234 = vmatpush1.msra.mxu0 %v1943
      %2235 = vmatprep.subr.mxu0 0.0
      %2236 = vmatpush1.msra.mxu0 %v1944
      %2237 = vmatprep.subr.mxu0 0.0
      %2238 = vmatpush1.msra.mxu0 %v1945
      %2239 = vmatprep.subr.mxu0 0.0
      %2240 = vmatpush1.msra.mxu0 %v1946
      %2241 = vmatprep.subr.mxu0 0.0
      %2242 = vmatpush1.msra.mxu0 %v1947
      %2243 = vmatprep.subr.mxu0 0.0
      %2244 = vmatpush1.msra.mxu0 %v1948
      %2245 = vmatprep.mubr.f32.mxu0 %v1688
      %2246 = vmatmul.mubr.f32.gmra.mrb[0].mxu0 %v1797
      %v2247 = vpop.f32.mrb[0].mxu0
      %v2248 = vadd.f32 %v2103, %v2247
      %v2249 = vpop.f32.mrb[0].mxu0
      %2250 = vmatprep.mubr.f32.mxu0 %v1689
      %2251 = vmatmul.mubr.f32.gmra.mrb[0].mxu0 %v1799
      %v2252 = vpop.f32.mrb[0].mxu0
      %v2253 = vadd.f32 %v2108, %v2252
      %v2254 = vpop.f32.mrb[0].mxu0
      %2255 = vmatprep.mubr.f32.mxu0 %v1691
      %2256 = vmatmul.mubr.f32.gmra.mrb[0].mxu0 %v1802
      %v2257 = vpop.f32.mrb[0].mxu0
      %v2258 = vadd.f32 %v2113, %v2257
      %v2259 = vpop.f32.mrb[0].mxu0
      %2260 = vmatprep.mubr.f32.mxu0 %v1692
      %2261 = vmatmul.mubr.f32.gmra.mrb[0].mxu0 %v1804
      %v2262 = vpop.f32.mrb[0].mxu0
      %v2263 = vadd.f32 %v2118, %v2262
      %v2264 = vpop.f32.mrb[0].mxu0
      %2265 = vmatprep.mubr.f32.mxu0 %v1694
      %2266 = vmatmul.mubr.f32.gmra.mrb[0].mxu0 %v1807
      %v2267 = vpop.f32.mrb[0].mxu0
      %v2268 = vadd.f32 %v2123, %v2267
      %v2269 = vpop.f32.mrb[0].mxu0
      %2270 = vmatprep.mubr.f32.mxu0 %v1695
      %2271 = vmatmul.mubr.f32.gmra.mrb[0].mxu0 %v1809
      %v2272 = vpop.f32.mrb[0].mxu0
      %v2273 = vadd.f32 %v2128, %v2272
      %v2274 = vpop.f32.mrb[0].mxu0
      %2275 = vmatprep.mubr.f32.mxu0 %v1697
      %2276 = vmatmul.mubr.f32.gmra.mrb[0].mxu0 %v1812
      %v2277 = vpop.f32.mrb[0].mxu0
      %v2278 = vadd.f32 %v2133, %v2277
      %v2279 = vpop.f32.mrb[0].mxu0
      %2280 = vmatprep.mubr.f32.mxu0 %v1698
      %2281 = vmatmul.mubr.f32.gmra.mrb[0].mxu0 %v1814
      %v2282 = vpop.f32.mrb[0].mxu0
      %v2283 = vadd.f32 %v2138, %v2282
      %v2284 = vpop.f32.mrb[0].mxu0
      %2285 = vmatprep.mubr.f32.mxu0 %v1700
      %2286 = vmatmul.mubr.f32.gmra.mrb[0].mxu0 %v1817
      %v2287 = vpop.f32.mrb[0].mxu0
      %v2288 = vadd.f32 %v2143, %v2287
      %v2289 = vpop.f32.mrb[0].mxu0
      %2290 = vmatprep.mubr.f32.mxu0 %v1701
      %2291 = vmatmul.mubr.f32.gmra.mrb[0].mxu0 %v1819
      %v2292 = vpop.f32.mrb[0].mxu0
      %v2293 = vadd.f32 %v2148, %v2292
      %v2294 = vpop.f32.mrb[0].mxu0
      %2295 = vmatprep.mubr.f32.mxu0 %v1703
      %2296 = vmatmul.mubr.f32.gmra.mrb[0].mxu0 %v1822
      %v2297 = vpop.f32.mrb[0].mxu0
      %v2298 = vadd.f32 %v2153, %v2297
      %v2299 = vpop.f32.mrb[0].mxu0
      %2300 = vmatprep.mubr.f32.mxu0 %v1704
      %2301 = vmatmul.mubr.f32.gmra.mrb[0].mxu0 %v1824
      %v2302 = vpop.f32.mrb[0].mxu0
      %v2303 = vadd.f32 %v2158, %v2302
      %v2304 = vpop.f32.mrb[0].mxu0
      %2305 = vmatprep.mubr.f32.mxu0 %v1706
      %2306 = vmatmul.mubr.f32.gmra.mrb[0].mxu0 %v1827
      %v2307 = vpop.f32.mrb[0].mxu0
      %v2308 = vadd.f32 %v2163, %v2307
      %v2309 = vpop.f32.mrb[0].mxu0
      %2310 = vmatprep.mubr.f32.mxu0 %v1707
      %2311 = vmatmul.mubr.f32.gmra.mrb[0].mxu0 %v1829
      %v2312 = vpop.f32.mrb[0].mxu0
      %v2313 = vadd.f32 %v2168, %v2312
      %v2314 = vpop.f32.mrb[0].mxu0
      %2315 = vmatprep.mubr.f32.mxu0 %v1709
      %2316 = vmatmul.mubr.f32.gmra.mrb[0].mxu0 %v1832
      %v2317 = vpop.f32.mrb[0].mxu0
      %v2318 = vadd.f32 %v2173, %v2317
      %v2319 = vpop.f32.mrb[0].mxu0
      %2320 = vmatprep.mubr.f32.mxu0 %v1710
      %2321 = vmatmul.mubr.f32.gmra.mrb[0].mxu0 %v1834
      %v2322 = vpop.f32.mrb[0].mxu0
      %v2323 = vadd.f32 %v2178, %v2322
      %v2324 = vpop.f32.mrb[0].mxu0
      %2325 = vdwg.mxu0
      %2326 = vmatprep.subr.mxu0 0.0
      %2327 = vmatpush1.msra.mxu0 %v1949
      %2328 = vmatprep.subr.mxu0 0.0
      %2329 = vmatpush1.msra.mxu0 %v1950
      %2330 = vmatprep.subr.mxu0 0.0
      %2331 = vmatpush1.msra.mxu0 %v1951
      %2332 = vmatprep.subr.mxu0 0.0
      %2333 = vmatpush1.msra.mxu0 %v1952
      %2334 = vmatprep.subr.mxu0 0.0
      %2335 = vmatpush1.msra.mxu0 %v1953
      %2336 = vmatprep.subr.mxu0 0.0
      %2337 = vmatpush1.msra.mxu0 %v1954
      %2338 = vmatprep.subr.mxu0 0.0
      %2339 = vmatpush1.msra.mxu0 %v1955
      %2340 = vmatprep.subr.mxu0 0.0
      %2341 = vmatpush1.msra.mxu0 %v1956
      %2342 = vmatprep.subr.mxu0 0.0
      %2343 = vmatpush1.msra.mxu0 %v1957
      %2344 = vmatprep.subr.mxu0 0.0
      %2345 = vmatpush1.msra.mxu0 %v1958
      %2346 = vmatprep.subr.mxu0 0.0
      %2347 = vmatpush1.msra.mxu0 %v1959
      %2348 = vmatprep.subr.mxu0 0.0
      %2349 = vmatpush1.msra.mxu0 %v1960
      %2350 = vmatprep.subr.mxu0 0.0
      %2351 = vmatpush1.msra.mxu0 %v1961
      %2352 = vmatprep.subr.mxu0 0.0
      %2353 = vmatpush1.msra.mxu0 %v1962
      %2354 = vmatprep.subr.mxu0 0.0
      %2355 = vmatpush1.msra.mxu0 %v1963
      %2356 = vmatprep.subr.mxu0 0.0
      %2357 = vmatpush1.msra.mxu0 %v1964
      %2358 = vmatprep.subr.mxu0 0.0
      %2359 = vmatpush1.msra.mxu0 %v1965
      %2360 = vmatprep.subr.mxu0 0.0
      %2361 = vmatpush1.msra.mxu0 %v1966
      %2362 = vmatprep.subr.mxu0 0.0
      %2363 = vmatpush1.msra.mxu0 %v1967
      %2364 = vmatprep.subr.mxu0 0.0
      %2365 = vmatpush1.msra.mxu0 %v1968
      %2366 = vmatprep.subr.mxu0 0.0
      %2367 = vmatpush1.msra.mxu0 %v1969
      %2368 = vmatprep.subr.mxu0 0.0
      %2369 = vmatpush1.msra.mxu0 %v1970
      %2370 = vmatprep.subr.mxu0 0.0
      %2371 = vmatpush1.msra.mxu0 %v1971
      %2372 = vmatprep.subr.mxu0 0.0
      %2373 = vmatpush1.msra.mxu0 %v1972
      %2374 = vmatprep.subr.mxu0 0.0
      %2375 = vmatpush1.msra.mxu0 %v1973
      %2376 = vmatprep.subr.mxu0 0.0
      %2377 = vmatpush1.msra.mxu0 %v1974
      %2378 = vmatprep.subr.mxu0 0.0
      %2379 = vmatpush1.msra.mxu0 %v1975
      %2380 = vmatprep.subr.mxu0 0.0
      %2381 = vmatpush1.msra.mxu0 %v1976
      %2382 = vmatprep.subr.mxu0 0.0
      %2383 = vmatpush1.msra.mxu0 %v1977
      %2384 = vmatprep.subr.mxu0 0.0
      %2385 = vmatpush1.msra.mxu0 %v1978
      %2386 = vmatprep.subr.mxu0 0.0
      %2387 = vmatpush1.msra.mxu0 %v1979
      %2388 = vmatprep.subr.mxu0 0.0
      %2389 = vmatpush1.msra.mxu0 %v1980
      %2390 = vmatprep.mubr.f32.mxu0 %v1802
      %2391 = vmatmul.mubr.f32.gmra.mrb[0].mxu0 %v1746
      %v2392 = vpop.f32.mrb[0].mxu0
      %v2393 = vadd.f32 %v2248, %v2392
      %v2394 = vpop.f32.mrb[0].mxu0
      %2395 = vmatprep.mubr.f32.mxu0 %v1804
      %2396 = vmatmul.mubr.f32.gmra.mrb[0].mxu0 %v1748
      %v2397 = vpop.f32.mrb[0].mxu0
      %v2398 = vadd.f32 %v2253, %v2397
      %v2399 = vpop.f32.mrb[0].mxu0
      %2400 = vmatprep.mubr.f32.mxu0 %v1807
      %2401 = vmatmul.mubr.f32.gmra.mrb[0].mxu0 %v1751
      %v2402 = vpop.f32.mrb[0].mxu0
      %v2403 = vadd.f32 %v2258, %v2402
      %v2404 = vpop.f32.mrb[0].mxu0
      %2405 = vmatprep.mubr.f32.mxu0 %v1809
      %2406 = vmatmul.mubr.f32.gmra.mrb[0].mxu0 %v1753
      %v2407 = vpop.f32.mrb[0].mxu0
      %v2408 = vadd.f32 %v2263, %v2407
      %v2409 = vpop.f32.mrb[0].mxu0
      %2410 = vmatprep.mubr.f32.mxu0 %v1812
      %2411 = vmatmul.mubr.f32.gmra.mrb[0].mxu0 %v1756
      %v2412 = vpop.f32.mrb[0].mxu0
      %v2413 = vadd.f32 %v2268, %v2412
      %v2414 = vpop.f32.mrb[0].mxu0
      %2415 = vmatprep.mubr.f32.mxu0 %v1814
      %2416 = vmatmul.mubr.f32.gmra.mrb[0].mxu0 %v1758
      %v2417 = vpop.f32.mrb[0].mxu0
      %v2418 = vadd.f32 %v2273, %v2417
      %v2419 = vpop.f32.mrb[0].mxu0
      %2420 = vmatprep.mubr.f32.mxu0 %v1817
      %2421 = vmatmul.mubr.f32.gmra.mrb[0].mxu0 %v1761
      %v2422 = vpop.f32.mrb[0].mxu0
      %v2423 = vadd.f32 %v2278, %v2422
      %v2424 = vpop.f32.mrb[0].mxu0
      %2425 = vmatprep.mubr.f32.mxu0 %v1819
      %2426 = vmatmul.mubr.f32.gmra.mrb[0].mxu0 %v1763
      %v2427 = vpop.f32.mrb[0].mxu0
      %v2428 = vadd.f32 %v2283, %v2427
      %v2429 = vpop.f32.mrb[0].mxu0
      %2430 = vmatprep.mubr.f32.mxu0 %v1822
      %2431 = vmatmul.mubr.f32.gmra.mrb[0].mxu0 %v1766
      %v2432 = vpop.f32.mrb[0].mxu0
      %v2433 = vadd.f32 %v2288, %v2432
      %v2434 = vpop.f32.mrb[0].mxu0
      %2435 = vmatprep.mubr.f32.mxu0 %v1824
      %2436 = vmatmul.mubr.f32.gmra.mrb[0].mxu0 %v1768
      %v2437 = vpop.f32.mrb[0].mxu0
      %v2438 = vadd.f32 %v2293, %v2437
      %v2439 = vpop.f32.mrb[0].mxu0
      %2440 = vmatprep.mubr.f32.mxu0 %v1827
      %2441 = vmatmul.mubr.f32.gmra.mrb[0].mxu0 %v1771
      %v2442 = vpop.f32.mrb[0].mxu0
      %v2443 = vadd.f32 %v2298, %v2442
      %v2444 = vpop.f32.mrb[0].mxu0
      %2445 = vmatprep.mubr.f32.mxu0 %v1829
      %2446 = vmatmul.mubr.f32.gmra.mrb[0].mxu0 %v1773
      %v2447 = vpop.f32.mrb[0].mxu0
      %v2448 = vadd.f32 %v2303, %v2447
      %v2449 = vpop.f32.mrb[0].mxu0
      %2450 = vmatprep.mubr.f32.mxu0 %v1832
      %2451 = vmatmul.mubr.f32.gmra.mrb[0].mxu0 %v1776
      %v2452 = vpop.f32.mrb[0].mxu0
      %v2453 = vadd.f32 %v2308, %v2452
      %v2454 = vpop.f32.mrb[0].mxu0
      %2455 = vmatprep.mubr.f32.mxu0 %v1834
      %2456 = vmatmul.mubr.f32.gmra.mrb[0].mxu0 %v1778
      %v2457 = vpop.f32.mrb[0].mxu0
      %v2458 = vadd.f32 %v2313, %v2457
      %v2459 = vpop.f32.mrb[0].mxu0
      %2460 = vmatprep.mubr.f32.mxu0 %v1863
      %2461 = vmatmul.mubr.f32.gmra.mrb[0].mxu0 %v1856
      %v2462 = vpop.f32.mrb[0].mxu0
      %v2463 = vadd.f32 %v2318, %v2462
      %v2464 = vpop.f32.mrb[0].mxu0
      %2465 = vmatprep.mubr.f32.mxu0 %v1865
      %2466 = vmatmul.mubr.f32.gmra.mrb[0].mxu0 %v1858
      %v2467 = vpop.f32.mrb[0].mxu0
      %v2468 = vadd.f32 %v2323, %v2467
      %v2469 = vpop.f32.mrb[0].mxu0
      %2470 = vdwg.mxu0
      %2471 = vmatprep.subr.mxu0 0.0
      %2472 = vmatpush1.msra.mxu0 %v1981
      %2473 = vmatprep.subr.mxu0 0.0
      %2474 = vmatpush1.msra.mxu0 %v1982
      %2475 = vmatprep.subr.mxu0 0.0
      %2476 = vmatpush1.msra.mxu0 %v1983
      %2477 = vmatprep.subr.mxu0 0.0
      %2478 = vmatpush1.msra.mxu0 %v1984
      %2479 = vmatprep.subr.mxu0 0.0
      %2480 = vmatpush1.msra.mxu0 %v1985
      %2481 = vmatprep.subr.mxu0 0.0
      %2482 = vmatpush1.msra.mxu0 %v1986
      %2483 = vmatprep.subr.mxu0 0.0
      %2484 = vmatpush1.msra.mxu0 %v1987
      %2485 = vmatprep.subr.mxu0 0.0
      %2486 = vmatpush1.msra.mxu0 %v1988
      %2487 = vmatprep.subr.mxu0 0.0
      %2488 = vmatpush1.msra.mxu0 %v1989
      %2489 = vmatprep.subr.mxu0 0.0
      %2490 = vmatpush1.msra.mxu0 %v1990
      %2491 = vmatprep.subr.mxu0 0.0
      %2492 = vmatpush1.msra.mxu0 %v1991
      %2493 = vmatprep.subr.mxu0 0.0
      %2494 = vmatpush1.msra.mxu0 %v1992
      %2495 = vmatprep.subr.mxu0 0.0
      %2496 = vmatpush1.msra.mxu0 %v1993
      %2497 = vmatprep.subr.mxu0 0.0
      %2498 = vmatpush1.msra.mxu0 %v1994
      %2499 = vmatprep.subr.mxu0 0.0
      %2500 = vmatpush1.msra.mxu0 %v1995
      %2501 = vmatprep.subr.mxu0 0.0
      %2502 = vmatpush1.msra.mxu0 %v1996
      %2503 = vmatprep.subr.mxu0 0.0
      %2504 = vmatpush1.msra.mxu0 %v1997
      %2505 = vmatprep.subr.mxu0 0.0
      %2506 = vmatpush1.msra.mxu0 %v1998
      %2507 = vmatprep.subr.mxu0 0.0
      %2508 = vmatpush1.msra.mxu0 %v1999
      %2509 = vmatprep.subr.mxu0 0.0
      %2510 = vmatpush1.msra.mxu0 %v2000
      %2511 = vmatprep.subr.mxu0 0.0
      %2512 = vmatpush1.msra.mxu0 %v2001
      %2513 = vmatprep.subr.mxu0 0.0
      %2514 = vmatpush1.msra.mxu0 %v2002
      %2515 = vmatprep.subr.mxu0 0.0
      %2516 = vmatpush1.msra.mxu0 %v2003
      %2517 = vmatprep.subr.mxu0 0.0
      %2518 = vmatpush1.msra.mxu0 %v2004
      %2519 = vmatprep.subr.mxu0 0.0
      %2520 = vmatpush1.msra.mxu0 %v2005
      %2521 = vmatprep.subr.mxu0 0.0
      %2522 = vmatpush1.msra.mxu0 %v2006
      %2523 = vmatprep.subr.mxu0 0.0
      %2524 = vmatpush1.msra.mxu0 %v2007
      %2525 = vmatprep.subr.mxu0 0.0
      %2526 = vmatpush1.msra.mxu0 %v2008
      %2527 = vmatprep.subr.mxu0 0.0
      %2528 = vmatpush1.msra.mxu0 %v2009
      %2529 = vmatprep.subr.mxu0 0.0
      %2530 = vmatpush1.msra.mxu0 %v2010
      %2531 = vmatprep.subr.mxu0 0.0
      %2532 = vmatpush1.msra.mxu0 %v2011
      %2533 = vmatprep.subr.mxu0 0.0
      %2534 = vmatpush1.msra.mxu0 %v2012
      %2535 = vmatprep.mubr.f32.mxu0 %v1751
      %2536 = vmatmul.mubr.f32.gmra.mrb[0].mxu0 %v1691
      %v2537 = vpop.f32.mrb[0].mxu0
      %v2538 = vadd.f32 %v2393, %v2537
      %v2539 = vpop.f32.mrb[0].mxu0
      %2540 = vmatprep.mubr.f32.mxu0 %v1753
      %2541 = vmatmul.mubr.f32.gmra.mrb[0].mxu0 %v1692
      %v2542 = vpop.f32.mrb[0].mxu0
      %v2543 = vadd.f32 %v2398, %v2542
      %v2544 = vpop.f32.mrb[0].mxu0
      %2545 = vmatprep.mubr.f32.mxu0 %v1756
      %2546 = vmatmul.mubr.f32.gmra.mrb[0].mxu0 %v1694
      %v2547 = vpop.f32.mrb[0].mxu0
      %v2548 = vadd.f32 %v2403, %v2547
      %v2549 = vpop.f32.mrb[0].mxu0
      %2550 = vmatprep.mubr.f32.mxu0 %v1758
      %2551 = vmatmul.mubr.f32.gmra.mrb[0].mxu0 %v1695
      %v2552 = vpop.f32.mrb[0].mxu0
      %v2553 = vadd.f32 %v2408, %v2552
      %v2554 = vpop.f32.mrb[0].mxu0
      %2555 = vmatprep.mubr.f32.mxu0 %v1761
      %2556 = vmatmul.mubr.f32.gmra.mrb[0].mxu0 %v1697
      %v2557 = vpop.f32.mrb[0].mxu0
      %v2558 = vadd.f32 %v2413, %v2557
      %v2559 = vpop.f32.mrb[0].mxu0
      %2560 = vmatprep.mubr.f32.mxu0 %v1763
      %2561 = vmatmul.mubr.f32.gmra.mrb[0].mxu0 %v1698
      %v2562 = vpop.f32.mrb[0].mxu0
      %v2563 = vadd.f32 %v2418, %v2562
      %v2564 = vpop.f32.mrb[0].mxu0
      %2565 = vmatprep.mubr.f32.mxu0 %v1766
      %2566 = vmatmul.mubr.f32.gmra.mrb[0].mxu0 %v1700
      %v2567 = vpop.f32.mrb[0].mxu0
      %v2568 = vadd.f32 %v2423, %v2567
      %v2569 = vpop.f32.mrb[0].mxu0
      %2570 = vmatprep.mubr.f32.mxu0 %v1768
      %2571 = vmatmul.mubr.f32.gmra.mrb[0].mxu0 %v1701
      %v2572 = vpop.f32.mrb[0].mxu0
      %v2573 = vadd.f32 %v2428, %v2572
      %v2574 = vpop.f32.mrb[0].mxu0
      %2575 = vmatprep.mubr.f32.mxu0 %v1771
      %2576 = vmatmul.mubr.f32.gmra.mrb[0].mxu0 %v1703
      %v2577 = vpop.f32.mrb[0].mxu0
      %v2578 = vadd.f32 %v2433, %v2577
      %v2579 = vpop.f32.mrb[0].mxu0
      %2580 = vmatprep.mubr.f32.mxu0 %v1773
      %2581 = vmatmul.mubr.f32.gmra.mrb[0].mxu0 %v1704
      %v2582 = vpop.f32.mrb[0].mxu0
      %v2583 = vadd.f32 %v2438, %v2582
      %v2584 = vpop.f32.mrb[0].mxu0
      %2585 = vmatprep.mubr.f32.mxu0 %v1776
      %2586 = vmatmul.mubr.f32.gmra.mrb[0].mxu0 %v1706
      %v2587 = vpop.f32.mrb[0].mxu0
      %v2588 = vadd.f32 %v2443, %v2587
      %v2589 = vpop.f32.mrb[0].mxu0
      %2590 = vmatprep.mubr.f32.mxu0 %v1778
      %2591 = vmatmul.mubr.f32.gmra.mrb[0].mxu0 %v1707
      %v2592 = vpop.f32.mrb[0].mxu0
      %v2593 = vadd.f32 %v2448, %v2592
      %v2594 = vpop.f32.mrb[0].mxu0
      %2595 = vmatprep.mubr.f32.mxu0 %v1856
      %2596 = vmatmul.mubr.f32.gmra.mrb[0].mxu0 %v1709
      %v2597 = vpop.f32.mrb[0].mxu0
      %v2598 = vadd.f32 %v2453, %v2597
      %v2599 = vpop.f32.mrb[0].mxu0
      %2600 = vmatprep.mubr.f32.mxu0 %v1858
      %2601 = vmatmul.mubr.f32.gmra.mrb[0].mxu0 %v1710
      %v2602 = vpop.f32.mrb[0].mxu0
      %v2603 = vadd.f32 %v2458, %v2602
      %v2604 = vpop.f32.mrb[0].mxu0
      %2605 = vmatprep.mubr.f32.mxu0 %v1873
      %2606 = vmatmul.mubr.f32.gmra.mrb[0].mxu0 %v1712
      %v2607 = vpop.f32.mrb[0].mxu0
      %v2608 = vadd.f32 %v2463, %v2607
      %v2609 = vpop.f32.mrb[0].mxu0
      %2610 = vmatprep.mubr.f32.mxu0 %v1875
      %2611 = vmatmul.mubr.f32.gmra.mrb[0].mxu0 %v1713
      %v2612 = vpop.f32.mrb[0].mxu0
      %v2613 = vadd.f32 %v2468, %v2612
      %v2614 = vpop.f32.mrb[0].mxu0
      %2615 = vdwg.mxu0
      %2616 = vmatprep.subr.mxu0 0.0
      %2617 = vmatpush1.msra.mxu0 %v2013
      %2618 = vmatprep.subr.mxu0 0.0
      %2619 = vmatpush1.msra.mxu0 %v2014
      %2620 = vmatprep.subr.mxu0 0.0
      %2621 = vmatpush1.msra.mxu0 %v2015
      %2622 = vmatprep.subr.mxu0 0.0
      %2623 = vmatpush1.msra.mxu0 %v2016
      %2624 = vmatprep.subr.mxu0 0.0
      %2625 = vmatpush1.msra.mxu0 %v2017
      %2626 = vmatprep.subr.mxu0 0.0
      %2627 = vmatpush1.msra.mxu0 %v2018
      %2628 = vmatprep.subr.mxu0 0.0
      %2629 = vmatpush1.msra.mxu0 %v2019
      %2630 = vmatprep.subr.mxu0 0.0
      %2631 = vmatpush1.msra.mxu0 %v2020
      %2632 = vmatprep.subr.mxu0 0.0
      %2633 = vmatpush1.msra.mxu0 %v2021
      %2634 = vmatprep.subr.mxu0 0.0
      %2635 = vmatpush1.msra.mxu0 %v2022
      %2636 = vmatprep.subr.mxu0 0.0
      %2637 = vmatpush1.msra.mxu0 %v2023
      %2638 = vmatprep.subr.mxu0 0.0
      %2639 = vmatpush1.msra.mxu0 %v2024
      %2640 = vmatprep.subr.mxu0 0.0
      %2641 = vmatpush1.msra.mxu0 %v2025
      %2642 = vmatprep.subr.mxu0 0.0
      %2643 = vmatpush1.msra.mxu0 %v2026
      %2644 = vmatprep.subr.mxu0 0.0
      %2645 = vmatpush1.msra.mxu0 %v2027
      %2646 = vmatprep.subr.mxu0 0.0
      %2647 = vmatpush1.msra.mxu0 %v2028
      %2648 = vmatprep.subr.mxu0 0.0
      %2649 = vmatpush1.msra.mxu0 0.0
      %2650 = vmatprep.subr.mxu0 0.0
      %2651 = vmatpush1.msra.mxu0 0.0
      %2652 = vmatprep.subr.mxu0 0.0
      %2653 = vmatpush1.msra.mxu0 0.0
      %2654 = vmatprep.subr.mxu0 0.0
      %2655 = vmatpush1.msra.mxu0 0.0
      %2656 = vmatprep.subr.mxu0 0.0
      %2657 = vmatpush1.msra.mxu0 0.0
      %2658 = vmatprep.subr.mxu0 0.0
      %2659 = vmatpush1.msra.mxu0 0.0
      %2660 = vmatprep.subr.mxu0 0.0
      %2661 = vmatpush1.msra.mxu0 0.0
      %2662 = vmatprep.subr.mxu0 0.0
      %2663 = vmatpush1.msra.mxu0 0.0
      %2664 = vmatprep.subr.mxu0 0.0
      %2665 = vmatpush1.msra.mxu0 0.0
      %2666 = vmatprep.subr.mxu0 0.0
      %2667 = vmatpush1.msra.mxu0 0.0
      %2668 = vmatprep.subr.mxu0 0.0
      %2669 = vmatpush1.msra.mxu0 0.0
      %2670 = vmatprep.subr.mxu0 0.0
      %2671 = vmatpush1.msra.mxu0 0.0
      %2672 = vmatprep.subr.mxu0 0.0
      %2673 = vmatpush1.msra.mxu0 0.0
      %2674 = vmatprep.subr.mxu0 0.0
      %2675 = vmatpush1.msra.mxu0 0.0
      %2676 = vmatprep.subr.mxu0 0.0
      %2677 = vmatpush1.msra.mxu0 0.0
      %2678 = vmatprep.subr.mxu0 0.0
      %2679 = vmatpush1.msra.mxu0 0.0
      %2680 = vmatprep.mubr.f32.mxu0 0.0
      %2681 = vmatmul.mubr.f32.gmra.mrb[0].mxu0 %v1807
      %v2682 = vpop.f32.mrb[0].mxu0
      %v2683 = vadd.f32 %v2538, %v2682
      %v2684 = vpop.f32.mrb[0].mxu0
      %2685 = vmatprep.mubr.f32.mxu0 0.0
      %2686 = vmatmul.mubr.f32.gmra.mrb[0].mxu0 %v1809
      %v2687 = vpop.f32.mrb[0].mxu0
      %v2688 = vadd.f32 %v2543, %v2687
      %v2689 = vpop.f32.mrb[0].mxu0
      %2690 = vmatprep.mubr.f32.mxu0 0.0
      %2691 = vmatmul.mubr.f32.gmra.mrb[0].mxu0 %v1812
      %v2692 = vpop.f32.mrb[0].mxu0
      %v2693 = vadd.f32 %v2548, %v2692
      %v2694 = vpop.f32.mrb[0].mxu0
      %2695 = vmatprep.mubr.f32.mxu0 0.0
      %2696 = vmatmul.mubr.f32.gmra.mrb[0].mxu0 %v1814
      %v2697 = vpop.f32.mrb[0].mxu0
      %v2698 = vadd.f32 %v2553, %v2697
      %v2699 = vpop.f32.mrb[0].mxu0
      %2700 = vmatprep.mubr.f32.mxu0 0.0
      %2701 = vmatmul.mubr.f32.gmra.mrb[0].mxu0 %v1817
      %v2702 = vpop.f32.mrb[0].mxu0
      %v2703 = vadd.f32 %v2558, %v2702
      %v2704 = vpop.f32.mrb[0].mxu0
      %2705 = vmatprep.mubr.f32.mxu0 0.0
      %2706 = vmatmul.mubr.f32.gmra.mrb[0].mxu0 %v1819
      %v2707 = vpop.f32.mrb[0].mxu0
      %v2708 = vadd.f32 %v2563, %v2707
      %v2709 = vpop.f32.mrb[0].mxu0
      %2710 = vmatprep.mubr.f32.mxu0 0.0
      %2711 = vmatmul.mubr.f32.gmra.mrb[0].mxu0 %v1822
      %v2712 = vpop.f32.mrb[0].mxu0
      %v2713 = vadd.f32 %v2568, %v2712
      %v2714 = vpop.f32.mrb[0].mxu0
      %2715 = vmatprep.mubr.f32.mxu0 0.0
      %2716 = vmatmul.mubr.f32.gmra.mrb[0].mxu0 %v1824
      %v2717 = vpop.f32.mrb[0].mxu0
      %v2718 = vadd.f32 %v2573, %v2717
      %v2719 = vpop.f32.mrb[0].mxu0
      %2720 = vmatprep.mubr.f32.mxu0 0.0
      %2721 = vmatmul.mubr.f32.gmra.mrb[0].mxu0 %v1827
      %v2722 = vpop.f32.mrb[0].mxu0
      %v2723 = vadd.f32 %v2578, %v2722
      %v2724 = vpop.f32.mrb[0].mxu0
      %2725 = vmatprep.mubr.f32.mxu0 0.0
      %2726 = vmatmul.mubr.f32.gmra.mrb[0].mxu0 %v1829
      %v2727 = vpop.f32.mrb[0].mxu0
      %v2728 = vadd.f32 %v2583, %v2727
      %v2729 = vpop.f32.mrb[0].mxu0
      %2730 = vmatprep.mubr.f32.mxu0 0.0
      %2731 = vmatmul.mubr.f32.gmra.mrb[0].mxu0 %v1832
      %v2732 = vpop.f32.mrb[0].mxu0
      %v2733 = vadd.f32 %v2588, %v2732
      %v2734 = vpop.f32.mrb[0].mxu0
      %2735 = vmatprep.mubr.f32.mxu0 0.0
      %2736 = vmatmul.mubr.f32.gmra.mrb[0].mxu0 %v1834
      %v2737 = vpop.f32.mrb[0].mxu0
      %v2738 = vadd.f32 %v2593, %v2737
      %v2739 = vpop.f32.mrb[0].mxu0
      %2740 = vmatprep.mubr.f32.mxu0 0.0
      %2741 = vmatmul.mubr.f32.gmra.mrb[0].mxu0 %v1863
      %v2742 = vpop.f32.mrb[0].mxu0
      %v2743 = vadd.f32 %v2598, %v2742
      %v2744 = vpop.f32.mrb[0].mxu0
      %2745 = vmatprep.mubr.f32.mxu0 0.0
      %2746 = vmatmul.mubr.f32.gmra.mrb[0].mxu0 %v1865
      %v2747 = vpop.f32.mrb[0].mxu0
      %v2748 = vadd.f32 %v2603, %v2747
      %v2749 = vpop.f32.mrb[0].mxu0
      %2750 = vmatprep.mubr.f32.mxu0 0.0
      %2751 = vmatmul.mubr.f32.gmra.mrb[0].mxu0 %v1880
      %v2752 = vpop.f32.mrb[0].mxu0
      %v2753 = vadd.f32 %v2608, %v2752
      %v2754 = vpop.f32.mrb[0].mxu0
      %2755 = vmatprep.mubr.f32.mxu0 0.0
      %2756 = vmatmul.mubr.f32.gmra.mrb[0].mxu0 %v1882
      %v2757 = vpop.f32.mrb[0].mxu0
      %v2758 = vadd.f32 %v2613, %v2757
      %v2759 = vpop.f32.mrb[0].mxu0
      %2760 = vdwg.mxu0
      %v2761 = vmax.f32 %v2683, 0.0
      %v2762 = vmax.f32 %v2688, 0.0
      %v2763 = vmax.f32 %v2693, 0.0
      %v2764 = vmax.f32 %v2698, 0.0
      %v2765 = vmax.f32 %v2703, 0.0
      %v2766 = vmax.f32 %v2708, 0.0
      %v2767 = vmax.f32 %v2713, 0.0
      %v2768 = vmax.f32 %v2718, 0.0
      %v2769 = vmax.f32 %v2723, 0.0
      %v2770 = vmax.f32 %v2728, 0.0
      %v2771 = vmax.f32 %v2733, 0.0
      %v2772 = vmax.f32 %v2738, 0.0
      %v2773 = vmax.f32 %v2743, 0.0
      %v2774 = vmax.f32 %v2748, 0.0
      %v2775 = vmax.f32 %v2753, 0.0
      %v2776 = vmax.f32 %v2758, 0.0
      %2777 = vst [vmem:[%s248] sm:$0xff] %v2761
      %2778 = vst [vmem:[%s248 + $0x8] sm:$0xff] %v2762
      %2779 = vst [vmem:[%s248 + $0x10] sm:$0xff] %v2763
      %2780 = vst [vmem:[%s248 + $0x18] sm:$0xff] %v2764
      %2781 = vst [vmem:[%s248 + $0x20] sm:$0xff] %v2765
      %2782 = vst [vmem:[%s248 + $0x28] sm:$0xff] %v2766
      %2783 = vst [vmem:[%s248 + $0x30] sm:$0xff] %v2767
      %2784 = vst [vmem:[%s248 + $0x38] sm:$0xff] %v2768
      %2785 = vst [vmem:[%s248 + $0x40] sm:$0xff] %v2769
      %2786 = vst [vmem:[%s248 + $0x48] sm:$0xff] %v2770
      %2787 = vst [vmem:[%s248 + $0x50] sm:$0xff] %v2771
      %2788 = vst [vmem:[%s248 + $0x58] sm:$0xff] %v2772
      %2789 = vst [vmem:[%s248 + $0x60] sm:$0xff] %v2773
      %2790 = vst [vmem:[%s248 + $0x68] sm:$0xff] %v2774
      %2791 = vst [vmem:[%s248 + $0x70] sm:$0xff] %v2775
      %2792 = vst [vmem:[%s248 + $0x78] sm:$0xff] %v2776
      %s2793 = smul.u32 8, %s21
      %p2794 = scmp.lt.s32.totalorder %s20, 1
      %s2795 = scalar_select %p2794, %s20, 1
      %p2796 = scmp.lt.s32.totalorder %s2793, 15
      %s2797 = scalar_select %p2796, %s2793, 15
      %s2798 = smul.addr %s2797, 2
      %s2799 = smul.addr %s2795, 32
      %s2800 = sadd.s32 %s2798, %s2799
      %s2801 = smul.addr %s2800, 8
      %s2802 = scalar_lea.vmem %s5, %s2801
      // Predicated region
      $region53: #{conv2layer_forward.1} parent=39 // pred_check
        %p2803 = pneg %p158
      $region54: #{conv2layer_forward.1} parent=39 // pred_check_branch
        %2805 = sbr.rel (%p2803) target = $region56
      $region55: #{conv2layer_forward.1} parent=39 // pred_region
        %s2806 = smul.u32 8, %s21
      $region56: #{conv2layer_forward.1} parent=39 // pred_fallthru
        _
    $region40: #{conv2layer_forward.1} parent=5 // pred_fallthru
      _
    %p2807 = scmp.le.s32.totalorder 2, %s11
    // Predicated region
    $region57: #{conv2layer_forward.1} parent=5 // pred_check
      %p2808 = pneg %p2807
    $region58: #{conv2layer_forward.1} parent=5 // pred_check_branch
      %2810 = sbr.rel (%p2808) target = $region60
    $region59: #{conv2layer_forward.1} parent=5 // pred_region
      %s2811 = ssub.s32 %s11, 2
      // Predicated region
      $region61: #{conv2layer_forward.1} parent=59 // pred_check
        %p2812 = pneg %p164
      $region62: #{conv2layer_forward.1} parent=59 // pred_check_branch
        %2814 = sbr.rel (%p2812) target = $region64
      $region63: #{conv2layer_forward.1} parent=59 // pred_region
        %s2815 = smul.u32 8, %s23
        %p2816 = scmp.lt.s32.totalorder %s22, 1
        %s2817 = scalar_select %p2816, %s22, 1
        %p2818 = scmp.lt.s32.totalorder %s2815, 15
        %s2819 = scalar_select %p2818, %s2815, 15
        %s2820 = smul.addr %s2819, 2
        %s2821 = smul.addr %s2817, 32
        %s2822 = sadd.s32 %s2820, %s2821
        %s2823 = smul.addr %s2822, 8
        %s2824 = scalar_lea.vmem %s5, %s2823
      $region64: #{conv2layer_forward.1} parent=59 // pred_fallthru
        _
    $region60: #{conv2layer_forward.1} parent=5 // pred_fallthru
      _
  $region6: #{conv2layer_forward.1} parent=0 // loop_footer
    %s15 = sadd.s32 1, %s11
  $region7: #{conv2layer_forward.1} parent=0 // loop_footer_branch
    %10 = sbr.rel target = $region3
  $region8: #{conv2layer_forward.1} parent=0 // loop_exit
    _

</llo_original>
